<compile_context>
chip_gen: v6e
topology: v6e:2x2x1
jax: 0.10.0
libtpu: 0.0.40
codegen_flags: <defaults>
</compile_context>

<pallas_src>
import jax
import jax.numpy as jnp
from jax.experimental import pallas as pl
from jax.experimental.pallas import tpu as pltpu

NEG_SLOPE = 0.01  # nn.LeakyReLU() default


def _leaky_relu(x):
    return jnp.where(x > 0, x, NEG_SLOPE * x)


def _round_up(n, m):
    return ((n + m - 1) // m) * m


# ----------------------------------------------------------------------------
# Kernel: one batch tile through all four Linear layers (MXU) with fused
# LeakyReLU.  Matmul inputs are bf16 (compute_dtype), accumulation / bias add
# / activation are f32.  blockout_weight is already folded into w1/b1.
# ----------------------------------------------------------------------------
def autoencoder_kernel(x_ref, w1_ref, b1_ref, w2_ref, b2_ref, w3_ref, b3_ref,
                       w4_ref, b4_ref, o_ref):
    cd = w1_ref.dtype
    x = x_ref[...].astype(cd)          # in-kernel cast: cheap VPU op under MXU slack

    h = jnp.dot(x, w1_ref[...], preferred_element_type=jnp.float32) + b1_ref[...]
    h = _leaky_relu(h)

    h = jnp.dot(h.astype(cd), w2_ref[...], preferred_element_type=jnp.float32) + b2_ref[...]
    h = _leaky_relu(h)

    h = jnp.dot(h.astype(cd), w3_ref[...], preferred_element_type=jnp.float32) + b3_ref[...]
    h = _leaky_relu(h)

    out = jnp.dot(h.astype(cd), w4_ref[...], preferred_element_type=jnp.float32) + b4_ref[...]
    o_ref[...] = out.astype(o_ref.dtype)


# ----------------------------------------------------------------------------
# One-time parameter packing (transpose, pad to lane multiples, fold blockout
# scale in f32, cast to compute dtype).  Do this once, reuse across calls.
# ----------------------------------------------------------------------------
def prepare_params(params, *, blockout_weight=1.0, compute_dtype=jnp.bfloat16):
    """PyTorch-convention params (w: (out,in), b: (out,)) -> packed kernel params."""
    input_dim = params["w1"].shape[1]
    d1 = params["w1"].shape[0]
    d2 = params["w2"].shape[0]
    dp = _round_up(input_dim, 128)      # lane-dense input/output width
    d1p = _round_up(d1, 128)
    d2p = _round_up(d2, 128)            # 64 -> 128: full vregs / full MXU tiles
    bw = float(blockout_weight)

    def prep_w(w, rows_to, cols_to, scale=1.0):
        wt = w.astype(jnp.float32).T                    # (in, out)
        if scale != 1.0:
            wt = wt * scale                              # fold in f32, then cast
        wt = jnp.pad(wt, ((0, rows_to - wt.shape[0]),
                          (0, cols_to - wt.shape[1])))
        return wt.astype(compute_dtype)

    def prep_b(b, cols_to, scale=1.0):
        b = b.astype(jnp.float32)
        if scale != 1.0:
            b = b * scale
        return jnp.pad(b, (0, cols_to - b.shape[0])).reshape(1, -1)

    packed = dict(
        w1=prep_w(params["w1"], dp, d1p, bw), b1=prep_b(params["b1"], d1p, bw),
        w2=prep_w(params["w2"], d1p, d2p),    b2=prep_b(params["b2"], d2p),
        w3=prep_w(params["w3"], d2p, d1p),    b3=prep_b(params["b3"], d1p),
        w4=prep_w(params["w4"], d1p, dp),     b4=prep_b(params["b4"], dp),
    )
    meta = dict(input_dim=input_dim, padded_dim=dp, d1p=d1p, d2p=d2p)
    return packed, meta


# ----------------------------------------------------------------------------
# Forward pass wrapper.
# ----------------------------------------------------------------------------
def autoencoder_forward(x, packed, meta, *, tb=None, out_dtype=None):
    """x: (B, input_dim) f32.  packed/meta from prepare_params()."""
    B, input_dim = x.shape
    assert input_dim == meta["input_dim"]
    dp, d1p, d2p = meta["padded_dim"], meta["d1p"], meta["d2p"]
    out_dtype = x.dtype if out_dtype is None else out_dtype

    # Lane-dense last dim: pad input columns if input_dim is not 128-multiple.
    if dp != input_dim:
        x = jnp.pad(x, ((0, 0), (0, dp - input_dim)))

    # ---- batch tiling -------------------------------------------------------
    if tb is None:
        tb = 512                                  # amortizes ~0.35 us/step overhead
    tb = max(8, min(int(tb), _round_up(B, 8)))
    # v7x megacore: keep at least 2 tiles so the "parallel" axis can shard
    # across both TensorCores (harmless on v5e/v6e).
    if B > 8 and _round_up(B, 8) <= tb:
        tb = _round_up(pl.cdiv(B, 2), 8)
    nb = pl.cdiv(B, tb)
    b_pad = nb * tb
    if b_pad != B:
        x = jnp.pad(x, ((0, b_pad - B), (0, 0)))

    w1, b1 = packed["w1"], packed["b1"]
    w2, b2 = packed["w2"], packed["b2"]
    w3, b3 = packed["w3"], packed["b3"]
    w4, b4 = packed["w4"], packed["b4"]
    param_list = (w1, b1, w2, b2, w3, b3, w4, b4)

    x_spec = pl.BlockSpec((tb, dp), lambda i: (i, 0))
    out_spec = pl.BlockSpec((tb, dp), lambda i: (i, 0))

    def const(a):
        # Full-array block, constant index_map -> DMA'd once, VMEM-resident.
        # Single-buffered: no revisit, so no need for double buffering.
        return pl.BlockSpec(a.shape, lambda i: (0, 0),
                            pipeline_mode=pl.Buffered(1))

    # ---- cost estimate + VMEM budget ---------------------------------------
    flops = 2 * b_pad * (dp * d1p + d1p * d2p + d2p * d1p + d1p * dp)
    param_bytes = sum(int(a.size) * a.dtype.itemsize for a in param_list)
    out_itemsize = jnp.dtype(out_dtype).itemsize
    bytes_accessed = (b_pad * dp * x.dtype.itemsize        # x read
                      + b_pad * dp * out_itemsize          # out write
                      + param_bytes)                       # resident params

    vmem_est = (2 * tb * dp * x.dtype.itemsize              # x (2 bufs, f32)
                + 2 * tb * dp * out_itemsize                # out (2 bufs)
                + param_bytes                               # single-buffered params
                + 4 * tb * d1p * 4)                         # f32 intermediates slack
    vmem_limit = min(max(int(vmem_est * 1.5) + (2 << 20), 32 << 20), 120 << 20)

    out = pl.pallas_call(
        autoencoder_kernel,
        out_shape=jax.ShapeDtypeStruct((b_pad, dp), out_dtype),
        grid_spec=pltpu.PrefetchScalarGridSpec(
            num_scalar_prefetch=0,
            grid=(nb,),
            in_specs=[
                x_spec,
                const(w1), const(b1),
                const(w2), const(b2),
                const(w3), const(b3),
                const(w4), const(b4),
            ],
            out_specs=out_spec,
        ),
        compiler_params=pltpu.CompilerParams(
            dimension_semantics=("parallel",),
            vmem_limit_bytes=vmem_limit,
        ),
        cost_estimate=pl.CostEstimate(flops=flops, transcendentals=0,
                                      bytes_accessed=bytes_accessed),
    )(x, w1, b1, w2, b2, w3, b3, w4, b4)

    if b_pad != B or dp != input_dim:
        out = out[:B, :input_dim]
    return out


# ----------------------------------------------------------------------------
# Test harness
# ----------------------------------------------------------------------------
def _init_params(key, input_dim, d1=256, d2=64):
    """Deterministic init matching PyTorch Linear shapes: w (out,in), b (out,)."""
    ks = jax.random.split(key, 8)

    def lin(kw, kb, fan_in, fan_out):
        bound = float(fan_in) ** -0.5
        w = jax.random.uniform(kw, (fan_out, fan_in), jnp.float32, -bound, bound)
        b = jax.random.uniform(kb, (fan_out,), jnp.float32, -bound, bound)
        return w, b

    w1, b1 = lin(ks[0], ks[1], input_dim, d1)   # encoding
    w2, b2 = lin(ks[2], ks[3], d1, d2)          # encoder Linear
    w3, b3 = lin(ks[4], ks[5], d2, d1)          # decoder Linear 1
    w4, b4 = lin(ks[6], ks[7], d1, input_dim)   # decoder Linear 2
    return {"w1": w1, "b1": b1, "w2": w2, "b2": b2,
            "w3": w3, "b3": b3, "w4": w4, "b4": b4}


def _reference_mixed(x, p, blockout_weight=1.0, compute_dtype=jnp.bfloat16):
    """Pure-JAX reference using the same bf16-inputs / f32-accumulation recipe
    (blockout_weight folded into layer-1 weights in f32, matching the kernel)."""
    cd = compute_dtype
    bw = float(blockout_weight)

    def lin(h, w, b, scale=1.0):
        wt = w.astype(jnp.float32).T * scale
        bb = b.astype(jnp.float32) * scale
        return (jnp.dot(h.astype(cd), wt.astype(cd),
                        preferred_element_type=jnp.float32) + bb.reshape(1, -1))

    h = _leaky_relu(lin(x, p["w1"], p["b1"], bw))
    h = _leaky_relu(lin(h, p["w2"], p["b2"]))
    h = _leaky_relu(lin(h, p["w3"], p["b3"]))
    return lin(h, p["w4"], p["b4"])


if __name__ == "__main__":
    key = jax.random.PRNGKey(0)
    k_x, k_p = jax.random.split(key)

    B, INPUT_DIM = 1024, 128
    x = jax.random.normal(k_x, (B, INPUT_DIM), jnp.float32)
    params = _init_params(k_p, INPUT_DIM)

    # One-time packing; tb=512 with B=1024 -> grid=(2,) parallel tiles.
    packed, meta = prepare_params(params, blockout_weight=1.0)
    out = jax.block_until_ready(autoencoder_forward(x, packed, meta, tb=512))
    ref = _reference_mixed(x, params, 1.0)
    assert out.shape == (B, INPUT_DIM)
    assert jnp.allclose(out, ref, atol=2e-3, rtol=1e-2), \
        float(jnp.max(jnp.abs(out - ref)))

    # Ragged batch + non-default blockout_weight (exercises tail padding and
    # the prep-time fold of the scale into w1/b1).
    B2 = 300
    x2 = jax.random.normal(k_x, (B2, INPUT_DIM), jnp.float32)
    packed2, meta2 = prepare_params(params, blockout_weight=0.5)
    out2 = jax.block_until_ready(autoencoder_forward(x2, packed2, meta2))
    ref2 = _reference_mixed(x2, params, 0.5)
    assert out2.shape == (B2, INPUT_DIM)
    assert jnp.allclose(out2, ref2, atol=2e-3, rtol=1e-2), \
        float(jnp.max(jnp.abs(out2 - ref2)))

    print("KERNEL_OK")
</pallas_src>

<mosaic_0001>
module attributes {stable_mosaic.version = 11 : i64} {
  func.func @autoencoder_kernel(%arg0: i32, %arg1: memref<512x128xf32, #tpu.memory_space<vmem>>, %arg2: memref<128x256xbf16, #tpu.memory_space<vmem>>, %arg3: memref<1x256xf32, #tpu.memory_space<vmem>>, %arg4: memref<256x128xbf16, #tpu.memory_space<vmem>>, %arg5: memref<1x128xf32, #tpu.memory_space<vmem>>, %arg6: memref<128x256xbf16, #tpu.memory_space<vmem>>, %arg7: memref<1x256xf32, #tpu.memory_space<vmem>>, %arg8: memref<256x128xbf16, #tpu.memory_space<vmem>>, %arg9: memref<1x128xf32, #tpu.memory_space<vmem>>, %arg10: memref<512x128xf32, #tpu.memory_space<vmem>>) attributes {dimension_semantics = [#tpu.dimension_semantics<parallel>], iteration_bounds = array<i64: 2>, scalar_prefetch = 0 : i64, scratch_operands = 0 : i64, tpu.core_type = #tpu.core_type<tc>, window_params = [{transform_indices = @transform_0, window_bounds = array<i64: 512, 128>}, {pipeline_mode = #tpu.pipeline_mode<synchronous>, transform_indices = @transform_1, window_bounds = array<i64: 128, 256>}, {pipeline_mode = #tpu.pipeline_mode<synchronous>, transform_indices = @transform_2, window_bounds = array<i64: 1, 256>}, {pipeline_mode = #tpu.pipeline_mode<synchronous>, transform_indices = @transform_3, window_bounds = array<i64: 256, 128>}, {pipeline_mode = #tpu.pipeline_mode<synchronous>, transform_indices = @transform_4, window_bounds = array<i64: 1, 128>}, {pipeline_mode = #tpu.pipeline_mode<synchronous>, transform_indices = @transform_5, window_bounds = array<i64: 128, 256>}, {pipeline_mode = #tpu.pipeline_mode<synchronous>, transform_indices = @transform_6, window_bounds = array<i64: 1, 256>}, {pipeline_mode = #tpu.pipeline_mode<synchronous>, transform_indices = @transform_7, window_bounds = array<i64: 256, 128>}, {pipeline_mode = #tpu.pipeline_mode<synchronous>, transform_indices = @transform_8, window_bounds = array<i64: 1, 128>}, {transform_indices = @transform_9, window_bounds = array<i64: 512, 128>}]} {
    %c0 = arith.constant 0 : index
    %c0_0 = arith.constant 0 : index
    %0 = vector.load %arg1[%c0, %c0_0] : memref<512x128xf32, #tpu.memory_space<vmem>>, vector<512x128xf32>
    %1 = arith.truncf %0 : vector<512x128xf32> to vector<512x128xbf16>
    %c0_1 = arith.constant 0 : index
    %c0_2 = arith.constant 0 : index
    %2 = vector.load %arg2[%c0_1, %c0_2] : memref<128x256xbf16, #tpu.memory_space<vmem>>, vector<128x256xbf16>
    %cst = arith.constant dense<0.000000e+00> : vector<512x256xf32>
    %3 = tpu.matmul %1, %2, %cst {dimension_numbers = #tpu.dot_dimension_numbers<[1], [0], [0], [1], [0, 0, 1, 1], [], []>} : vector<512x128xbf16>, vector<128x256xbf16>, vector<512x256xf32> -> vector<512x256xf32>
    %c0_3 = arith.constant 0 : index
    %c0_4 = arith.constant 0 : index
    %4 = vector.load %arg3[%c0_3, %c0_4] : memref<1x256xf32, #tpu.memory_space<vmem>>, vector<1x256xf32>
    %5 = vector.broadcast %4 : vector<1x256xf32> to vector<512x256xf32>
    %6 = arith.addf %3, %5 : vector<512x256xf32>
    %cst_5 = arith.constant 0.000000e+00 : f32
    %7 = vector.broadcast %cst_5 : f32 to vector<512x256xf32>
    %8 = arith.cmpf ogt, %6, %7 : vector<512x256xf32>
    %cst_6 = arith.constant 0.00999999977 : f32
    %9 = vector.broadcast %cst_6 : f32 to vector<512x256xf32>
    %10 = arith.mulf %9, %6 : vector<512x256xf32>
    %11 = arith.select %8, %6, %10 : vector<512x256xi1>, vector<512x256xf32>
    %12 = arith.truncf %11 : vector<512x256xf32> to vector<512x256xbf16>
    %c0_7 = arith.constant 0 : index
    %c0_8 = arith.constant 0 : index
    %13 = vector.load %arg4[%c0_7, %c0_8] : memref<256x128xbf16, #tpu.memory_space<vmem>>, vector<256x128xbf16>
    %cst_9 = arith.constant dense<0.000000e+00> : vector<512x128xf32>
    %14 = tpu.matmul %12, %13, %cst_9 {dimension_numbers = #tpu.dot_dimension_numbers<[1], [0], [0], [1], [0, 0, 1, 1], [], []>} : vector<512x256xbf16>, vector<256x128xbf16>, vector<512x128xf32> -> vector<512x128xf32>
    %c0_10 = arith.constant 0 : index
    %c0_11 = arith.constant 0 : index
    %15 = vector.load %arg5[%c0_10, %c0_11] : memref<1x128xf32, #tpu.memory_space<vmem>>, vector<1x128xf32>
    %16 = vector.broadcast %15 : vector<1x128xf32> to vector<512x128xf32>
    %17 = arith.addf %14, %16 : vector<512x128xf32>
    %cst_12 = arith.constant 0.000000e+00 : f32
    %18 = vector.broadcast %cst_12 : f32 to vector<512x128xf32>
    %19 = arith.cmpf ogt, %17, %18 : vector<512x128xf32>
    %cst_13 = arith.constant 0.00999999977 : f32
    %20 = vector.broadcast %cst_13 : f32 to vector<512x128xf32>
    %21 = arith.mulf %20, %17 : vector<512x128xf32>
    %22 = arith.select %19, %17, %21 : vector<512x128xi1>, vector<512x128xf32>
    %23 = arith.truncf %22 : vector<512x128xf32> to vector<512x128xbf16>
    %c0_14 = arith.constant 0 : index
    %c0_15 = arith.constant 0 : index
    %24 = vector.load %arg6[%c0_14, %c0_15] : memref<128x256xbf16, #tpu.memory_space<vmem>>, vector<128x256xbf16>
    %cst_16 = arith.constant dense<0.000000e+00> : vector<512x256xf32>
    %25 = tpu.matmul %23, %24, %cst_16 {dimension_numbers = #tpu.dot_dimension_numbers<[1], [0], [0], [1], [0, 0, 1, 1], [], []>} : vector<512x128xbf16>, vector<128x256xbf16>, vector<512x256xf32> -> vector<512x256xf32>
    %c0_17 = arith.constant 0 : index
    %c0_18 = arith.constant 0 : index
    %26 = vector.load %arg7[%c0_17, %c0_18] : memref<1x256xf32, #tpu.memory_space<vmem>>, vector<1x256xf32>
    %27 = vector.broadcast %26 : vector<1x256xf32> to vector<512x256xf32>
    %28 = arith.addf %25, %27 : vector<512x256xf32>
    %cst_19 = arith.constant 0.000000e+00 : f32
    %29 = vector.broadcast %cst_19 : f32 to vector<512x256xf32>
    %30 = arith.cmpf ogt, %28, %29 : vector<512x256xf32>
    %cst_20 = arith.constant 0.00999999977 : f32
    %31 = vector.broadcast %cst_20 : f32 to vector<512x256xf32>
    %32 = arith.mulf %31, %28 : vector<512x256xf32>
    %33 = arith.select %30, %28, %32 : vector<512x256xi1>, vector<512x256xf32>
    %34 = arith.truncf %33 : vector<512x256xf32> to vector<512x256xbf16>
    %c0_21 = arith.constant 0 : index
    %c0_22 = arith.constant 0 : index
    %35 = vector.load %arg8[%c0_21, %c0_22] : memref<256x128xbf16, #tpu.memory_space<vmem>>, vector<256x128xbf16>
    %cst_23 = arith.constant dense<0.000000e+00> : vector<512x128xf32>
    %36 = tpu.matmul %34, %35, %cst_23 {dimension_numbers = #tpu.dot_dimension_numbers<[1], [0], [0], [1], [0, 0, 1, 1], [], []>} : vector<512x256xbf16>, vector<256x128xbf16>, vector<512x128xf32> -> vector<512x128xf32>
    %c0_24 = arith.constant 0 : index
    %c0_25 = arith.constant 0 : index
    %37 = vector.load %arg9[%c0_24, %c0_25] : memref<1x128xf32, #tpu.memory_space<vmem>>, vector<1x128xf32>
    %38 = vector.broadcast %37 : vector<1x128xf32> to vector<512x128xf32>
    %39 = arith.addf %36, %38 : vector<512x128xf32>
    %c0_26 = arith.constant 0 : index
    %c0_27 = arith.constant 0 : index
    %40 = vector.load %arg10[%c0_26, %c0_27] : memref<512x128xf32, #tpu.memory_space<vmem>>, vector<512x128xf32>
    tpu.vector_store %arg10[%c0_26, %c0_27], %39 {strides = array<i32>} : memref<512x128xf32, #tpu.memory_space<vmem>>, vector<512x128xf32>,
    return
  }
  func.func @transform_0(%arg0: i32) -> (i32, i32) {
    %c0_i32 = arith.constant 0 : i32
    %c0_i32_0 = arith.constant 0 : i32
    return %arg0, %c0_i32 : i32, i32
  }
  func.func @transform_1(%arg0: i32) -> (i32, i32) {
    %c0_i32 = arith.constant 0 : i32
    %c0_i32_0 = arith.constant 0 : i32
    %c0_i32_1 = arith.constant 0 : i32
    return %c0_i32, %c0_i32_0 : i32, i32
  }
  func.func @transform_2(%arg0: i32) -> (i32, i32) {
    %c0_i32 = arith.constant 0 : i32
    %c0_i32_0 = arith.constant 0 : i32
    %c0_i32_1 = arith.constant 0 : i32
    return %c0_i32, %c0_i32_0 : i32, i32
  }
  func.func @transform_3(%arg0: i32) -> (i32, i32) {
    %c0_i32 = arith.constant 0 : i32
    %c0_i32_0 = arith.constant 0 : i32
    %c0_i32_1 = arith.constant 0 : i32
    return %c0_i32, %c0_i32_0 : i32, i32
  }
  func.func @transform_4(%arg0: i32) -> (i32, i32) {
    %c0_i32 = arith.constant 0 : i32
    %c0_i32_0 = arith.constant 0 : i32
    %c0_i32_1 = arith.constant 0 : i32
    return %c0_i32, %c0_i32_0 : i32, i32
  }
  func.func @transform_5(%arg0: i32) -> (i32, i32) {
    %c0_i32 = arith.constant 0 : i32
    %c0_i32_0 = arith.constant 0 : i32
    %c0_i32_1 = arith.constant 0 : i32
    return %c0_i32, %c0_i32_0 : i32, i32
  }
  func.func @transform_6(%arg0: i32) -> (i32, i32) {
    %c0_i32 = arith.constant 0 : i32
    %c0_i32_0 = arith.constant 0 : i32
    %c0_i32_1 = arith.constant 0 : i32
    return %c0_i32, %c0_i32_0 : i32, i32
  }
  func.func @transform_7(%arg0: i32) -> (i32, i32) {
    %c0_i32 = arith.constant 0 : i32
    %c0_i32_0 = arith.constant 0 : i32
    %c0_i32_1 = arith.constant 0 : i32
    return %c0_i32, %c0_i32_0 : i32, i32
  }
  func.func @transform_8(%arg0: i32) -> (i32, i32) {
    %c0_i32 = arith.constant 0 : i32
    %c0_i32_0 = arith.constant 0 : i32
    %c0_i32_1 = arith.constant 0 : i32
    return %c0_i32, %c0_i32_0 : i32, i32
  }
  func.func @transform_9(%arg0: i32) -> (i32, i32) {
    %c0_i32 = arith.constant 0 : i32
    %c0_i32_0 = arith.constant 0 : i32
    return %arg0, %c0_i32 : i32, i32
  }
}

</mosaic_0001>

<llo_original>
// kernel: tpu_custom_call.1
$region0: #{tpu_custom_call.1}
  #allocation0 [shape = 'u32[]', space=smem, size = 0x4, offset = 0x4, fixed_abs, tag = 'smem constant byte address 0x4 - core index']
  #allocation1 [shape = 'u32[144,128]{1,0:T(1,128)}', space=vmem, size = 0x12000, scoped, tag = 'internal scratch']
  %s0 = inlined_call_operand.hbm [shape: f32[1024,128], index: 0, kind: input, shape index: {}]
  %s1 = inlined_call_operand.hbm [shape: bf16[128,256], index: 1, kind: input, shape index: {}]
  %s2 = inlined_call_operand.vmem [shape: f32[1,256], index: 2, kind: input, shape index: {}]
  %s3 = inlined_call_operand.hbm [shape: bf16[256,128], index: 3, kind: input, shape index: {}]
  %s4 = inlined_call_operand.vmem [shape: f32[1,128], index: 4, kind: input, shape index: {}]
  %s5 = inlined_call_operand.hbm [shape: bf16[128,256], index: 5, kind: input, shape index: {}]
  %s6 = inlined_call_operand.vmem [shape: f32[1,256], index: 6, kind: input, shape index: {}]
  %s7 = inlined_call_operand.hbm [shape: bf16[256,128], index: 7, kind: input, shape index: {}]
  %s8 = inlined_call_operand.vmem [shape: f32[1,128], index: 8, kind: input, shape index: {}]
  %s9 = inlined_call_operand.hbm [shape: f32[1024,128], index: 9, kind: output, shape index: {}]
  %s10 = sld [smem:[#allocation0]]
  $region89: #{tpu_custom_call.1} parent=0
    _
  %s12 = ssub.s32 1, %s10
  %s13 = scalar_select 0, %s12, %s10
  $region1: #{tpu_custom_call.1} parent=0
    #allocation2 [shape = 'u8[524288]{0}', space=vmem, size = 0x80000, scoped, tag = 'input window, operand 0']
    #allocation3 [shape = 's32[2]{0}', space=sflag, size = 0x8, scoped, tag = 'scoped memory for tpu_custom_call.1']
    #allocation4 [shape = 's32[2]{0}', space=sflag, size = 0x8, scoped, tag = 'scoped memory for tpu_custom_call.1']
    #allocation5 [shape = 'u8[65536]{0}', space=vmem, size = 0x10000, scoped, tag = 'input window, operand 1, single buffered']
    #allocation6 [shape = 's32[1]{0}', space=sflag, size = 0x4, scoped, tag = 'scoped memory for tpu_custom_call.1']
    #allocation7 [shape = 'u8[65536]{0}', space=vmem, size = 0x10000, scoped, tag = 'input window, operand 3, single buffered']
    #allocation8 [shape = 'u8[65536]{0}', space=vmem, size = 0x10000, scoped, tag = 'input window, operand 5, single buffered']
    #allocation9 [shape = 's32[1]{0}', space=sflag, size = 0x4, scoped, tag = 'scoped memory for tpu_custom_call.1']
    #allocation10 [shape = 'u8[65536]{0}', space=vmem, size = 0x10000, scoped, tag = 'input window, operand 7, single buffered']
    #allocation11 [shape = 'u8[524288]{0}', space=vmem, size = 0x80000, scoped, tag = 'output window, operand 0']
    %14 = vsyncpa [#allocation3], 0
    %s15 = scalar_lea.sflag [#allocation3], 1
    %16 = vsyncpa %s15, 0
    %17 = vsyncpa [#allocation6], 0
    %18 = vsyncpa [#allocation9], 0
    %19 = vsyncpa [#allocation4], 0
    %s20 = scalar_lea.sflag [#allocation4], 1
    %21 = vsyncpa %s20, 0
    loop: start=0, step=1, limit=4
    $region2: #{tpu_custom_call.1} parent=1 // loop_pre_header
      _
    $region3: #{tpu_custom_call.1} parent=1 // loop_header
      %s23 = sphi 0, %s27
      %p24 = scmp.ge.s32.totalorder %s23, 4
      %s33 = sphi 0, %s35
      %s36 = sphi 0, %s33
      %s37 = sphi 0, %s36
      %s53 = sphi 0, %s37
      %s57 = sphi 0, %s57
      %s59 = sphi 0, %s57
      %s60 = sphi 0, %s59
      %s74 = sphi 0, %s60
      %s78 = sphi 0, %s78
      %s80 = sphi 0, %s78
      %s81 = sphi 0, %s80
      %s95 = sphi 0, %s81
      %s99 = sphi 0, %s99
      %s101 = sphi 0, %s99
      %s102 = sphi 0, %s101
      %s116 = sphi 0, %s102
      %s120 = sphi 0, %s120
      %s122 = sphi 0, %s120
      %s123 = sphi 0, %s122
      %s137 = sphi 0, %s123
      %s141 = sphi 0, %s141
      %s143 = sphi 0, %s141
      %s144 = sphi 0, %s143
      %s158 = sphi 0, %s144
      %s162 = sphi 0, %s162
      %s164 = sphi 0, %s162
      %s165 = sphi 0, %s164
      %s179 = sphi 0, %s165
      %s183 = sphi 0, %s183
      %s185 = sphi 0, %s183
      %s186 = sphi 0, %s185
      %s200 = sphi 0, %s186
      %s204 = sphi 0, %s204
      %s206 = sphi 0, %s204
      %s207 = sphi 0, %s206
      %s221 = sphi 0, %s207
      %s227 = sphi 0, %s229
      %s230 = sphi 0, %s227
      %s231 = sphi 0, %s230
      %s247 = sphi 0, %s231
    $region4: #{tpu_custom_call.1} parent=1 // loop_header_branch
      %26 = sbr.rel (%p24) target = $region8
    $region5: #{tpu_custom_call.1} parent=1 // loop_body
      %s28 = ssub.s32 %s23, 1
      %s29 = ssub.s32 %s23, 2
      %s30 = sadd.s32 %s23, 1
      %s31 = ssub.s32 %s23, %s30
      %p32 = scmp.eq.s32.totalorder %s31, 0
      %s34 = sadd.s32 %s33, 1
      %s35 = scalar_select %p32, %s33, %s34
      %p38 = pneg %p32
      %p39 = scmp.eq.s32.totalorder %s23, 1
      %p40 = por %p38, %p39
      %p41 = scmp.ne.s32.totalorder %s33, %s36
      %p42 = scmp.eq.s32.totalorder %s23, 0
      %p43 = por %p41, %p42
      %p44 = scmp.ne.s32.totalorder %s33, %s36
      %p45 = scmp.eq.s32.totalorder %s28, 1
      %p46 = por %p44, %p45
      %p47 = scmp.ne.s32.totalorder %s36, %s37
      %p48 = scmp.eq.s32.totalorder %s28, 0
      %p49 = por %p47, %p48
      %p50 = scmp.ne.s32.totalorder %s36, %s37
      %p51 = scmp.eq.s32.totalorder %s29, 1
      %p52 = por %p50, %p51
      %p54 = scmp.ne.s32.totalorder %s37, %s53
      %p55 = scmp.eq.s32.totalorder %s29, 0
      %p56 = por %p54, %p55
      %s58 = sadd.s32 %s57, 1
      %p61 = scmp.eq.s32.totalorder %s23, 1
      %p62 = scmp.ne.s32.totalorder %s57, %s59
      %p63 = scmp.eq.s32.totalorder %s23, 0
      %p64 = por %p62, %p63
      %p65 = scmp.ne.s32.totalorder %s57, %s59
      %p66 = scmp.eq.s32.totalorder %s28, 1
      %p67 = por %p65, %p66
      %p68 = scmp.ne.s32.totalorder %s59, %s60
      %p69 = scmp.eq.s32.totalorder %s28, 0
      %p70 = por %p68, %p69
      %p71 = scmp.ne.s32.totalorder %s59, %s60
      %p72 = scmp.eq.s32.totalorder %s29, 1
      %p73 = por %p71, %p72
      %p75 = scmp.ne.s32.totalorder %s60, %s74
      %p76 = scmp.eq.s32.totalorder %s29, 0
      %p77 = por %p75, %p76
      %s79 = sadd.s32 %s78, 1
      %p82 = scmp.eq.s32.totalorder %s23, 1
      %p83 = scmp.ne.s32.totalorder %s78, %s80
      %p84 = scmp.eq.s32.totalorder %s23, 0
      %p85 = por %p83, %p84
      %p86 = scmp.ne.s32.totalorder %s78, %s80
      %p87 = scmp.eq.s32.totalorder %s28, 1
      %p88 = por %p86, %p87
      %p89 = scmp.ne.s32.totalorder %s80, %s81
      %p90 = scmp.eq.s32.totalorder %s28, 0
      %p91 = por %p89, %p90
      %p92 = scmp.ne.s32.totalorder %s80, %s81
      %p93 = scmp.eq.s32.totalorder %s29, 1
      %p94 = por %p92, %p93
      %p96 = scmp.ne.s32.totalorder %s81, %s95
      %p97 = scmp.eq.s32.totalorder %s29, 0
      %p98 = por %p96, %p97
      %s100 = sadd.s32 %s99, 1
      %p103 = scmp.eq.s32.totalorder %s23, 1
      %p104 = scmp.ne.s32.totalorder %s99, %s101
      %p105 = scmp.eq.s32.totalorder %s23, 0
      %p106 = por %p104, %p105
      %p107 = scmp.ne.s32.totalorder %s99, %s101
      %p108 = scmp.eq.s32.totalorder %s28, 1
      %p109 = por %p107, %p108
      %p110 = scmp.ne.s32.totalorder %s101, %s102
      %p111 = scmp.eq.s32.totalorder %s28, 0
      %p112 = por %p110, %p111
      %p113 = scmp.ne.s32.totalorder %s101, %s102
      %p114 = scmp.eq.s32.totalorder %s29, 1
      %p115 = por %p113, %p114
      %p117 = scmp.ne.s32.totalorder %s102, %s116
      %p118 = scmp.eq.s32.totalorder %s29, 0
      %p119 = por %p117, %p118
      %s121 = sadd.s32 %s120, 1
      %p124 = scmp.eq.s32.totalorder %s23, 1
      %p125 = scmp.ne.s32.totalorder %s120, %s122
      %p126 = scmp.eq.s32.totalorder %s23, 0
      %p127 = por %p125, %p126
      %p128 = scmp.ne.s32.totalorder %s120, %s122
      %p129 = scmp.eq.s32.totalorder %s28, 1
      %p130 = por %p128, %p129
      %p131 = scmp.ne.s32.totalorder %s122, %s123
      %p132 = scmp.eq.s32.totalorder %s28, 0
      %p133 = por %p131, %p132
      %p134 = scmp.ne.s32.totalorder %s122, %s123
      %p135 = scmp.eq.s32.totalorder %s29, 1
      %p136 = por %p134, %p135
      %p138 = scmp.ne.s32.totalorder %s123, %s137
      %p139 = scmp.eq.s32.totalorder %s29, 0
      %p140 = por %p138, %p139
      %s142 = sadd.s32 %s141, 1
      %p145 = scmp.eq.s32.totalorder %s23, 1
      %p146 = scmp.ne.s32.totalorder %s141, %s143
      %p147 = scmp.eq.s32.totalorder %s23, 0
      %p148 = por %p146, %p147
      %p149 = scmp.ne.s32.totalorder %s141, %s143
      %p150 = scmp.eq.s32.totalorder %s28, 1
      %p151 = por %p149, %p150
      %p152 = scmp.ne.s32.totalorder %s143, %s144
      %p153 = scmp.eq.s32.totalorder %s28, 0
      %p154 = por %p152, %p153
      %p155 = scmp.ne.s32.totalorder %s143, %s144
      %p156 = scmp.eq.s32.totalorder %s29, 1
      %p157 = por %p155, %p156
      %p159 = scmp.ne.s32.totalorder %s144, %s158
      %p160 = scmp.eq.s32.totalorder %s29, 0
      %p161 = por %p159, %p160
      %s163 = sadd.s32 %s162, 1
      %p166 = scmp.eq.s32.totalorder %s23, 1
      %p167 = scmp.ne.s32.totalorder %s162, %s164
      %p168 = scmp.eq.s32.totalorder %s23, 0
      %p169 = por %p167, %p168
      %p170 = scmp.ne.s32.totalorder %s162, %s164
      %p171 = scmp.eq.s32.totalorder %s28, 1
      %p172 = por %p170, %p171
      %p173 = scmp.ne.s32.totalorder %s164, %s165
      %p174 = scmp.eq.s32.totalorder %s28, 0
      %p175 = por %p173, %p174
      %p176 = scmp.ne.s32.totalorder %s164, %s165
      %p177 = scmp.eq.s32.totalorder %s29, 1
      %p178 = por %p176, %p177
      %p180 = scmp.ne.s32.totalorder %s165, %s179
      %p181 = scmp.eq.s32.totalorder %s29, 0
      %p182 = por %p180, %p181
      %s184 = sadd.s32 %s183, 1
      %p187 = scmp.eq.s32.totalorder %s23, 1
      %p188 = scmp.ne.s32.totalorder %s183, %s185
      %p189 = scmp.eq.s32.totalorder %s23, 0
      %p190 = por %p188, %p189
      %p191 = scmp.ne.s32.totalorder %s183, %s185
      %p192 = scmp.eq.s32.totalorder %s28, 1
      %p193 = por %p191, %p192
      %p194 = scmp.ne.s32.totalorder %s185, %s186
      %p195 = scmp.eq.s32.totalorder %s28, 0
      %p196 = por %p194, %p195
      %p197 = scmp.ne.s32.totalorder %s185, %s186
      %p198 = scmp.eq.s32.totalorder %s29, 1
      %p199 = por %p197, %p198
      %p201 = scmp.ne.s32.totalorder %s186, %s200
      %p202 = scmp.eq.s32.totalorder %s29, 0
      %p203 = por %p201, %p202
      %s205 = sadd.s32 %s204, 1
      %p208 = scmp.eq.s32.totalorder %s23, 1
      %p209 = scmp.ne.s32.totalorder %s204, %s206
      %p210 = scmp.eq.s32.totalorder %s23, 0
      %p211 = por %p209, %p210
      %p212 = scmp.ne.s32.totalorder %s204, %s206
      %p213 = scmp.eq.s32.totalorder %s28, 1
      %p214 = por %p212, %p213
      %p215 = scmp.ne.s32.totalorder %s206, %s207
      %p216 = scmp.eq.s32.totalorder %s28, 0
      %p217 = por %p215, %p216
      %p218 = scmp.ne.s32.totalorder %s206, %s207
      %p219 = scmp.eq.s32.totalorder %s29, 1
      %p220 = por %p218, %p219
      %p222 = scmp.ne.s32.totalorder %s207, %s221
      %p223 = scmp.eq.s32.totalorder %s29, 0
      %p224 = por %p222, %p223
      %s225 = ssub.s32 %s23, %s30
      %p226 = scmp.eq.s32.totalorder %s225, 0
      %s228 = sadd.s32 %s227, 1
      %s229 = scalar_select %p226, %s227, %s228
      %p232 = pneg %p226
      %p233 = scmp.eq.s32.totalorder %s23, 1
      %p234 = por %p232, %p233
      %p235 = scmp.ne.s32.totalorder %s227, %s230
      %p236 = scmp.eq.s32.totalorder %s23, 0
      %p237 = por %p235, %p236
      %p238 = scmp.ne.s32.totalorder %s227, %s230
      %p239 = scmp.eq.s32.totalorder %s28, 1
      %p240 = por %p238, %p239
      %p241 = scmp.ne.s32.totalorder %s230, %s231
      %p242 = scmp.eq.s32.totalorder %s28, 0
      %p243 = por %p241, %p242
      %p244 = scmp.ne.s32.totalorder %s230, %s231
      %p245 = scmp.eq.s32.totalorder %s29, 1
      %p246 = por %p244, %p245
      %p248 = scmp.ne.s32.totalorder %s231, %s247
      %p249 = scmp.eq.s32.totalorder %s29, 0
      %p250 = por %p248, %p249
      %p251 = scmp.le.s32.totalorder 1, %s23
      %p252 = scmp.lt.s32.totalorder %s23, 3
      %p253 = pnand %p251, %p252
      %p254 = pneg %p253
      // Predicated region
      $region9: #{tpu_custom_call.1} parent=5 // pred_check
        _
      $region10: #{tpu_custom_call.1} parent=5 // pred_check_branch
        %256 = sbr.rel (%p253) target = $region12
      $region11: #{tpu_custom_call.1} parent=5 // pred_region
        %s257 = ssub.s32 %s23, 1
        // Predicated region
        $region13: #{tpu_custom_call.1} parent=11 // pred_check
          %p258 = pneg %p70
        $region14: #{tpu_custom_call.1} parent=11 // pred_check_branch
          %260 = sbr.rel (%p258) target = $region16
        $region15: #{tpu_custom_call.1} parent=11 // pred_region
          %s262 = ssub.s32 2048, 2048
          %263 = vsyncadd [#allocation6], %s262
          %s264 = sshll.u32 [#allocation5], 4
          %s265 = int_to_ptr.vmem [resolvable:$true] %s264
          %270 = dma.hbm_to_vmem [thread:$0]  %s1, 2048, %s265, [#allocation6], 128, 128, 8
        $region16: #{tpu_custom_call.1} parent=11 // pred_fallthru
          _
        // Predicated region
        $region17: #{tpu_custom_call.1} parent=11 // pred_check
          %p271 = pneg %p91
        $region18: #{tpu_custom_call.1} parent=11 // pred_check_branch
          %273 = sbr.rel (%p271) target = $region20
        $region19: #{tpu_custom_call.1} parent=11 // pred_region
          _
        $region20: #{tpu_custom_call.1} parent=11 // pred_fallthru
          _
        // Predicated region
        $region21: #{tpu_custom_call.1} parent=11 // pred_check
          %p274 = pneg %p112
        $region22: #{tpu_custom_call.1} parent=11 // pred_check_branch
          %276 = sbr.rel (%p274) target = $region24
        $region23: #{tpu_custom_call.1} parent=11 // pred_region
          %s278 = ssub.s32 2048, 2048
          %279 = vsyncadd [#allocation6], %s278
          %s280 = sshll.u32 [#allocation7], 4
          %s281 = int_to_ptr.vmem [resolvable:$true] %s280
          %286 = dma.hbm_to_vmem [thread:$0]  %s3, 2048, %s281, [#allocation6], 64, 64, 4
        $region24: #{tpu_custom_call.1} parent=11 // pred_fallthru
          _
        // Predicated region
        $region25: #{tpu_custom_call.1} parent=11 // pred_check
          %p287 = pneg %p133
        $region26: #{tpu_custom_call.1} parent=11 // pred_check_branch
          %289 = sbr.rel (%p287) target = $region28
        $region27: #{tpu_custom_call.1} parent=11 // pred_region
          _
        $region28: #{tpu_custom_call.1} parent=11 // pred_fallthru
          _
        // Predicated region
        $region29: #{tpu_custom_call.1} parent=11 // pred_check
          %p290 = pneg %p154
        $region30: #{tpu_custom_call.1} parent=11 // pred_check_branch
          %292 = sbr.rel (%p290) target = $region32
        $region31: #{tpu_custom_call.1} parent=11 // pred_region
          %s294 = ssub.s32 2048, 2048
          %295 = vsyncadd [#allocation9], %s294
          %s296 = sshll.u32 [#allocation8], 4
          %s297 = int_to_ptr.vmem [resolvable:$true] %s296
          %302 = dma.hbm_to_vmem [thread:$0]  %s5, 2048, %s297, [#allocation9], 128, 128, 8
        $region32: #{tpu_custom_call.1} parent=11 // pred_fallthru
          _
        // Predicated region
        $region33: #{tpu_custom_call.1} parent=11 // pred_check
          %p303 = pneg %p175
        $region34: #{tpu_custom_call.1} parent=11 // pred_check_branch
          %305 = sbr.rel (%p303) target = $region36
        $region35: #{tpu_custom_call.1} parent=11 // pred_region
          _
        $region36: #{tpu_custom_call.1} parent=11 // pred_fallthru
          _
        // Predicated region
        $region37: #{tpu_custom_call.1} parent=11 // pred_check
          %p306 = pneg %p196
        $region38: #{tpu_custom_call.1} parent=11 // pred_check_branch
          %308 = sbr.rel (%p306) target = $region40
        $region39: #{tpu_custom_call.1} parent=11 // pred_region
          %s310 = ssub.s32 2048, 2048
          %311 = vsyncadd [#allocation9], %s310
          %s312 = sshll.u32 [#allocation10], 4
          %s313 = int_to_ptr.vmem [resolvable:$true] %s312
          %318 = dma.hbm_to_vmem [thread:$0]  %s7, 2048, %s313, [#allocation9], 64, 64, 4
        $region40: #{tpu_custom_call.1} parent=11 // pred_fallthru
          _
        // Predicated region
        $region41: #{tpu_custom_call.1} parent=11 // pred_check
          %p319 = pneg %p217
        $region42: #{tpu_custom_call.1} parent=11 // pred_check_branch
          %321 = sbr.rel (%p319) target = $region44
        $region43: #{tpu_custom_call.1} parent=11 // pred_region
          _
        $region44: #{tpu_custom_call.1} parent=11 // pred_fallthru
          _
      $region12: #{tpu_custom_call.1} parent=5 // pred_fallthru
        _
      %p322 = scmp.lt.s32.totalorder %s23, 2
      // Predicated region
      $region45: #{tpu_custom_call.1} parent=5 // pred_check
        %p323 = pneg %p322
      $region46: #{tpu_custom_call.1} parent=5 // pred_check_branch
        %325 = sbr.rel (%p323) target = $region48
      $region47: #{tpu_custom_call.1} parent=5 // pred_region
        // Predicated region
        $region49: #{tpu_custom_call.1} parent=47 // pred_check
          %p326 = pneg %p43
        $region50: #{tpu_custom_call.1} parent=47 // pred_check_branch
          %328 = sbr.rel (%p326) target = $region52
        $region51: #{tpu_custom_call.1} parent=47 // pred_region
          %s329 = sand.u32 %s33, 1
          %s330 = scalar_lea.sflag [#allocation3], %s329
          %s331 = sand.u32 %s33, 1
          %s332 = smul.addr %s331, 512
          %s333 = scalar_lea.vmem [#allocation2], %s332
          %s334 = smul.u32 64, %s23
          %s336 = ssub.s32 8192, 8192
          %337 = vsyncadd %s330, %s336
          %s338 = smul.addr %s334, 128
          %s339 = scalar_lea.hbm %s0, %s338
          %s340 = sshll.u32 %s333, 4
          %s341 = int_to_ptr.vmem [resolvable:$true] %s340
          %346 = dma.hbm_to_vmem [thread:$0]  %s339, 8192, %s341, %s330, 128, 128, 8
        $region52: #{tpu_custom_call.1} parent=47 // pred_fallthru
          _
      $region48: #{tpu_custom_call.1} parent=5 // pred_fallthru
        _
      %p347 = scmp.le.s32.totalorder 1, %s23
      %p348 = scmp.lt.s32.totalorder %s23, 3
      %p349 = pnand %p347, %p348
      %p350 = pneg %p349
      // Predicated region
      $region53: #{tpu_custom_call.1} parent=5 // pred_check
        _
      $region54: #{tpu_custom_call.1} parent=5 // pred_check_branch
        %352 = sbr.rel (%p349) target = $region56
      $region55: #{tpu_custom_call.1} parent=5 // pred_region
        %s353 = ssub.s32 %s23, 1
        %s354 = sand.u32 %s36, 1
        %s355 = scalar_lea.sflag [#allocation3], %s354
        %s356 = sand.u32 %s36, 1
        %s357 = smul.addr %s356, 512
        %s358 = scalar_lea.vmem [#allocation2], %s357
        // Predicated region
        $region57: #{tpu_custom_call.1} parent=55 // pred_check
          %p359 = pneg %p49
        $region58: #{tpu_custom_call.1} parent=55 // pred_check_branch
          %361 = sbr.rel (%p359) target = $region60
        $region59: #{tpu_custom_call.1} parent=55 // pred_region
          %362 = dma.done %s355, 8192
        $region60: #{tpu_custom_call.1} parent=55 // pred_fallthru
          _
        // Predicated region
        $region61: #{tpu_custom_call.1} parent=55 // pred_check
          %p363 = pneg %p70
        $region62: #{tpu_custom_call.1} parent=55 // pred_check_branch
          %365 = sbr.rel (%p363) target = $region64
        $region63: #{tpu_custom_call.1} parent=55 // pred_region
          %366 = dma.done [#allocation6], 2048
        $region64: #{tpu_custom_call.1} parent=55 // pred_fallthru
          _
        // Predicated region
        $region65: #{tpu_custom_call.1} parent=55 // pred_check
          %p367 = pneg %p112
        $region66: #{tpu_custom_call.1} parent=55 // pred_check_branch
          %369 = sbr.rel (%p367) target = $region68
        $region67: #{tpu_custom_call.1} parent=55 // pred_region
          %370 = dma.done [#allocation6], 2048
        $region68: #{tpu_custom_call.1} parent=55 // pred_fallthru
          _
        // Predicated region
        $region69: #{tpu_custom_call.1} parent=55 // pred_check
          %p371 = pneg %p154
        $region70: #{tpu_custom_call.1} parent=55 // pred_check_branch
          %373 = sbr.rel (%p371) target = $region72
        $region71: #{tpu_custom_call.1} parent=55 // pred_region
          %374 = dma.done [#allocation9], 2048
        $region72: #{tpu_custom_call.1} parent=55 // pred_fallthru
          _
        // Predicated region
        $region73: #{tpu_custom_call.1} parent=55 // pred_check
          %p375 = pneg %p196
        $region74: #{tpu_custom_call.1} parent=55 // pred_check_branch
          %377 = sbr.rel (%p375) target = $region76
        $region75: #{tpu_custom_call.1} parent=55 // pred_region
          %378 = dma.done [#allocation9], 2048
        $region76: #{tpu_custom_call.1} parent=55 // pred_fallthru
          _
        %s379 = sand.u32 %s36, 1
        %s380 = scalar_lea.sflag [#allocation3], %s379
        %s381 = sand.u32 %s36, 1
        %s382 = smul.addr %s381, 512
        %s383 = scalar_lea.vmem [#allocation2], %s382
        %p384 = pneg %p49
        %p385 = pneg %p46
        %p386 = pneg %p70
        %p387 = pneg %p67
        %p388 = pneg %p91
        %p389 = pneg %p88
        %p390 = pneg %p112
        %p391 = pneg %p109
        %p392 = pneg %p133
        %p393 = pneg %p130
        %p394 = pneg %p154
        %p395 = pneg %p151
        %p396 = pneg %p175
        %p397 = pneg %p172
        %p398 = pneg %p196
        %p399 = pneg %p193
        %p400 = pneg %p217
        %p401 = pneg %p214
        %p402 = pneg %p243
        %p403 = pneg %p240
        %s404 = sand.u32 %s230, 1
        %s405 = scalar_lea.sflag [#allocation4], %s404
        %s406 = sand.u32 %s230, 1
        %s407 = smul.addr %s406, 512
        %s408 = scalar_lea.vmem [#allocation11], %s407
        %s409 = smul.u32 64, %s28
        %s410 = smul.u32 64, %s28
        %v412 = vld [vmem:[%s358] sm:$0xff]
        %v413 = vld [vmem:[%s358 + $0x8] sm:$0xff]
        %v414 = vld [vmem:[%s358 + $0x10] sm:$0xff]
        %v415 = vld [vmem:[%s358 + $0x18] sm:$0xff]
        %v416 = vld [vmem:[%s358 + $0x20] sm:$0xff]
        %v417 = vld [vmem:[%s358 + $0x28] sm:$0xff]
        %v418 = vld [vmem:[%s358 + $0x30] sm:$0xff]
        %v419 = vld [vmem:[%s358 + $0x38] sm:$0xff]
        %v420 = vld [vmem:[%s358 + $0x40] sm:$0xff]
        %v421 = vld [vmem:[%s358 + $0x48] sm:$0xff]
        %v422 = vld [vmem:[%s358 + $0x50] sm:$0xff]
        %v423 = vld [vmem:[%s358 + $0x58] sm:$0xff]
        %v424 = vld [vmem:[%s358 + $0x60] sm:$0xff]
        %v425 = vld [vmem:[%s358 + $0x68] sm:$0xff]
        %v426 = vld [vmem:[%s358 + $0x70] sm:$0xff]
        %v427 = vld [vmem:[%s358 + $0x78] sm:$0xff]
        %v428 = vld [vmem:[%s358 + $0x80] sm:$0xff]
        %v429 = vld [vmem:[%s358 + $0x88] sm:$0xff]
        %v430 = vld [vmem:[%s358 + $0x90] sm:$0xff]
        %v431 = vld [vmem:[%s358 + $0x98] sm:$0xff]
        %v432 = vld [vmem:[%s358 + $0xa0] sm:$0xff]
        %v433 = vld [vmem:[%s358 + $0xa8] sm:$0xff]
        %v434 = vld [vmem:[%s358 + $0xb0] sm:$0xff]
        %v435 = vld [vmem:[%s358 + $0xb8] sm:$0xff]
        %v436 = vld [vmem:[%s358 + $0xc0] sm:$0xff]
        %v437 = vld [vmem:[%s358 + $0xc8] sm:$0xff]
        %v438 = vld [vmem:[%s358 + $0xd0] sm:$0xff]
        %v439 = vld [vmem:[%s358 + $0xd8] sm:$0xff]
        %v440 = vld [vmem:[%s358 + $0xe0] sm:$0xff]
        %v441 = vld [vmem:[%s358 + $0xe8] sm:$0xff]
        %v442 = vld [vmem:[%s358 + $0xf0] sm:$0xff]
        %v443 = vld [vmem:[%s358 + $0xf8] sm:$0xff]
        %v444 = vld [vmem:[%s358 + $0x100] sm:$0xff]
        %v445 = vld [vmem:[%s358 + $0x108] sm:$0xff]
        %v446 = vld [vmem:[%s358 + $0x110] sm:$0xff]
        %v447 = vld [vmem:[%s358 + $0x118] sm:$0xff]
        %v448 = vld [vmem:[%s358 + $0x120] sm:$0xff]
        %v449 = vld [vmem:[%s358 + $0x128] sm:$0xff]
        %v450 = vld [vmem:[%s358 + $0x130] sm:$0xff]
        %v451 = vld [vmem:[%s358 + $0x138] sm:$0xff]
        %v452 = vld [vmem:[%s358 + $0x140] sm:$0xff]
        %v453 = vld [vmem:[%s358 + $0x148] sm:$0xff]
        %v454 = vld [vmem:[%s358 + $0x150] sm:$0xff]
        %v455 = vld [vmem:[%s358 + $0x158] sm:$0xff]
        %v456 = vld [vmem:[%s358 + $0x160] sm:$0xff]
        %v457 = vld [vmem:[%s358 + $0x168] sm:$0xff]
        %v458 = vld [vmem:[%s358 + $0x170] sm:$0xff]
        %v459 = vld [vmem:[%s358 + $0x178] sm:$0xff]
        %v460 = vld [vmem:[%s358 + $0x180] sm:$0xff]
        %v461 = vld [vmem:[%s358 + $0x188] sm:$0xff]
        %v462 = vld [vmem:[%s358 + $0x190] sm:$0xff]
        %v463 = vld [vmem:[%s358 + $0x198] sm:$0xff]
        %v464 = vld [vmem:[%s358 + $0x1a0] sm:$0xff]
        %v465 = vld [vmem:[%s358 + $0x1a8] sm:$0xff]
        %v466 = vld [vmem:[%s358 + $0x1b0] sm:$0xff]
        %v467 = vld [vmem:[%s358 + $0x1b8] sm:$0xff]
        %v468 = vld [vmem:[%s358 + $0x1c0] sm:$0xff]
        %v469 = vld [vmem:[%s358 + $0x1c8] sm:$0xff]
        %v470 = vld [vmem:[%s358 + $0x1d0] sm:$0xff]
        %v471 = vld [vmem:[%s358 + $0x1d8] sm:$0xff]
        %v472 = vld [vmem:[%s358 + $0x1e0] sm:$0xff]
        %v473 = vld [vmem:[%s358 + $0x1e8] sm:$0xff]
        %v474 = vld [vmem:[%s358 + $0x1f0] sm:$0xff]
        %v475 = vld [vmem:[%s358 + $0x1f8] sm:$0xff]
        %v476 = vpack.c.bf16 %v413, %v412
        %v477 = vpack.c.bf16 %v415, %v414
        %v478 = vpack.c.bf16 %v417, %v416
        %v479 = vpack.c.bf16 %v419, %v418
        %v480 = vpack.c.bf16 %v421, %v420
        %v481 = vpack.c.bf16 %v423, %v422
        %v482 = vpack.c.bf16 %v425, %v424
        %v483 = vpack.c.bf16 %v427, %v426
        %v484 = vpack.c.bf16 %v429, %v428
        %v485 = vpack.c.bf16 %v431, %v430
        %v486 = vpack.c.bf16 %v433, %v432
        %v487 = vpack.c.bf16 %v435, %v434
        %v488 = vpack.c.bf16 %v437, %v436
        %v489 = vpack.c.bf16 %v439, %v438
        %v490 = vpack.c.bf16 %v441, %v440
        %v491 = vpack.c.bf16 %v443, %v442
        %v492 = vpack.c.bf16 %v445, %v444
        %v493 = vpack.c.bf16 %v447, %v446
        %v494 = vpack.c.bf16 %v449, %v448
        %v495 = vpack.c.bf16 %v451, %v450
        %v496 = vpack.c.bf16 %v453, %v452
        %v497 = vpack.c.bf16 %v455, %v454
        %v498 = vpack.c.bf16 %v457, %v456
        %v499 = vpack.c.bf16 %v459, %v458
        %v500 = vpack.c.bf16 %v461, %v460
        %v501 = vpack.c.bf16 %v463, %v462
        %v502 = vpack.c.bf16 %v465, %v464
        %v503 = vpack.c.bf16 %v467, %v466
        %v504 = vpack.c.bf16 %v469, %v468
        %v505 = vpack.c.bf16 %v471, %v470
        %v506 = vpack.c.bf16 %v473, %v472
        %v507 = vpack.c.bf16 %v475, %v474
        %v508 = vld [vmem:[#allocation5] sm:$0xff]
        %v509 = vld [vmem:[#allocation5 + $0x8] sm:$0xff]
        %v510 = vld [vmem:[#allocation5 + $0x10] sm:$0xff]
        %v511 = vld [vmem:[#allocation5 + $0x18] sm:$0xff]
        %v512 = vld [vmem:[#allocation5 + $0x20] sm:$0xff]
        %v513 = vld [vmem:[#allocation5 + $0x28] sm:$0xff]
        %v514 = vld [vmem:[#allocation5 + $0x30] sm:$0xff]
        %v515 = vld [vmem:[#allocation5 + $0x38] sm:$0xff]
        %v516 = vld [vmem:[#allocation5 + $0x40] sm:$0xff]
        %v517 = vld [vmem:[#allocation5 + $0x48] sm:$0xff]
        %v518 = vld [vmem:[#allocation5 + $0x50] sm:$0xff]
        %v519 = vld [vmem:[#allocation5 + $0x58] sm:$0xff]
        %v520 = vld [vmem:[#allocation5 + $0x60] sm:$0xff]
        %v521 = vld [vmem:[#allocation5 + $0x68] sm:$0xff]
        %v522 = vld [vmem:[#allocation5 + $0x70] sm:$0xff]
        %v523 = vld [vmem:[#allocation5 + $0x78] sm:$0xff]
        %v524 = vld [vmem:[%s2] sm:$0x3]
        %v526 = vlaneseq
        %v527 = vshrl.u32 %v526, 7
        %v528 = vsub.s32 0, %v527
        %v529 = vrot.slane %v524, %v528
        %v530 = vlaneseq
        %v531 = vshrl.u32 %v530, 7
        %v532 = vsub.s32 1, %v531
        %v533 = vrot.slane %v524, %v532
        %v552 = vunpack.c.l.b16 %v508
        %v553 = vunpack.c.h.b16 %v508
        %v554 = vunpack.c.l.b16 %v509
        %v555 = vunpack.c.h.b16 %v509
        %v556 = vunpack.c.l.b16 %v510
        %v557 = vunpack.c.h.b16 %v510
        %v558 = vunpack.c.l.b16 %v511
        %v559 = vunpack.c.h.b16 %v511
        %v560 = vunpack.c.l.b16 %v512
        %v561 = vunpack.c.h.b16 %v512
        %v562 = vunpack.c.l.b16 %v513
        %v563 = vunpack.c.h.b16 %v513
        %v564 = vunpack.c.l.b16 %v514
        %v565 = vunpack.c.h.b16 %v514
        %v566 = vunpack.c.l.b16 %v515
        %v567 = vunpack.c.h.b16 %v515
        %v568 = vunpack.c.l.b16 %v516
        %v569 = vunpack.c.h.b16 %v516
        %v570 = vunpack.c.l.b16 %v517
        %v571 = vunpack.c.h.b16 %v517
        %v572 = vunpack.c.l.b16 %v518
        %v573 = vunpack.c.h.b16 %v518
        %v574 = vunpack.c.l.b16 %v519
        %v575 = vunpack.c.h.b16 %v519
        %v576 = vunpack.c.l.b16 %v520
        %v577 = vunpack.c.h.b16 %v520
        %v578 = vunpack.c.l.b16 %v521
        %v579 = vunpack.c.h.b16 %v521
        %v580 = vunpack.c.l.b16 %v522
        %v581 = vunpack.c.h.b16 %v522
        %v582 = vunpack.c.l.b16 %v523
        %v583 = vunpack.c.h.b16 %v523
        %v584 = vpack.c.b16 %v554, %v552
        %v585 = vpack.c.b16 %v555, %v553
        %v586 = vpack.c.b16 %v558, %v556
        %v587 = vpack.c.b16 %v559, %v557
        %v588 = vpack.c.b16 %v562, %v560
        %v589 = vpack.c.b16 %v563, %v561
        %v590 = vpack.c.b16 %v566, %v564
        %v591 = vpack.c.b16 %v567, %v565
        %v592 = vpack.c.b16 %v570, %v568
        %v593 = vpack.c.b16 %v571, %v569
        %v594 = vpack.c.b16 %v574, %v572
        %v595 = vpack.c.b16 %v575, %v573
        %v596 = vpack.c.b16 %v578, %v576
        %v597 = vpack.c.b16 %v579, %v577
        %v598 = vpack.c.b16 %v582, %v580
        %v599 = vpack.c.b16 %v583, %v581
        %616 = vmatprep.subr.bf16.mxu0 %v599
        %617 = vmatpush1.bf16.msra.mxu0 %v598
        %618 = vmatprep.subr.bf16.mxu0 %v597
        %619 = vmatpush1.bf16.msra.mxu0 %v596
        %620 = vmatprep.subr.bf16.mxu0 %v595
        %621 = vmatpush1.bf16.msra.mxu0 %v594
        %622 = vmatprep.subr.bf16.mxu0 %v593
        %623 = vmatpush1.bf16.msra.mxu0 %v592
        %624 = vmatprep.subr.bf16.mxu0 %v591
        %625 = vmatpush1.bf16.msra.mxu0 %v590
        %626 = vmatprep.subr.bf16.mxu0 %v589
        %627 = vmatpush1.bf16.msra.mxu0 %v588
        %628 = vmatprep.subr.bf16.mxu0 %v587
        %629 = vmatpush1.bf16.msra.mxu0 %v586
        %630 = vmatprep.subr.bf16.mxu0 %v585
        %631 = vmatpush1.bf16.msra.mxu0 %v584
        %632 = vmatprep.subr.bf16.mxu0 0
        %633 = vmatpush2.bf16.msra.mxu0 0
        %634 = vmatprep.subr.bf16.mxu0 0
        %635 = vmatpush2.bf16.msra.mxu0 0
        %636 = vmatprep.subr.bf16.mxu0 0
        %637 = vmatpush2.bf16.msra.mxu0 0
        %638 = vmatprep.subr.bf16.mxu0 0
        %639 = vmatpush2.bf16.msra.mxu0 0
        %640 = vmatprep.subr.bf16.mxu0 0
        %641 = vmatpush2.bf16.msra.mxu0 0
        %642 = vmatprep.subr.bf16.mxu0 0
        %643 = vmatpush2.bf16.msra.mxu0 0
        %644 = vmatprep.subr.bf16.mxu0 0
        %645 = vmatpush2.bf16.msra.mxu0 0
        %646 = vmatprep.subr.bf16.mxu0 0
        %647 = vmatpush2.bf16.msra.mxu0 0
        %648 = vmatprep.mubr.bf16.mxu0 0
        %649 = vmatmul.mubr.bf16.gmra.mxu0 %v476
        %v650 = vpop.f32.mrf.mxu0
        %v651 = vadd.f32 %v529, %v650
        %v652 = vpop.f32.mrf.mxu0
        %v653 = vadd.f32 %v533, %v652
        %v654 = vpop.f32.mrf.mxu0
        %v655 = vadd.f32 %v529, %v654
        %v656 = vpop.f32.mrf.mxu0
        %v657 = vadd.f32 %v533, %v656
        %658 = vmatprep.mubr.bf16.mxu0 0
        %659 = vmatmul.mubr.bf16.gmra.mxu0 %v477
        %v660 = vpop.f32.mrf.mxu0
        %v661 = vadd.f32 %v529, %v660
        %v662 = vpop.f32.mrf.mxu0
        %v663 = vadd.f32 %v533, %v662
        %v664 = vpop.f32.mrf.mxu0
        %v665 = vadd.f32 %v529, %v664
        %v666 = vpop.f32.mrf.mxu0
        %v667 = vadd.f32 %v533, %v666
        %668 = vmatprep.mubr.bf16.mxu0 0
        %669 = vmatmul.mubr.bf16.gmra.mxu0 %v478
        %v670 = vpop.f32.mrf.mxu0
        %v671 = vadd.f32 %v529, %v670
        %v672 = vpop.f32.mrf.mxu0
        %v673 = vadd.f32 %v533, %v672
        %v674 = vpop.f32.mrf.mxu0
        %v675 = vadd.f32 %v529, %v674
        %v676 = vpop.f32.mrf.mxu0
        %v677 = vadd.f32 %v533, %v676
        %678 = vmatprep.mubr.bf16.mxu0 0
        %679 = vmatmul.mubr.bf16.gmra.mxu0 %v479
        %v680 = vpop.f32.mrf.mxu0
        %v681 = vadd.f32 %v529, %v680
        %v682 = vpop.f32.mrf.mxu0
        %v683 = vadd.f32 %v533, %v682
        %v684 = vpop.f32.mrf.mxu0
        %v685 = vadd.f32 %v529, %v684
        %v686 = vpop.f32.mrf.mxu0
        %v687 = vadd.f32 %v533, %v686
        %688 = vmatprep.mubr.bf16.mxu0 0
        %689 = vmatmul.mubr.bf16.gmra.mxu0 %v480
        %v690 = vpop.f32.mrf.mxu0
        %v691 = vadd.f32 %v529, %v690
        %v692 = vpop.f32.mrf.mxu0
        %v693 = vadd.f32 %v533, %v692
        %v694 = vpop.f32.mrf.mxu0
        %v695 = vadd.f32 %v529, %v694
        %v696 = vpop.f32.mrf.mxu0
        %v697 = vadd.f32 %v533, %v696
        %698 = vmatprep.mubr.bf16.mxu0 0
        %699 = vmatmul.mubr.bf16.gmra.mxu0 %v481
        %v700 = vpop.f32.mrf.mxu0
        %v701 = vadd.f32 %v529, %v700
        %v702 = vpop.f32.mrf.mxu0
        %v703 = vadd.f32 %v533, %v702
        %v704 = vpop.f32.mrf.mxu0
        %v705 = vadd.f32 %v529, %v704
        %v706 = vpop.f32.mrf.mxu0
        %v707 = vadd.f32 %v533, %v706
        %708 = vmatprep.mubr.bf16.mxu0 0
        %709 = vmatmul.mubr.bf16.gmra.mxu0 %v482
        %v710 = vpop.f32.mrf.mxu0
        %v711 = vadd.f32 %v529, %v710
        %v712 = vpop.f32.mrf.mxu0
        %v713 = vadd.f32 %v533, %v712
        %v714 = vpop.f32.mrf.mxu0
        %v715 = vadd.f32 %v529, %v714
        %v716 = vpop.f32.mrf.mxu0
        %v717 = vadd.f32 %v533, %v716
        %718 = vmatprep.mubr.bf16.mxu0 0
        %719 = vmatmul.mubr.bf16.gmra.mxu0 %v483
        %v720 = vpop.f32.mrf.mxu0
        %v721 = vadd.f32 %v529, %v720
        %v722 = vpop.f32.mrf.mxu0
        %v723 = vadd.f32 %v533, %v722
        %v724 = vpop.f32.mrf.mxu0
        %v725 = vadd.f32 %v529, %v724
        %v726 = vpop.f32.mrf.mxu0
        %v727 = vadd.f32 %v533, %v726
        %728 = vmatprep.mubr.bf16.mxu0 0
        %729 = vmatmul.mubr.bf16.gmra.mxu0 %v484
        %v730 = vpop.f32.mrf.mxu0
        %v731 = vadd.f32 %v529, %v730
        %v732 = vpop.f32.mrf.mxu0
        %v733 = vadd.f32 %v533, %v732
        %v734 = vpop.f32.mrf.mxu0
        %v735 = vadd.f32 %v529, %v734
        %v736 = vpop.f32.mrf.mxu0
        %v737 = vadd.f32 %v533, %v736
        %738 = vmatprep.mubr.bf16.mxu0 0
        %739 = vmatmul.mubr.bf16.gmra.mxu0 %v485
        %v740 = vpop.f32.mrf.mxu0
        %v741 = vadd.f32 %v529, %v740
        %v742 = vpop.f32.mrf.mxu0
        %v743 = vadd.f32 %v533, %v742
        %v744 = vpop.f32.mrf.mxu0
        %v745 = vadd.f32 %v529, %v744
        %v746 = vpop.f32.mrf.mxu0
        %v747 = vadd.f32 %v533, %v746
        %748 = vmatprep.mubr.bf16.mxu0 0
        %749 = vmatmul.mubr.bf16.gmra.mxu0 %v486
        %v750 = vpop.f32.mrf.mxu0
        %v751 = vadd.f32 %v529, %v750
        %v752 = vpop.f32.mrf.mxu0
        %v753 = vadd.f32 %v533, %v752
        %v754 = vpop.f32.mrf.mxu0
        %v755 = vadd.f32 %v529, %v754
        %v756 = vpop.f32.mrf.mxu0
        %v757 = vadd.f32 %v533, %v756
        %758 = vmatprep.mubr.bf16.mxu0 0
        %759 = vmatmul.mubr.bf16.gmra.mxu0 %v487
        %v760 = vpop.f32.mrf.mxu0
        %v761 = vadd.f32 %v529, %v760
        %v762 = vpop.f32.mrf.mxu0
        %v763 = vadd.f32 %v533, %v762
        %v764 = vpop.f32.mrf.mxu0
        %v765 = vadd.f32 %v529, %v764
        %v766 = vpop.f32.mrf.mxu0
        %v767 = vadd.f32 %v533, %v766
        %768 = vmatprep.mubr.bf16.mxu0 0
        %769 = vmatmul.mubr.bf16.gmra.mxu0 %v488
        %v770 = vpop.f32.mrf.mxu0
        %v771 = vadd.f32 %v529, %v770
        %v772 = vpop.f32.mrf.mxu0
        %v773 = vadd.f32 %v533, %v772
        %v774 = vpop.f32.mrf.mxu0
        %v775 = vadd.f32 %v529, %v774
        %v776 = vpop.f32.mrf.mxu0
        %v777 = vadd.f32 %v533, %v776
        %778 = vmatprep.mubr.bf16.mxu0 0
        %779 = vmatmul.mubr.bf16.gmra.mxu0 %v489
        %v780 = vpop.f32.mrf.mxu0
        %v781 = vadd.f32 %v529, %v780
        %v782 = vpop.f32.mrf.mxu0
        %v783 = vadd.f32 %v533, %v782
        %v784 = vpop.f32.mrf.mxu0
        %v785 = vadd.f32 %v529, %v784
        %v786 = vpop.f32.mrf.mxu0
        %v787 = vadd.f32 %v533, %v786
        %788 = vmatprep.mubr.bf16.mxu0 0
        %789 = vmatmul.mubr.bf16.gmra.mxu0 %v490
        %v790 = vpop.f32.mrf.mxu0
        %v791 = vadd.f32 %v529, %v790
        %v792 = vpop.f32.mrf.mxu0
        %v793 = vadd.f32 %v533, %v792
        %v794 = vpop.f32.mrf.mxu0
        %v795 = vadd.f32 %v529, %v794
        %v796 = vpop.f32.mrf.mxu0
        %v797 = vadd.f32 %v533, %v796
        %798 = vmatprep.mubr.bf16.mxu0 0
        %799 = vmatmul.mubr.bf16.gmra.mxu0 %v491
        %v800 = vpop.f32.mrf.mxu0
        %v801 = vadd.f32 %v529, %v800
        %v802 = vpop.f32.mrf.mxu0
        %v803 = vadd.f32 %v533, %v802
        %v804 = vpop.f32.mrf.mxu0
        %v805 = vadd.f32 %v529, %v804
        %v806 = vpop.f32.mrf.mxu0
        %v807 = vadd.f32 %v533, %v806
        %808 = vmatprep.mubr.bf16.mxu0 0
        %809 = vmatmul.mubr.bf16.gmra.mxu0 %v492
        %v810 = vpop.f32.mrf.mxu0
        %v811 = vadd.f32 %v529, %v810
        %v812 = vpop.f32.mrf.mxu0
        %v813 = vadd.f32 %v533, %v812
        %v814 = vpop.f32.mrf.mxu0
        %v815 = vadd.f32 %v529, %v814
        %v816 = vpop.f32.mrf.mxu0
        %v817 = vadd.f32 %v533, %v816
        %818 = vmatprep.mubr.bf16.mxu0 0
        %819 = vmatmul.mubr.bf16.gmra.mxu0 %v493
        %v820 = vpop.f32.mrf.mxu0
        %v821 = vadd.f32 %v529, %v820
        %v822 = vpop.f32.mrf.mxu0
        %v823 = vadd.f32 %v533, %v822
        %v824 = vpop.f32.mrf.mxu0
        %v825 = vadd.f32 %v529, %v824
        %v826 = vpop.f32.mrf.mxu0
        %v827 = vadd.f32 %v533, %v826
        %828 = vmatprep.mubr.bf16.mxu0 0
        %829 = vmatmul.mubr.bf16.gmra.mxu0 %v494
        %v830 = vpop.f32.mrf.mxu0
        %v831 = vadd.f32 %v529, %v830
        %v832 = vpop.f32.mrf.mxu0
        %v833 = vadd.f32 %v533, %v832
        %v834 = vpop.f32.mrf.mxu0
        %v835 = vadd.f32 %v529, %v834
        %v836 = vpop.f32.mrf.mxu0
        %v837 = vadd.f32 %v533, %v836
        %838 = vmatprep.mubr.bf16.mxu0 0
        %839 = vmatmul.mubr.bf16.gmra.mxu0 %v495
        %v840 = vpop.f32.mrf.mxu0
        %v841 = vadd.f32 %v529, %v840
        %v842 = vpop.f32.mrf.mxu0
        %v843 = vadd.f32 %v533, %v842
        %v844 = vpop.f32.mrf.mxu0
        %v845 = vadd.f32 %v529, %v844
        %v846 = vpop.f32.mrf.mxu0
        %v847 = vadd.f32 %v533, %v846
        %848 = vmatprep.mubr.bf16.mxu0 0
        %849 = vmatmul.mubr.bf16.gmra.mxu0 %v496
        %v850 = vpop.f32.mrf.mxu0
        %v851 = vadd.f32 %v529, %v850
        %v852 = vpop.f32.mrf.mxu0
        %v853 = vadd.f32 %v533, %v852
        %v854 = vpop.f32.mrf.mxu0
        %v855 = vadd.f32 %v529, %v854
        %v856 = vpop.f32.mrf.mxu0
        %v857 = vadd.f32 %v533, %v856
        %858 = vmatprep.mubr.bf16.mxu0 0
        %859 = vmatmul.mubr.bf16.gmra.mxu0 %v497
        %v860 = vpop.f32.mrf.mxu0
        %v861 = vadd.f32 %v529, %v860
        %v862 = vpop.f32.mrf.mxu0
        %v863 = vadd.f32 %v533, %v862
        %v864 = vpop.f32.mrf.mxu0
        %v865 = vadd.f32 %v529, %v864
        %v866 = vpop.f32.mrf.mxu0
        %v867 = vadd.f32 %v533, %v866
        %868 = vmatprep.mubr.bf16.mxu0 0
        %869 = vmatmul.mubr.bf16.gmra.mxu0 %v498
        %v870 = vpop.f32.mrf.mxu0
        %v871 = vadd.f32 %v529, %v870
        %v872 = vpop.f32.mrf.mxu0
        %v873 = vadd.f32 %v533, %v872
        %v874 = vpop.f32.mrf.mxu0
        %v875 = vadd.f32 %v529, %v874
        %v876 = vpop.f32.mrf.mxu0
        %v877 = vadd.f32 %v533, %v876
        %878 = vmatprep.mubr.bf16.mxu0 0
        %879 = vmatmul.mubr.bf16.gmra.mxu0 %v499
        %v880 = vpop.f32.mrf.mxu0
        %v881 = vadd.f32 %v529, %v880
        %v882 = vpop.f32.mrf.mxu0
        %v883 = vadd.f32 %v533, %v882
        %v884 = vpop.f32.mrf.mxu0
        %v885 = vadd.f32 %v529, %v884
        %v886 = vpop.f32.mrf.mxu0
        %v887 = vadd.f32 %v533, %v886
        %888 = vmatprep.mubr.bf16.mxu0 0
        %889 = vmatmul.mubr.bf16.gmra.mxu0 %v500
        %v890 = vpop.f32.mrf.mxu0
        %v891 = vadd.f32 %v529, %v890
        %v892 = vpop.f32.mrf.mxu0
        %v893 = vadd.f32 %v533, %v892
        %v894 = vpop.f32.mrf.mxu0
        %v895 = vadd.f32 %v529, %v894
        %v896 = vpop.f32.mrf.mxu0
        %v897 = vadd.f32 %v533, %v896
        %898 = vmatprep.mubr.bf16.mxu0 0
        %899 = vmatmul.mubr.bf16.gmra.mxu0 %v501
        %v900 = vpop.f32.mrf.mxu0
        %v901 = vadd.f32 %v529, %v900
        %v902 = vpop.f32.mrf.mxu0
        %v903 = vadd.f32 %v533, %v902
        %v904 = vpop.f32.mrf.mxu0
        %v905 = vadd.f32 %v529, %v904
        %v906 = vpop.f32.mrf.mxu0
        %v907 = vadd.f32 %v533, %v906
        %908 = vmatprep.mubr.bf16.mxu0 0
        %909 = vmatmul.mubr.bf16.gmra.mxu0 %v502
        %v910 = vpop.f32.mrf.mxu0
        %v911 = vadd.f32 %v529, %v910
        %v912 = vpop.f32.mrf.mxu0
        %v913 = vadd.f32 %v533, %v912
        %v914 = vpop.f32.mrf.mxu0
        %v915 = vadd.f32 %v529, %v914
        %v916 = vpop.f32.mrf.mxu0
        %v917 = vadd.f32 %v533, %v916
        %918 = vmatprep.mubr.bf16.mxu0 0
        %919 = vmatmul.mubr.bf16.gmra.mxu0 %v503
        %v920 = vpop.f32.mrf.mxu0
        %v921 = vadd.f32 %v529, %v920
        %v922 = vpop.f32.mrf.mxu0
        %v923 = vadd.f32 %v533, %v922
        %v924 = vpop.f32.mrf.mxu0
        %v925 = vadd.f32 %v529, %v924
        %v926 = vpop.f32.mrf.mxu0
        %v927 = vadd.f32 %v533, %v926
        %928 = vmatprep.mubr.bf16.mxu0 0
        %929 = vmatmul.mubr.bf16.gmra.mxu0 %v504
        %v930 = vpop.f32.mrf.mxu0
        %v931 = vadd.f32 %v529, %v930
        %v932 = vpop.f32.mrf.mxu0
        %v933 = vadd.f32 %v533, %v932
        %v934 = vpop.f32.mrf.mxu0
        %v935 = vadd.f32 %v529, %v934
        %v936 = vpop.f32.mrf.mxu0
        %v937 = vadd.f32 %v533, %v936
        %938 = vmatprep.mubr.bf16.mxu0 0
        %939 = vmatmul.mubr.bf16.gmra.mxu0 %v505
        %v940 = vpop.f32.mrf.mxu0
        %v941 = vadd.f32 %v529, %v940
        %v942 = vpop.f32.mrf.mxu0
        %v943 = vadd.f32 %v533, %v942
        %v944 = vpop.f32.mrf.mxu0
        %v945 = vadd.f32 %v529, %v944
        %v946 = vpop.f32.mrf.mxu0
        %v947 = vadd.f32 %v533, %v946
        %948 = vmatprep.mubr.bf16.mxu0 0
        %949 = vmatmul.mubr.bf16.gmra.mxu0 %v506
        %v950 = vpop.f32.mrf.mxu0
        %v951 = vadd.f32 %v529, %v950
        %v952 = vpop.f32.mrf.mxu0
        %v953 = vadd.f32 %v533, %v952
        %v954 = vpop.f32.mrf.mxu0
        %v955 = vadd.f32 %v529, %v954
        %v956 = vpop.f32.mrf.mxu0
        %v957 = vadd.f32 %v533, %v956
        %958 = vmatprep.mubr.bf16.mxu0 0
        %959 = vmatmul.mubr.bf16.gmra.mxu0 %v507
        %v960 = vpop.f32.mrf.mxu0
        %v961 = vadd.f32 %v529, %v960
        %v962 = vpop.f32.mrf.mxu0
        %v963 = vadd.f32 %v533, %v962
        %v964 = vpop.f32.mrf.mxu0
        %v965 = vadd.f32 %v529, %v964
        %v966 = vpop.f32.mrf.mxu0
        %v967 = vadd.f32 %v533, %v966
        %968 = vdwg.mxu0
        %vm969 = vcmp.gt.f32.partialorder %v651, 0.0
        %vm970 = vcmp.gt.f32.partialorder %v653, 0.0
        %vm971 = vcmp.gt.f32.partialorder %v655, 0.0
        %vm972 = vcmp.gt.f32.partialorder %v657, 0.0
        %vm973 = vcmp.gt.f32.partialorder %v661, 0.0
        %vm974 = vcmp.gt.f32.partialorder %v663, 0.0
        %vm975 = vcmp.gt.f32.partialorder %v665, 0.0
        %vm976 = vcmp.gt.f32.partialorder %v667, 0.0
        %vm977 = vcmp.gt.f32.partialorder %v671, 0.0
        %vm978 = vcmp.gt.f32.partialorder %v673, 0.0
        %vm979 = vcmp.gt.f32.partialorder %v675, 0.0
        %vm980 = vcmp.gt.f32.partialorder %v677, 0.0
        %vm981 = vcmp.gt.f32.partialorder %v681, 0.0
        %vm982 = vcmp.gt.f32.partialorder %v683, 0.0
        %vm983 = vcmp.gt.f32.partialorder %v685, 0.0
        %vm984 = vcmp.gt.f32.partialorder %v687, 0.0
        %vm985 = vcmp.gt.f32.partialorder %v691, 0.0
        %vm986 = vcmp.gt.f32.partialorder %v693, 0.0
        %vm987 = vcmp.gt.f32.partialorder %v695, 0.0
        %vm988 = vcmp.gt.f32.partialorder %v697, 0.0
        %vm989 = vcmp.gt.f32.partialorder %v701, 0.0
        %vm990 = vcmp.gt.f32.partialorder %v703, 0.0
        %vm991 = vcmp.gt.f32.partialorder %v705, 0.0
        %vm992 = vcmp.gt.f32.partialorder %v707, 0.0
        %vm993 = vcmp.gt.f32.partialorder %v711, 0.0
        %vm994 = vcmp.gt.f32.partialorder %v713, 0.0
        %vm995 = vcmp.gt.f32.partialorder %v715, 0.0
        %vm996 = vcmp.gt.f32.partialorder %v717, 0.0
        %vm997 = vcmp.gt.f32.partialorder %v721, 0.0
        %vm998 = vcmp.gt.f32.partialorder %v723, 0.0
        %vm999 = vcmp.gt.f32.partialorder %v725, 0.0
        %vm1000 = vcmp.gt.f32.partialorder %v727, 0.0
        %vm1001 = vcmp.gt.f32.partialorder %v731, 0.0
        %vm1002 = vcmp.gt.f32.partialorder %v733, 0.0
        %vm1003 = vcmp.gt.f32.partialorder %v735, 0.0
        %vm1004 = vcmp.gt.f32.partialorder %v737, 0.0
        %vm1005 = vcmp.gt.f32.partialorder %v741, 0.0
        %vm1006 = vcmp.gt.f32.partialorder %v743, 0.0
        %vm1007 = vcmp.gt.f32.partialorder %v745, 0.0
        %vm1008 = vcmp.gt.f32.partialorder %v747, 0.0
        %vm1009 = vcmp.gt.f32.partialorder %v751, 0.0
        %vm1010 = vcmp.gt.f32.partialorder %v753, 0.0
        %vm1011 = vcmp.gt.f32.partialorder %v755, 0.0
        %vm1012 = vcmp.gt.f32.partialorder %v757, 0.0
        %vm1013 = vcmp.gt.f32.partialorder %v761, 0.0
        %vm1014 = vcmp.gt.f32.partialorder %v763, 0.0
        %vm1015 = vcmp.gt.f32.partialorder %v765, 0.0
        %vm1016 = vcmp.gt.f32.partialorder %v767, 0.0
        %vm1017 = vcmp.gt.f32.partialorder %v771, 0.0
        %vm1018 = vcmp.gt.f32.partialorder %v773, 0.0
        %vm1019 = vcmp.gt.f32.partialorder %v775, 0.0
        %vm1020 = vcmp.gt.f32.partialorder %v777, 0.0
        %vm1021 = vcmp.gt.f32.partialorder %v781, 0.0
        %vm1022 = vcmp.gt.f32.partialorder %v783, 0.0
        %vm1023 = vcmp.gt.f32.partialorder %v785, 0.0
        %vm1024 = vcmp.gt.f32.partialorder %v787, 0.0
        %vm1025 = vcmp.gt.f32.partialorder %v791, 0.0
        %vm1026 = vcmp.gt.f32.partialorder %v793, 0.0
        %vm1027 = vcmp.gt.f32.partialorder %v795, 0.0
        %vm1028 = vcmp.gt.f32.partialorder %v797, 0.0
        %vm1029 = vcmp.gt.f32.partialorder %v801, 0.0
        %vm1030 = vcmp.gt.f32.partialorder %v803, 0.0
        %vm1031 = vcmp.gt.f32.partialorder %v805, 0.0
        %vm1032 = vcmp.gt.f32.partialorder %v807, 0.0
        %vm1033 = vcmp.gt.f32.partialorder %v811, 0.0
        %vm1034 = vcmp.gt.f32.partialorder %v813, 0.0
        %vm1035 = vcmp.gt.f32.partialorder %v815, 0.0
        %vm1036 = vcmp.gt.f32.partialorder %v817, 0.0
        %vm1037 = vcmp.gt.f32.partialorder %v821, 0.0
        %vm1038 = vcmp.gt.f32.partialorder %v823, 0.0
        %vm1039 = vcmp.gt.f32.partialorder %v825, 0.0
        %vm1040 = vcmp.gt.f32.partialorder %v827, 0.0
        %vm1041 = vcmp.gt.f32.partialorder %v831, 0.0
        %vm1042 = vcmp.gt.f32.partialorder %v833, 0.0
        %vm1043 = vcmp.gt.f32.partialorder %v835, 0.0
        %vm1044 = vcmp.gt.f32.partialorder %v837, 0.0
        %vm1045 = vcmp.gt.f32.partialorder %v841, 0.0
        %vm1046 = vcmp.gt.f32.partialorder %v843, 0.0
        %vm1047 = vcmp.gt.f32.partialorder %v845, 0.0
        %vm1048 = vcmp.gt.f32.partialorder %v847, 0.0
        %vm1049 = vcmp.gt.f32.partialorder %v851, 0.0
        %vm1050 = vcmp.gt.f32.partialorder %v853, 0.0
        %vm1051 = vcmp.gt.f32.partialorder %v855, 0.0
        %vm1052 = vcmp.gt.f32.partialorder %v857, 0.0
        %vm1053 = vcmp.gt.f32.partialorder %v861, 0.0
        %vm1054 = vcmp.gt.f32.partialorder %v863, 0.0
        %vm1055 = vcmp.gt.f32.partialorder %v865, 0.0
        %vm1056 = vcmp.gt.f32.partialorder %v867, 0.0
        %vm1057 = vcmp.gt.f32.partialorder %v871, 0.0
        %vm1058 = vcmp.gt.f32.partialorder %v873, 0.0
        %vm1059 = vcmp.gt.f32.partialorder %v875, 0.0
        %vm1060 = vcmp.gt.f32.partialorder %v877, 0.0
        %vm1061 = vcmp.gt.f32.partialorder %v881, 0.0
        %vm1062 = vcmp.gt.f32.partialorder %v883, 0.0
        %vm1063 = vcmp.gt.f32.partialorder %v885, 0.0
        %vm1064 = vcmp.gt.f32.partialorder %v887, 0.0
        %vm1065 = vcmp.gt.f32.partialorder %v891, 0.0
        %vm1066 = vcmp.gt.f32.partialorder %v893, 0.0
        %vm1067 = vcmp.gt.f32.partialorder %v895, 0.0
        %vm1068 = vcmp.gt.f32.partialorder %v897, 0.0
        %vm1069 = vcmp.gt.f32.partialorder %v901, 0.0
        %vm1070 = vcmp.gt.f32.partialorder %v903, 0.0
        %vm1071 = vcmp.gt.f32.partialorder %v905, 0.0
        %vm1072 = vcmp.gt.f32.partialorder %v907, 0.0
        %vm1073 = vcmp.gt.f32.partialorder %v911, 0.0
        %vm1074 = vcmp.gt.f32.partialorder %v913, 0.0
        %vm1075 = vcmp.gt.f32.partialorder %v915, 0.0
        %vm1076 = vcmp.gt.f32.partialorder %v917, 0.0
        %vm1077 = vcmp.gt.f32.partialorder %v921, 0.0
        %vm1078 = vcmp.gt.f32.partialorder %v923, 0.0
        %vm1079 = vcmp.gt.f32.partialorder %v925, 0.0
        %vm1080 = vcmp.gt.f32.partialorder %v927, 0.0
        %vm1081 = vcmp.gt.f32.partialorder %v931, 0.0
        %vm1082 = vcmp.gt.f32.partialorder %v933, 0.0
        %vm1083 = vcmp.gt.f32.partialorder %v935, 0.0
        %vm1084 = vcmp.gt.f32.partialorder %v937, 0.0
        %vm1085 = vcmp.gt.f32.partialorder %v941, 0.0
        %vm1086 = vcmp.gt.f32.partialorder %v943, 0.0
        %vm1087 = vcmp.gt.f32.partialorder %v945, 0.0
        %vm1088 = vcmp.gt.f32.partialorder %v947, 0.0
        %vm1089 = vcmp.gt.f32.partialorder %v951, 0.0
        %vm1090 = vcmp.gt.f32.partialorder %v953, 0.0
        %vm1091 = vcmp.gt.f32.partialorder %v955, 0.0
        %vm1092 = vcmp.gt.f32.partialorder %v957, 0.0
        %vm1093 = vcmp.gt.f32.partialorder %v961, 0.0
        %vm1094 = vcmp.gt.f32.partialorder %v963, 0.0
        %vm1095 = vcmp.gt.f32.partialorder %v965, 0.0
        %vm1096 = vcmp.gt.f32.partialorder %v967, 0.0
        %v1097 = vmul.f32 %v651, 0.01
        %v1098 = vmul.f32 %v653, 0.01
        %v1099 = vmul.f32 %v655, 0.01
        %v1100 = vmul.f32 %v657, 0.01
        %v1101 = vmul.f32 %v661, 0.01
        %v1102 = vmul.f32 %v663, 0.01
        %v1103 = vmul.f32 %v665, 0.01
        %v1104 = vmul.f32 %v667, 0.01
        %v1105 = vmul.f32 %v671, 0.01
        %v1106 = vmul.f32 %v673, 0.01
        %v1107 = vmul.f32 %v675, 0.01
        %v1108 = vmul.f32 %v677, 0.01
        %v1109 = vmul.f32 %v681, 0.01
        %v1110 = vmul.f32 %v683, 0.01
        %v1111 = vmul.f32 %v685, 0.01
        %v1112 = vmul.f32 %v687, 0.01
        %v1113 = vmul.f32 %v691, 0.01
        %v1114 = vmul.f32 %v693, 0.01
        %v1115 = vmul.f32 %v695, 0.01
        %v1116 = vmul.f32 %v697, 0.01
        %v1117 = vmul.f32 %v701, 0.01
        %v1118 = vmul.f32 %v703, 0.01
        %v1119 = vmul.f32 %v705, 0.01
        %v1120 = vmul.f32 %v707, 0.01
        %v1121 = vmul.f32 %v711, 0.01
        %v1122 = vmul.f32 %v713, 0.01
        %v1123 = vmul.f32 %v715, 0.01
        %v1124 = vmul.f32 %v717, 0.01
        %v1125 = vmul.f32 %v721, 0.01
        %v1126 = vmul.f32 %v723, 0.01
        %v1127 = vmul.f32 %v725, 0.01
        %v1128 = vmul.f32 %v727, 0.01
        %v1129 = vmul.f32 %v731, 0.01
        %v1130 = vmul.f32 %v733, 0.01
        %v1131 = vmul.f32 %v735, 0.01
        %v1132 = vmul.f32 %v737, 0.01
        %v1133 = vmul.f32 %v741, 0.01
        %v1134 = vmul.f32 %v743, 0.01
        %v1135 = vmul.f32 %v745, 0.01
        %v1136 = vmul.f32 %v747, 0.01
        %v1137 = vmul.f32 %v751, 0.01
        %v1138 = vmul.f32 %v753, 0.01
        %v1139 = vmul.f32 %v755, 0.01
        %v1140 = vmul.f32 %v757, 0.01
        %v1141 = vmul.f32 %v761, 0.01
        %v1142 = vmul.f32 %v763, 0.01
        %v1143 = vmul.f32 %v765, 0.01
        %v1144 = vmul.f32 %v767, 0.01
        %v1145 = vmul.f32 %v771, 0.01
        %v1146 = vmul.f32 %v773, 0.01
        %v1147 = vmul.f32 %v775, 0.01
        %v1148 = vmul.f32 %v777, 0.01
        %v1149 = vmul.f32 %v781, 0.01
        %v1150 = vmul.f32 %v783, 0.01
        %v1151 = vmul.f32 %v785, 0.01
        %v1152 = vmul.f32 %v787, 0.01
        %v1153 = vmul.f32 %v791, 0.01
        %v1154 = vmul.f32 %v793, 0.01
        %v1155 = vmul.f32 %v795, 0.01
        %v1156 = vmul.f32 %v797, 0.01
        %v1157 = vmul.f32 %v801, 0.01
        %v1158 = vmul.f32 %v803, 0.01
        %v1159 = vmul.f32 %v805, 0.01
        %v1160 = vmul.f32 %v807, 0.01
        %v1161 = vmul.f32 %v811, 0.01
        %v1162 = vmul.f32 %v813, 0.01
        %v1163 = vmul.f32 %v815, 0.01
        %v1164 = vmul.f32 %v817, 0.01
        %v1165 = vmul.f32 %v821, 0.01
        %v1166 = vmul.f32 %v823, 0.01
        %v1167 = vmul.f32 %v825, 0.01
        %v1168 = vmul.f32 %v827, 0.01
        %v1169 = vmul.f32 %v831, 0.01
        %v1170 = vmul.f32 %v833, 0.01
        %v1171 = vmul.f32 %v835, 0.01
        %v1172 = vmul.f32 %v837, 0.01
        %v1173 = vmul.f32 %v841, 0.01
        %v1174 = vmul.f32 %v843, 0.01
        %v1175 = vmul.f32 %v845, 0.01
        %v1176 = vmul.f32 %v847, 0.01
        %v1177 = vmul.f32 %v851, 0.01
        %v1178 = vmul.f32 %v853, 0.01
        %v1179 = vmul.f32 %v855, 0.01
        %v1180 = vmul.f32 %v857, 0.01
        %v1181 = vmul.f32 %v861, 0.01
        %v1182 = vmul.f32 %v863, 0.01
        %v1183 = vmul.f32 %v865, 0.01
        %v1184 = vmul.f32 %v867, 0.01
        %v1185 = vmul.f32 %v871, 0.01
        %v1186 = vmul.f32 %v873, 0.01
        %v1187 = vmul.f32 %v875, 0.01
        %v1188 = vmul.f32 %v877, 0.01
        %v1189 = vmul.f32 %v881, 0.01
        %v1190 = vmul.f32 %v883, 0.01
        %v1191 = vmul.f32 %v885, 0.01
        %v1192 = vmul.f32 %v887, 0.01
        %v1193 = vmul.f32 %v891, 0.01
        %v1194 = vmul.f32 %v893, 0.01
        %v1195 = vmul.f32 %v895, 0.01
        %v1196 = vmul.f32 %v897, 0.01
        %v1197 = vmul.f32 %v901, 0.01
        %v1198 = vmul.f32 %v903, 0.01
        %v1199 = vmul.f32 %v905, 0.01
        %v1200 = vmul.f32 %v907, 0.01
        %v1201 = vmul.f32 %v911, 0.01
        %v1202 = vmul.f32 %v913, 0.01
        %v1203 = vmul.f32 %v915, 0.01
        %v1204 = vmul.f32 %v917, 0.01
        %v1205 = vmul.f32 %v921, 0.01
        %v1206 = vmul.f32 %v923, 0.01
        %v1207 = vmul.f32 %v925, 0.01
        %v1208 = vmul.f32 %v927, 0.01
        %v1209 = vmul.f32 %v931, 0.01
        %v1210 = vmul.f32 %v933, 0.01
        %v1211 = vmul.f32 %v935, 0.01
        %v1212 = vmul.f32 %v937, 0.01
        %v1213 = vmul.f32 %v941, 0.01
        %v1214 = vmul.f32 %v943, 0.01
        %v1215 = vmul.f32 %v945, 0.01
        %v1216 = vmul.f32 %v947, 0.01
        %v1217 = vmul.f32 %v951, 0.01
        %v1218 = vmul.f32 %v953, 0.01
        %v1219 = vmul.f32 %v955, 0.01
        %v1220 = vmul.f32 %v957, 0.01
        %v1221 = vmul.f32 %v961, 0.01
        %v1222 = vmul.f32 %v963, 0.01
        %v1223 = vmul.f32 %v965, 0.01
        %v1224 = vmul.f32 %v967, 0.01
        %v1225 = vsel %vm969, %v651, %v1097
        %v1226 = vsel %vm970, %v653, %v1098
        %v1227 = vsel %vm971, %v655, %v1099
        %v1228 = vsel %vm972, %v657, %v1100
        %v1229 = vsel %vm973, %v661, %v1101
        %v1230 = vsel %vm974, %v663, %v1102
        %v1231 = vsel %vm975, %v665, %v1103
        %v1232 = vsel %vm976, %v667, %v1104
        %v1233 = vsel %vm977, %v671, %v1105
        %v1234 = vsel %vm978, %v673, %v1106
        %v1235 = vsel %vm979, %v675, %v1107
        %v1236 = vsel %vm980, %v677, %v1108
        %v1237 = vsel %vm981, %v681, %v1109
        %v1238 = vsel %vm982, %v683, %v1110
        %v1239 = vsel %vm983, %v685, %v1111
        %v1240 = vsel %vm984, %v687, %v1112
        %v1241 = vsel %vm985, %v691, %v1113
        %v1242 = vsel %vm986, %v693, %v1114
        %v1243 = vsel %vm987, %v695, %v1115
        %v1244 = vsel %vm988, %v697, %v1116
        %v1245 = vsel %vm989, %v701, %v1117
        %v1246 = vsel %vm990, %v703, %v1118
        %v1247 = vsel %vm991, %v705, %v1119
        %v1248 = vsel %vm992, %v707, %v1120
        %v1249 = vsel %vm993, %v711, %v1121
        %v1250 = vsel %vm994, %v713, %v1122
        %v1251 = vsel %vm995, %v715, %v1123
        %v1252 = vsel %vm996, %v717, %v1124
        %v1253 = vsel %vm997, %v721, %v1125
        %v1254 = vsel %vm998, %v723, %v1126
        %v1255 = vsel %vm999, %v725, %v1127
        %v1256 = vsel %vm1000, %v727, %v1128
        %v1257 = vsel %vm1001, %v731, %v1129
        %v1258 = vsel %vm1002, %v733, %v1130
        %v1259 = vsel %vm1003, %v735, %v1131
        %v1260 = vsel %vm1004, %v737, %v1132
        %v1261 = vsel %vm1005, %v741, %v1133
        %v1262 = vsel %vm1006, %v743, %v1134
        %v1263 = vsel %vm1007, %v745, %v1135
        %v1264 = vsel %vm1008, %v747, %v1136
        %v1265 = vsel %vm1009, %v751, %v1137
        %v1266 = vsel %vm1010, %v753, %v1138
        %v1267 = vsel %vm1011, %v755, %v1139
        %v1268 = vsel %vm1012, %v757, %v1140
        %v1269 = vsel %vm1013, %v761, %v1141
        %v1270 = vsel %vm1014, %v763, %v1142
        %v1271 = vsel %vm1015, %v765, %v1143
        %v1272 = vsel %vm1016, %v767, %v1144
        %v1273 = vsel %vm1017, %v771, %v1145
        %v1274 = vsel %vm1018, %v773, %v1146
        %v1275 = vsel %vm1019, %v775, %v1147
        %v1276 = vsel %vm1020, %v777, %v1148
        %v1277 = vsel %vm1021, %v781, %v1149
        %v1278 = vsel %vm1022, %v783, %v1150
        %v1279 = vsel %vm1023, %v785, %v1151
        %v1280 = vsel %vm1024, %v787, %v1152
        %v1281 = vsel %vm1025, %v791, %v1153
        %v1282 = vsel %vm1026, %v793, %v1154
        %v1283 = vsel %vm1027, %v795, %v1155
        %v1284 = vsel %vm1028, %v797, %v1156
        %v1285 = vsel %vm1029, %v801, %v1157
        %v1286 = vsel %vm1030, %v803, %v1158
        %v1287 = vsel %vm1031, %v805, %v1159
        %v1288 = vsel %vm1032, %v807, %v1160
        %v1289 = vsel %vm1033, %v811, %v1161
        %v1290 = vsel %vm1034, %v813, %v1162
        %v1291 = vsel %vm1035, %v815, %v1163
        %v1292 = vsel %vm1036, %v817, %v1164
        %v1293 = vsel %vm1037, %v821, %v1165
        %v1294 = vsel %vm1038, %v823, %v1166
        %v1295 = vsel %vm1039, %v825, %v1167
        %v1296 = vsel %vm1040, %v827, %v1168
        %v1297 = vsel %vm1041, %v831, %v1169
        %v1298 = vsel %vm1042, %v833, %v1170
        %v1299 = vsel %vm1043, %v835, %v1171
        %v1300 = vsel %vm1044, %v837, %v1172
        %v1301 = vsel %vm1045, %v841, %v1173
        %v1302 = vsel %vm1046, %v843, %v1174
        %v1303 = vsel %vm1047, %v845, %v1175
        %v1304 = vsel %vm1048, %v847, %v1176
        %v1305 = vsel %vm1049, %v851, %v1177
        %v1306 = vsel %vm1050, %v853, %v1178
        %v1307 = vsel %vm1051, %v855, %v1179
        %v1308 = vsel %vm1052, %v857, %v1180
        %v1309 = vsel %vm1053, %v861, %v1181
        %v1310 = vsel %vm1054, %v863, %v1182
        %v1311 = vsel %vm1055, %v865, %v1183
        %v1312 = vsel %vm1056, %v867, %v1184
        %v1313 = vsel %vm1057, %v871, %v1185
        %v1314 = vsel %vm1058, %v873, %v1186
        %v1315 = vsel %vm1059, %v875, %v1187
        %v1316 = vsel %vm1060, %v877, %v1188
        %v1317 = vsel %vm1061, %v881, %v1189
        %v1318 = vsel %vm1062, %v883, %v1190
        %v1319 = vsel %vm1063, %v885, %v1191
        %v1320 = vsel %vm1064, %v887, %v1192
        %v1321 = vsel %vm1065, %v891, %v1193
        %v1322 = vsel %vm1066, %v893, %v1194
        %v1323 = vsel %vm1067, %v895, %v1195
        %v1324 = vsel %vm1068, %v897, %v1196
        %v1325 = vsel %vm1069, %v901, %v1197
        %v1326 = vsel %vm1070, %v903, %v1198
        %v1327 = vsel %vm1071, %v905, %v1199
        %v1328 = vsel %vm1072, %v907, %v1200
        %v1329 = vsel %vm1073, %v911, %v1201
        %v1330 = vsel %vm1074, %v913, %v1202
        %v1331 = vsel %vm1075, %v915, %v1203
        %v1332 = vsel %vm1076, %v917, %v1204
        %v1333 = vsel %vm1077, %v921, %v1205
        %v1334 = vsel %vm1078, %v923, %v1206
        %v1335 = vsel %vm1079, %v925, %v1207
        %v1336 = vsel %vm1080, %v927, %v1208
        %v1337 = vsel %vm1081, %v931, %v1209
        %v1338 = vsel %vm1082, %v933, %v1210
        %v1339 = vsel %vm1083, %v935, %v1211
        %v1340 = vsel %vm1084, %v937, %v1212
        %v1341 = vsel %vm1085, %v941, %v1213
        %v1342 = vsel %vm1086, %v943, %v1214
        %v1343 = vsel %vm1087, %v945, %v1215
        %v1344 = vsel %vm1088, %v947, %v1216
        %v1345 = vsel %vm1089, %v951, %v1217
        %v1346 = vsel %vm1090, %v953, %v1218
        %v1347 = vsel %vm1091, %v955, %v1219
        %v1348 = vsel %vm1092, %v957, %v1220
        %v1349 = vsel %vm1093, %v961, %v1221
        %v1350 = vsel %vm1094, %v963, %v1222
        %v1351 = vsel %vm1095, %v965, %v1223
        %v1352 = vsel %vm1096, %v967, %v1224
        %v1353 = vpack.c.bf16 %v1227, %v1225
        %v1354 = vpack.c.bf16 %v1228, %v1226
        %v1355 = vpack.c.bf16 %v1231, %v1229
        %v1356 = vpack.c.bf16 %v1232, %v1230
        %v1357 = vpack.c.bf16 %v1235, %v1233
        %v1358 = vpack.c.bf16 %v1236, %v1234
        %v1359 = vpack.c.bf16 %v1239, %v1237
        %v1360 = vpack.c.bf16 %v1240, %v1238
        %v1361 = vpack.c.bf16 %v1243, %v1241
        %v1362 = vpack.c.bf16 %v1244, %v1242
        %v1363 = vpack.c.bf16 %v1247, %v1245
        %v1364 = vpack.c.bf16 %v1248, %v1246
        %v1365 = vpack.c.bf16 %v1251, %v1249
        %v1366 = vpack.c.bf16 %v1252, %v1250
        %v1367 = vpack.c.bf16 %v1255, %v1253
        %v1368 = vpack.c.bf16 %v1256, %v1254
        %v1369 = vpack.c.bf16 %v1259, %v1257
        %v1370 = vpack.c.bf16 %v1260, %v1258
        %v1371 = vpack.c.bf16 %v1263, %v1261
        %v1372 = vpack.c.bf16 %v1264, %v1262
        %v1373 = vpack.c.bf16 %v1267, %v1265
        %v1374 = vpack.c.bf16 %v1268, %v1266
        %v1375 = vpack.c.bf16 %v1271, %v1269
        %v1376 = vpack.c.bf16 %v1272, %v1270
        %v1377 = vpack.c.bf16 %v1275, %v1273
        %v1378 = vpack.c.bf16 %v1276, %v1274
        %v1379 = vpack.c.bf16 %v1279, %v1277
        %v1380 = vpack.c.bf16 %v1280, %v1278
        %v1381 = vpack.c.bf16 %v1283, %v1281
        %v1382 = vpack.c.bf16 %v1284, %v1282
        %v1383 = vpack.c.bf16 %v1287, %v1285
        %v1384 = vpack.c.bf16 %v1288, %v1286
        %v1385 = vpack.c.bf16 %v1291, %v1289
        %v1386 = vpack.c.bf16 %v1292, %v1290
        %v1387 = vpack.c.bf16 %v1295, %v1293
        %v1388 = vpack.c.bf16 %v1296, %v1294
        %v1389 = vpack.c.bf16 %v1299, %v1297
        %v1390 = vpack.c.bf16 %v1300, %v1298
        %v1391 = vpack.c.bf16 %v1303, %v1301
        %v1392 = vpack.c.bf16 %v1304, %v1302
        %v1393 = vpack.c.bf16 %v1307, %v1305
        %v1394 = vpack.c.bf16 %v1308, %v1306
        %v1395 = vpack.c.bf16 %v1311, %v1309
        %v1396 = vpack.c.bf16 %v1312, %v1310
        %v1397 = vpack.c.bf16 %v1315, %v1313
        %v1398 = vpack.c.bf16 %v1316, %v1314
        %v1399 = vpack.c.bf16 %v1319, %v1317
        %v1400 = vpack.c.bf16 %v1320, %v1318
        %v1401 = vpack.c.bf16 %v1323, %v1321
        %v1402 = vpack.c.bf16 %v1324, %v1322
        %v1403 = vpack.c.bf16 %v1327, %v1325
        %v1404 = vpack.c.bf16 %v1328, %v1326
        %v1405 = vpack.c.bf16 %v1331, %v1329
        %v1406 = vpack.c.bf16 %v1332, %v1330
        %v1407 = vpack.c.bf16 %v1335, %v1333
        %v1408 = vpack.c.bf16 %v1336, %v1334
        %v1409 = vpack.c.bf16 %v1339, %v1337
        %v1410 = vpack.c.bf16 %v1340, %v1338
        %v1411 = vpack.c.bf16 %v1343, %v1341
        %v1412 = vpack.c.bf16 %v1344, %v1342
        %v1413 = vpack.c.bf16 %v1347, %v1345
        %v1414 = vpack.c.bf16 %v1348, %v1346
        %v1415 = vpack.c.bf16 %v1351, %v1349
        %v1416 = vpack.c.bf16 %v1352, %v1350
        %v1417 = vld [vmem:[#allocation7] sm:$0xf]
        %v1418 = vld [vmem:[#allocation7 + $0x4] sm:$0xf]
        %v1419 = vld [vmem:[#allocation7 + $0x8] sm:$0xf]
        %v1420 = vld [vmem:[#allocation7 + $0xc] sm:$0xf]
        %v1421 = vld [vmem:[#allocation7 + $0x10] sm:$0xf]
        %v1422 = vld [vmem:[#allocation7 + $0x14] sm:$0xf]
        %v1423 = vld [vmem:[#allocation7 + $0x18] sm:$0xf]
        %v1424 = vld [vmem:[#allocation7 + $0x1c] sm:$0xf]
        %v1425 = vld [vmem:[#allocation7 + $0x20] sm:$0xf]
        %v1426 = vld [vmem:[#allocation7 + $0x24] sm:$0xf]
        %v1427 = vld [vmem:[#allocation7 + $0x28] sm:$0xf]
        %v1428 = vld [vmem:[#allocation7 + $0x2c] sm:$0xf]
        %v1429 = vld [vmem:[#allocation7 + $0x30] sm:$0xf]
        %v1430 = vld [vmem:[#allocation7 + $0x34] sm:$0xf]
        %v1431 = vld [vmem:[#allocation7 + $0x38] sm:$0xf]
        %v1432 = vld [vmem:[#allocation7 + $0x3c] sm:$0xf]
        %v1433 = vld [vmem:[#allocation7 + $0x40] sm:$0xf]
        %v1434 = vld [vmem:[#allocation7 + $0x44] sm:$0xf]
        %v1435 = vld [vmem:[#allocation7 + $0x48] sm:$0xf]
        %v1436 = vld [vmem:[#allocation7 + $0x4c] sm:$0xf]
        %v1437 = vld [vmem:[#allocation7 + $0x50] sm:$0xf]
        %v1438 = vld [vmem:[#allocation7 + $0x54] sm:$0xf]
        %v1439 = vld [vmem:[#allocation7 + $0x58] sm:$0xf]
        %v1440 = vld [vmem:[#allocation7 + $0x5c] sm:$0xf]
        %v1441 = vld [vmem:[#allocation7 + $0x60] sm:$0xf]
        %v1442 = vld [vmem:[#allocation7 + $0x64] sm:$0xf]
        %v1443 = vld [vmem:[#allocation7 + $0x68] sm:$0xf]
        %v1444 = vld [vmem:[#allocation7 + $0x6c] sm:$0xf]
        %v1445 = vld [vmem:[#allocation7 + $0x70] sm:$0xf]
        %v1446 = vld [vmem:[#allocation7 + $0x74] sm:$0xf]
        %v1447 = vld [vmem:[#allocation7 + $0x78] sm:$0xf]
        %v1448 = vld [vmem:[#allocation7 + $0x7c] sm:$0xf]
        %v1449 = vld [vmem:[%s4] sm:$0x1]
        %v1451 = vlaneseq
        %v1452 = vshrl.u32 %v1451, 7
        %v1453 = vsub.s32 0, %v1452
        %v1454 = vrot.slane %v1449, %v1453
        %v1488 = vunpack.c.l.b16 %v1417
        %v1489 = vunpack.c.l.b16 %v1418
        %v1490 = vunpack.c.l.b16 %v1419
        %v1491 = vunpack.c.l.b16 %v1420
        %v1492 = vunpack.c.l.b16 %v1421
        %v1493 = vunpack.c.l.b16 %v1422
        %v1494 = vunpack.c.l.b16 %v1423
        %v1495 = vunpack.c.l.b16 %v1424
        %v1496 = vunpack.c.l.b16 %v1425
        %v1497 = vunpack.c.l.b16 %v1426
        %v1498 = vunpack.c.l.b16 %v1427
        %v1499 = vunpack.c.l.b16 %v1428
        %v1500 = vunpack.c.l.b16 %v1429
        %v1501 = vunpack.c.l.b16 %v1430
        %v1502 = vunpack.c.l.b16 %v1431
        %v1503 = vunpack.c.l.b16 %v1432
        %v1504 = vunpack.c.l.b16 %v1433
        %v1505 = vunpack.c.l.b16 %v1434
        %v1506 = vunpack.c.l.b16 %v1435
        %v1507 = vunpack.c.l.b16 %v1436
        %v1508 = vunpack.c.l.b16 %v1437
        %v1509 = vunpack.c.l.b16 %v1438
        %v1510 = vunpack.c.l.b16 %v1439
        %v1511 = vunpack.c.l.b16 %v1440
        %v1512 = vunpack.c.l.b16 %v1441
        %v1513 = vunpack.c.l.b16 %v1442
        %v1514 = vunpack.c.l.b16 %v1443
        %v1515 = vunpack.c.l.b16 %v1444
        %v1516 = vunpack.c.l.b16 %v1445
        %v1517 = vunpack.c.l.b16 %v1446
        %v1518 = vunpack.c.l.b16 %v1447
        %v1519 = vunpack.c.l.b16 %v1448
        %v1520 = vpack.c.b16 %v1489, %v1488
        %v1521 = vpack.c.b16 %v1491, %v1490
        %v1522 = vpack.c.b16 %v1493, %v1492
        %v1523 = vpack.c.b16 %v1495, %v1494
        %v1524 = vpack.c.b16 %v1497, %v1496
        %v1525 = vpack.c.b16 %v1499, %v1498
        %v1526 = vpack.c.b16 %v1501, %v1500
        %v1527 = vpack.c.b16 %v1503, %v1502
        %v1528 = vpack.c.b16 %v1505, %v1504
        %v1529 = vpack.c.b16 %v1507, %v1506
        %v1530 = vpack.c.b16 %v1509, %v1508
        %v1531 = vpack.c.b16 %v1511, %v1510
        %v1532 = vpack.c.b16 %v1513, %v1512
        %v1533 = vpack.c.b16 %v1515, %v1514
        %v1534 = vpack.c.b16 %v1517, %v1516
        %v1535 = vpack.c.b16 %v1519, %v1518
        %1552 = vmatprep.subr.bf16.mxu0 0
        %1553 = vmatpush1.bf16.msra.mxu0 %v1527
        %1554 = vmatprep.subr.bf16.mxu0 0
        %1555 = vmatpush1.bf16.msra.mxu0 %v1526
        %1556 = vmatprep.subr.bf16.mxu0 0
        %1557 = vmatpush1.bf16.msra.mxu0 %v1525
        %1558 = vmatprep.subr.bf16.mxu0 0
        %1559 = vmatpush1.bf16.msra.mxu0 %v1524
        %1560 = vmatprep.subr.bf16.mxu0 0
        %1561 = vmatpush1.bf16.msra.mxu0 %v1523
        %1562 = vmatprep.subr.bf16.mxu0 0
        %1563 = vmatpush1.bf16.msra.mxu0 %v1522
        %1564 = vmatprep.subr.bf16.mxu0 0
        %1565 = vmatpush1.bf16.msra.mxu0 %v1521
        %1566 = vmatprep.subr.bf16.mxu0 0
        %1567 = vmatpush1.bf16.msra.mxu0 %v1520
        %1568 = vmatprep.subr.bf16.mxu0 0
        %1569 = vmatpush2.bf16.msra.mxu0 %v1535
        %1570 = vmatprep.subr.bf16.mxu0 0
        %1571 = vmatpush2.bf16.msra.mxu0 %v1534
        %1572 = vmatprep.subr.bf16.mxu0 0
        %1573 = vmatpush2.bf16.msra.mxu0 %v1533
        %1574 = vmatprep.subr.bf16.mxu0 0
        %1575 = vmatpush2.bf16.msra.mxu0 %v1532
        %1576 = vmatprep.subr.bf16.mxu0 0
        %1577 = vmatpush2.bf16.msra.mxu0 %v1531
        %1578 = vmatprep.subr.bf16.mxu0 0
        %1579 = vmatpush2.bf16.msra.mxu0 %v1530
        %1580 = vmatprep.subr.bf16.mxu0 0
        %1581 = vmatpush2.bf16.msra.mxu0 %v1529
        %1582 = vmatprep.subr.bf16.mxu0 0
        %1583 = vmatpush2.bf16.msra.mxu0 %v1528
        %1584 = vmatprep.mubr.bf16.mxu0 %v1354
        %1585 = vmatmul.mubr.bf16.gmra.mxu0 %v1353
        %v1586 = vpop.f32.mrf.mxu0
        %v1587 = vadd.f32 %v1454, %v1586
        %v1588 = vpop.f32.mrf.mxu0
        %v1589 = vpop.f32.mrf.mxu0
        %v1590 = vadd.f32 %v1454, %v1589
        %v1591 = vpop.f32.mrf.mxu0
        %1592 = vmatprep.mubr.bf16.mxu0 %v1356
        %1593 = vmatmul.mubr.bf16.gmra.mxu0 %v1355
        %v1594 = vpop.f32.mrf.mxu0
        %v1595 = vadd.f32 %v1454, %v1594
        %v1596 = vpop.f32.mrf.mxu0
        %v1597 = vpop.f32.mrf.mxu0
        %v1598 = vadd.f32 %v1454, %v1597
        %v1599 = vpop.f32.mrf.mxu0
        %1600 = vmatprep.mubr.bf16.mxu0 %v1358
        %1601 = vmatmul.mubr.bf16.gmra.mxu0 %v1357
        %v1602 = vpop.f32.mrf.mxu0
        %v1603 = vadd.f32 %v1454, %v1602
        %v1604 = vpop.f32.mrf.mxu0
        %v1605 = vpop.f32.mrf.mxu0
        %v1606 = vadd.f32 %v1454, %v1605
        %v1607 = vpop.f32.mrf.mxu0
        %1608 = vmatprep.mubr.bf16.mxu0 %v1360
        %1609 = vmatmul.mubr.bf16.gmra.mxu0 %v1359
        %v1610 = vpop.f32.mrf.mxu0
        %v1611 = vadd.f32 %v1454, %v1610
        %v1612 = vpop.f32.mrf.mxu0
        %v1613 = vpop.f32.mrf.mxu0
        %v1614 = vadd.f32 %v1454, %v1613
        %v1615 = vpop.f32.mrf.mxu0
        %1616 = vmatprep.mubr.bf16.mxu0 %v1362
        %1617 = vmatmul.mubr.bf16.gmra.mxu0 %v1361
        %v1618 = vpop.f32.mrf.mxu0
        %v1619 = vadd.f32 %v1454, %v1618
        %v1620 = vpop.f32.mrf.mxu0
        %v1621 = vpop.f32.mrf.mxu0
        %v1622 = vadd.f32 %v1454, %v1621
        %v1623 = vpop.f32.mrf.mxu0
        %1624 = vmatprep.mubr.bf16.mxu0 %v1364
        %1625 = vmatmul.mubr.bf16.gmra.mxu0 %v1363
        %v1626 = vpop.f32.mrf.mxu0
        %v1627 = vadd.f32 %v1454, %v1626
        %v1628 = vpop.f32.mrf.mxu0
        %v1629 = vpop.f32.mrf.mxu0
        %v1630 = vadd.f32 %v1454, %v1629
        %v1631 = vpop.f32.mrf.mxu0
        %1632 = vmatprep.mubr.bf16.mxu0 %v1366
        %1633 = vmatmul.mubr.bf16.gmra.mxu0 %v1365
        %v1634 = vpop.f32.mrf.mxu0
        %v1635 = vadd.f32 %v1454, %v1634
        %v1636 = vpop.f32.mrf.mxu0
        %v1637 = vpop.f32.mrf.mxu0
        %v1638 = vadd.f32 %v1454, %v1637
        %v1639 = vpop.f32.mrf.mxu0
        %1640 = vmatprep.mubr.bf16.mxu0 %v1368
        %1641 = vmatmul.mubr.bf16.gmra.mxu0 %v1367
        %v1642 = vpop.f32.mrf.mxu0
        %v1643 = vadd.f32 %v1454, %v1642
        %v1644 = vpop.f32.mrf.mxu0
        %v1645 = vpop.f32.mrf.mxu0
        %v1646 = vadd.f32 %v1454, %v1645
        %v1647 = vpop.f32.mrf.mxu0
        %1648 = vmatprep.mubr.bf16.mxu0 %v1370
        %1649 = vmatmul.mubr.bf16.gmra.mxu0 %v1369
        %v1650 = vpop.f32.mrf.mxu0
        %v1651 = vadd.f32 %v1454, %v1650
        %v1652 = vpop.f32.mrf.mxu0
        %v1653 = vpop.f32.mrf.mxu0
        %v1654 = vadd.f32 %v1454, %v1653
        %v1655 = vpop.f32.mrf.mxu0
        %1656 = vmatprep.mubr.bf16.mxu0 %v1372
        %1657 = vmatmul.mubr.bf16.gmra.mxu0 %v1371
        %v1658 = vpop.f32.mrf.mxu0
        %v1659 = vadd.f32 %v1454, %v1658
        %v1660 = vpop.f32.mrf.mxu0
        %v1661 = vpop.f32.mrf.mxu0
        %v1662 = vadd.f32 %v1454, %v1661
        %v1663 = vpop.f32.mrf.mxu0
        %1664 = vmatprep.mubr.bf16.mxu0 %v1374
        %1665 = vmatmul.mubr.bf16.gmra.mxu0 %v1373
        %v1666 = vpop.f32.mrf.mxu0
        %v1667 = vadd.f32 %v1454, %v1666
        %v1668 = vpop.f32.mrf.mxu0
        %v1669 = vpop.f32.mrf.mxu0
        %v1670 = vadd.f32 %v1454, %v1669
        %v1671 = vpop.f32.mrf.mxu0
        %1672 = vmatprep.mubr.bf16.mxu0 %v1376
        %1673 = vmatmul.mubr.bf16.gmra.mxu0 %v1375
        %v1674 = vpop.f32.mrf.mxu0
        %v1675 = vadd.f32 %v1454, %v1674
        %v1676 = vpop.f32.mrf.mxu0
        %v1677 = vpop.f32.mrf.mxu0
        %v1678 = vadd.f32 %v1454, %v1677
        %v1679 = vpop.f32.mrf.mxu0
        %1680 = vmatprep.mubr.bf16.mxu0 %v1378
        %1681 = vmatmul.mubr.bf16.gmra.mxu0 %v1377
        %v1682 = vpop.f32.mrf.mxu0
        %v1683 = vadd.f32 %v1454, %v1682
        %v1684 = vpop.f32.mrf.mxu0
        %v1685 = vpop.f32.mrf.mxu0
        %v1686 = vadd.f32 %v1454, %v1685
        %v1687 = vpop.f32.mrf.mxu0
        %1688 = vmatprep.mubr.bf16.mxu0 %v1380
        %1689 = vmatmul.mubr.bf16.gmra.mxu0 %v1379
        %v1690 = vpop.f32.mrf.mxu0
        %v1691 = vadd.f32 %v1454, %v1690
        %v1692 = vpop.f32.mrf.mxu0
        %v1693 = vpop.f32.mrf.mxu0
        %v1694 = vadd.f32 %v1454, %v1693
        %v1695 = vpop.f32.mrf.mxu0
        %1696 = vmatprep.mubr.bf16.mxu0 %v1382
        %1697 = vmatmul.mubr.bf16.gmra.mxu0 %v1381
        %v1698 = vpop.f32.mrf.mxu0
        %v1699 = vadd.f32 %v1454, %v1698
        %v1700 = vpop.f32.mrf.mxu0
        %v1701 = vpop.f32.mrf.mxu0
        %v1702 = vadd.f32 %v1454, %v1701
        %v1703 = vpop.f32.mrf.mxu0
        %1704 = vmatprep.mubr.bf16.mxu0 %v1384
        %1705 = vmatmul.mubr.bf16.gmra.mxu0 %v1383
        %v1706 = vpop.f32.mrf.mxu0
        %v1707 = vadd.f32 %v1454, %v1706
        %v1708 = vpop.f32.mrf.mxu0
        %v1709 = vpop.f32.mrf.mxu0
        %v1710 = vadd.f32 %v1454, %v1709
        %v1711 = vpop.f32.mrf.mxu0
        %1712 = vmatprep.mubr.bf16.mxu0 %v1386
        %1713 = vmatmul.mubr.bf16.gmra.mxu0 %v1385
        %v1714 = vpop.f32.mrf.mxu0
        %v1715 = vadd.f32 %v1454, %v1714
        %v1716 = vpop.f32.mrf.mxu0
        %v1717 = vpop.f32.mrf.mxu0
        %v1718 = vadd.f32 %v1454, %v1717
        %v1719 = vpop.f32.mrf.mxu0
        %1720 = vmatprep.mubr.bf16.mxu0 %v1388
        %1721 = vmatmul.mubr.bf16.gmra.mxu0 %v1387
        %v1722 = vpop.f32.mrf.mxu0
        %v1723 = vadd.f32 %v1454, %v1722
        %v1724 = vpop.f32.mrf.mxu0
        %v1725 = vpop.f32.mrf.mxu0
        %v1726 = vadd.f32 %v1454, %v1725
        %v1727 = vpop.f32.mrf.mxu0
        %1728 = vmatprep.mubr.bf16.mxu0 %v1390
        %1729 = vmatmul.mubr.bf16.gmra.mxu0 %v1389
        %v1730 = vpop.f32.mrf.mxu0
        %v1731 = vadd.f32 %v1454, %v1730
        %v1732 = vpop.f32.mrf.mxu0
        %v1733 = vpop.f32.mrf.mxu0
        %v1734 = vadd.f32 %v1454, %v1733
        %v1735 = vpop.f32.mrf.mxu0
        %1736 = vmatprep.mubr.bf16.mxu0 %v1392
        %1737 = vmatmul.mubr.bf16.gmra.mxu0 %v1391
        %v1738 = vpop.f32.mrf.mxu0
        %v1739 = vadd.f32 %v1454, %v1738
        %v1740 = vpop.f32.mrf.mxu0
        %v1741 = vpop.f32.mrf.mxu0
        %v1742 = vadd.f32 %v1454, %v1741
        %v1743 = vpop.f32.mrf.mxu0
        %1744 = vmatprep.mubr.bf16.mxu0 %v1394
        %1745 = vmatmul.mubr.bf16.gmra.mxu0 %v1393
        %v1746 = vpop.f32.mrf.mxu0
        %v1747 = vadd.f32 %v1454, %v1746
        %v1748 = vpop.f32.mrf.mxu0
        %v1749 = vpop.f32.mrf.mxu0
        %v1750 = vadd.f32 %v1454, %v1749
        %v1751 = vpop.f32.mrf.mxu0
        %1752 = vmatprep.mubr.bf16.mxu0 %v1396
        %1753 = vmatmul.mubr.bf16.gmra.mxu0 %v1395
        %v1754 = vpop.f32.mrf.mxu0
        %v1755 = vadd.f32 %v1454, %v1754
        %v1756 = vpop.f32.mrf.mxu0
        %v1757 = vpop.f32.mrf.mxu0
        %v1758 = vadd.f32 %v1454, %v1757
        %v1759 = vpop.f32.mrf.mxu0
        %1760 = vmatprep.mubr.bf16.mxu0 %v1398
        %1761 = vmatmul.mubr.bf16.gmra.mxu0 %v1397
        %v1762 = vpop.f32.mrf.mxu0
        %v1763 = vadd.f32 %v1454, %v1762
        %v1764 = vpop.f32.mrf.mxu0
        %v1765 = vpop.f32.mrf.mxu0
        %v1766 = vadd.f32 %v1454, %v1765
        %v1767 = vpop.f32.mrf.mxu0
        %1768 = vmatprep.mubr.bf16.mxu0 %v1400
        %1769 = vmatmul.mubr.bf16.gmra.mxu0 %v1399
        %v1770 = vpop.f32.mrf.mxu0
        %v1771 = vadd.f32 %v1454, %v1770
        %v1772 = vpop.f32.mrf.mxu0
        %v1773 = vpop.f32.mrf.mxu0
        %v1774 = vadd.f32 %v1454, %v1773
        %v1775 = vpop.f32.mrf.mxu0
        %1776 = vmatprep.mubr.bf16.mxu0 %v1402
        %1777 = vmatmul.mubr.bf16.gmra.mxu0 %v1401
        %v1778 = vpop.f32.mrf.mxu0
        %v1779 = vadd.f32 %v1454, %v1778
        %v1780 = vpop.f32.mrf.mxu0
        %v1781 = vpop.f32.mrf.mxu0
        %v1782 = vadd.f32 %v1454, %v1781
        %v1783 = vpop.f32.mrf.mxu0
        %1784 = vmatprep.mubr.bf16.mxu0 %v1404
        %1785 = vmatmul.mubr.bf16.gmra.mxu0 %v1403
        %v1786 = vpop.f32.mrf.mxu0
        %v1787 = vadd.f32 %v1454, %v1786
        %v1788 = vpop.f32.mrf.mxu0
        %v1789 = vpop.f32.mrf.mxu0
        %v1790 = vadd.f32 %v1454, %v1789
        %v1791 = vpop.f32.mrf.mxu0
        %1792 = vmatprep.mubr.bf16.mxu0 %v1406
        %1793 = vmatmul.mubr.bf16.gmra.mxu0 %v1405
        %v1794 = vpop.f32.mrf.mxu0
        %v1795 = vadd.f32 %v1454, %v1794
        %v1796 = vpop.f32.mrf.mxu0
        %v1797 = vpop.f32.mrf.mxu0
        %v1798 = vadd.f32 %v1454, %v1797
        %v1799 = vpop.f32.mrf.mxu0
        %1800 = vmatprep.mubr.bf16.mxu0 %v1408
        %1801 = vmatmul.mubr.bf16.gmra.mxu0 %v1407
        %v1802 = vpop.f32.mrf.mxu0
        %v1803 = vadd.f32 %v1454, %v1802
        %v1804 = vpop.f32.mrf.mxu0
        %v1805 = vpop.f32.mrf.mxu0
        %v1806 = vadd.f32 %v1454, %v1805
        %v1807 = vpop.f32.mrf.mxu0
        %1808 = vmatprep.mubr.bf16.mxu0 %v1410
        %1809 = vmatmul.mubr.bf16.gmra.mxu0 %v1409
        %v1810 = vpop.f32.mrf.mxu0
        %v1811 = vadd.f32 %v1454, %v1810
        %v1812 = vpop.f32.mrf.mxu0
        %v1813 = vpop.f32.mrf.mxu0
        %v1814 = vadd.f32 %v1454, %v1813
        %v1815 = vpop.f32.mrf.mxu0
        %1816 = vmatprep.mubr.bf16.mxu0 %v1412
        %1817 = vmatmul.mubr.bf16.gmra.mxu0 %v1411
        %v1818 = vpop.f32.mrf.mxu0
        %v1819 = vadd.f32 %v1454, %v1818
        %v1820 = vpop.f32.mrf.mxu0
        %v1821 = vpop.f32.mrf.mxu0
        %v1822 = vadd.f32 %v1454, %v1821
        %v1823 = vpop.f32.mrf.mxu0
        %1824 = vmatprep.mubr.bf16.mxu0 %v1414
        %1825 = vmatmul.mubr.bf16.gmra.mxu0 %v1413
        %v1826 = vpop.f32.mrf.mxu0
        %v1827 = vadd.f32 %v1454, %v1826
        %v1828 = vpop.f32.mrf.mxu0
        %v1829 = vpop.f32.mrf.mxu0
        %v1830 = vadd.f32 %v1454, %v1829
        %v1831 = vpop.f32.mrf.mxu0
        %1832 = vmatprep.mubr.bf16.mxu0 %v1416
        %1833 = vmatmul.mubr.bf16.gmra.mxu0 %v1415
        %v1834 = vpop.f32.mrf.mxu0
        %v1835 = vadd.f32 %v1454, %v1834
        %v1836 = vpop.f32.mrf.mxu0
        %v1837 = vpop.f32.mrf.mxu0
        %v1838 = vadd.f32 %v1454, %v1837
        %v1839 = vpop.f32.mrf.mxu0
        %1840 = vdwg.mxu0
        %vm1841 = vcmp.gt.f32.partialorder %v1587, 0.0
        %vm1842 = vcmp.gt.f32.partialorder %v1590, 0.0
        %vm1843 = vcmp.gt.f32.partialorder %v1595, 0.0
        %vm1844 = vcmp.gt.f32.partialorder %v1598, 0.0
        %vm1845 = vcmp.gt.f32.partialorder %v1603, 0.0
        %vm1846 = vcmp.gt.f32.partialorder %v1606, 0.0
        %vm1847 = vcmp.gt.f32.partialorder %v1611, 0.0
        %vm1848 = vcmp.gt.f32.partialorder %v1614, 0.0
        %vm1849 = vcmp.gt.f32.partialorder %v1619, 0.0
        %vm1850 = vcmp.gt.f32.partialorder %v1622, 0.0
        %vm1851 = vcmp.gt.f32.partialorder %v1627, 0.0
        %vm1852 = vcmp.gt.f32.partialorder %v1630, 0.0
        %vm1853 = vcmp.gt.f32.partialorder %v1635, 0.0
        %vm1854 = vcmp.gt.f32.partialorder %v1638, 0.0
        %vm1855 = vcmp.gt.f32.partialorder %v1643, 0.0
        %vm1856 = vcmp.gt.f32.partialorder %v1646, 0.0
        %vm1857 = vcmp.gt.f32.partialorder %v1651, 0.0
        %vm1858 = vcmp.gt.f32.partialorder %v1654, 0.0
        %vm1859 = vcmp.gt.f32.partialorder %v1659, 0.0
        %vm1860 = vcmp.gt.f32.partialorder %v1662, 0.0
        %vm1861 = vcmp.gt.f32.partialorder %v1667, 0.0
        %vm1862 = vcmp.gt.f32.partialorder %v1670, 0.0
        %vm1863 = vcmp.gt.f32.partialorder %v1675, 0.0
        %vm1864 = vcmp.gt.f32.partialorder %v1678, 0.0
        %vm1865 = vcmp.gt.f32.partialorder %v1683, 0.0
        %vm1866 = vcmp.gt.f32.partialorder %v1686, 0.0
        %vm1867 = vcmp.gt.f32.partialorder %v1691, 0.0
        %vm1868 = vcmp.gt.f32.partialorder %v1694, 0.0
        %vm1869 = vcmp.gt.f32.partialorder %v1699, 0.0
        %vm1870 = vcmp.gt.f32.partialorder %v1702, 0.0
        %vm1871 = vcmp.gt.f32.partialorder %v1707, 0.0
        %vm1872 = vcmp.gt.f32.partialorder %v1710, 0.0
        %vm1873 = vcmp.gt.f32.partialorder %v1715, 0.0
        %vm1874 = vcmp.gt.f32.partialorder %v1718, 0.0
        %vm1875 = vcmp.gt.f32.partialorder %v1723, 0.0
        %vm1876 = vcmp.gt.f32.partialorder %v1726, 0.0
        %vm1877 = vcmp.gt.f32.partialorder %v1731, 0.0
        %vm1878 = vcmp.gt.f32.partialorder %v1734, 0.0
        %vm1879 = vcmp.gt.f32.partialorder %v1739, 0.0
        %vm1880 = vcmp.gt.f32.partialorder %v1742, 0.0
        %vm1881 = vcmp.gt.f32.partialorder %v1747, 0.0
        %vm1882 = vcmp.gt.f32.partialorder %v1750, 0.0
        %vm1883 = vcmp.gt.f32.partialorder %v1755, 0.0
        %vm1884 = vcmp.gt.f32.partialorder %v1758, 0.0
        %vm1885 = vcmp.gt.f32.partialorder %v1763, 0.0
        %vm1886 = vcmp.gt.f32.partialorder %v1766, 0.0
        %vm1887 = vcmp.gt.f32.partialorder %v1771, 0.0
        %vm1888 = vcmp.gt.f32.partialorder %v1774, 0.0
        %vm1889 = vcmp.gt.f32.partialorder %v1779, 0.0
        %vm1890 = vcmp.gt.f32.partialorder %v1782, 0.0
        %vm1891 = vcmp.gt.f32.partialorder %v1787, 0.0
        %vm1892 = vcmp.gt.f32.partialorder %v1790, 0.0
        %vm1893 = vcmp.gt.f32.partialorder %v1795, 0.0
        %vm1894 = vcmp.gt.f32.partialorder %v1798, 0.0
        %vm1895 = vcmp.gt.f32.partialorder %v1803, 0.0
        %vm1896 = vcmp.gt.f32.partialorder %v1806, 0.0
        %vm1897 = vcmp.gt.f32.partialorder %v1811, 0.0
        %vm1898 = vcmp.gt.f32.partialorder %v1814, 0.0
        %vm1899 = vcmp.gt.f32.partialorder %v1819, 0.0
        %vm1900 = vcmp.gt.f32.partialorder %v1822, 0.0
        %vm1901 = vcmp.gt.f32.partialorder %v1827, 0.0
        %vm1902 = vcmp.gt.f32.partialorder %v1830, 0.0
        %vm1903 = vcmp.gt.f32.partialorder %v1835, 0.0
        %vm1904 = vcmp.gt.f32.partialorder %v1838, 0.0
        %v1905 = vmul.f32 %v1587, 0.01
        %v1906 = vmul.f32 %v1590, 0.01
        %v1907 = vmul.f32 %v1595, 0.01
        %v1908 = vmul.f32 %v1598, 0.01
        %v1909 = vmul.f32 %v1603, 0.01
        %v1910 = vmul.f32 %v1606, 0.01
        %v1911 = vmul.f32 %v1611, 0.01
        %v1912 = vmul.f32 %v1614, 0.01
        %v1913 = vmul.f32 %v1619, 0.01
        %v1914 = vmul.f32 %v1622, 0.01
        %v1915 = vmul.f32 %v1627, 0.01
        %v1916 = vmul.f32 %v1630, 0.01
        %v1917 = vmul.f32 %v1635, 0.01
        %v1918 = vmul.f32 %v1638, 0.01
        %v1919 = vmul.f32 %v1643, 0.01
        %v1920 = vmul.f32 %v1646, 0.01
        %v1921 = vmul.f32 %v1651, 0.01
        %v1922 = vmul.f32 %v1654, 0.01
        %v1923 = vmul.f32 %v1659, 0.01
        %v1924 = vmul.f32 %v1662, 0.01
        %v1925 = vmul.f32 %v1667, 0.01
        %v1926 = vmul.f32 %v1670, 0.01
        %v1927 = vmul.f32 %v1675, 0.01
        %v1928 = vmul.f32 %v1678, 0.01
        %v1929 = vmul.f32 %v1683, 0.01
        %v1930 = vmul.f32 %v1686, 0.01
        %v1931 = vmul.f32 %v1691, 0.01
        %v1932 = vmul.f32 %v1694, 0.01
        %v1933 = vmul.f32 %v1699, 0.01
        %v1934 = vmul.f32 %v1702, 0.01
        %v1935 = vmul.f32 %v1707, 0.01
        %v1936 = vmul.f32 %v1710, 0.01
        %v1937 = vmul.f32 %v1715, 0.01
        %v1938 = vmul.f32 %v1718, 0.01
        %v1939 = vmul.f32 %v1723, 0.01
        %v1940 = vmul.f32 %v1726, 0.01
        %v1941 = vmul.f32 %v1731, 0.01
        %v1942 = vmul.f32 %v1734, 0.01
        %v1943 = vmul.f32 %v1739, 0.01
        %v1944 = vmul.f32 %v1742, 0.01
        %v1945 = vmul.f32 %v1747, 0.01
        %v1946 = vmul.f32 %v1750, 0.01
        %v1947 = vmul.f32 %v1755, 0.01
        %v1948 = vmul.f32 %v1758, 0.01
        %v1949 = vmul.f32 %v1763, 0.01
        %v1950 = vmul.f32 %v1766, 0.01
        %v1951 = vmul.f32 %v1771, 0.01
        %v1952 = vmul.f32 %v1774, 0.01
        %v1953 = vmul.f32 %v1779, 0.01
        %v1954 = vmul.f32 %v1782, 0.01
        %v1955 = vmul.f32 %v1787, 0.01
        %v1956 = vmul.f32 %v1790, 0.01
        %v1957 = vmul.f32 %v1795, 0.01
        %v1958 = vmul.f32 %v1798, 0.01
        %v1959 = vmul.f32 %v1803, 0.01
        %v1960 = vmul.f32 %v1806, 0.01
        %v1961 = vmul.f32 %v1811, 0.01
        %v1962 = vmul.f32 %v1814, 0.01
        %v1963 = vmul.f32 %v1819, 0.01
        %v1964 = vmul.f32 %v1822, 0.01
        %v1965 = vmul.f32 %v1827, 0.01
        %v1966 = vmul.f32 %v1830, 0.01
        %v1967 = vmul.f32 %v1835, 0.01
        %v1968 = vmul.f32 %v1838, 0.01
        %v1969 = vsel %vm1841, %v1587, %v1905
        %v1970 = vsel %vm1842, %v1590, %v1906
        %v1971 = vsel %vm1843, %v1595, %v1907
        %v1972 = vsel %vm1844, %v1598, %v1908
        %v1973 = vsel %vm1845, %v1603, %v1909
        %v1974 = vsel %vm1846, %v1606, %v1910
        %v1975 = vsel %vm1847, %v1611, %v1911
        %v1976 = vsel %vm1848, %v1614, %v1912
        %v1977 = vsel %vm1849, %v1619, %v1913
        %v1978 = vsel %vm1850, %v1622, %v1914
        %v1979 = vsel %vm1851, %v1627, %v1915
        %v1980 = vsel %vm1852, %v1630, %v1916
        %v1981 = vsel %vm1853, %v1635, %v1917
        %v1982 = vsel %vm1854, %v1638, %v1918
        %v1983 = vsel %vm1855, %v1643, %v1919
        %v1984 = vsel %vm1856, %v1646, %v1920
        %v1985 = vsel %vm1857, %v1651, %v1921
        %v1986 = vsel %vm1858, %v1654, %v1922
        %v1987 = vsel %vm1859, %v1659, %v1923
        %v1988 = vsel %vm1860, %v1662, %v1924
        %v1989 = vsel %vm1861, %v1667, %v1925
        %v1990 = vsel %vm1862, %v1670, %v1926
        %v1991 = vsel %vm1863, %v1675, %v1927
        %v1992 = vsel %vm1864, %v1678, %v1928
        %v1993 = vsel %vm1865, %v1683, %v1929
        %v1994 = vsel %vm1866, %v1686, %v1930
        %v1995 = vsel %vm1867, %v1691, %v1931
        %v1996 = vsel %vm1868, %v1694, %v1932
        %v1997 = vsel %vm1869, %v1699, %v1933
        %v1998 = vsel %vm1870, %v1702, %v1934
        %v1999 = vsel %vm1871, %v1707, %v1935
        %v2000 = vsel %vm1872, %v1710, %v1936
        %v2001 = vsel %vm1873, %v1715, %v1937
        %v2002 = vsel %vm1874, %v1718, %v1938
        %v2003 = vsel %vm1875, %v1723, %v1939
        %v2004 = vsel %vm1876, %v1726, %v1940
        %v2005 = vsel %vm1877, %v1731, %v1941
        %v2006 = vsel %vm1878, %v1734, %v1942
        %v2007 = vsel %vm1879, %v1739, %v1943
        %v2008 = vsel %vm1880, %v1742, %v1944
        %v2009 = vsel %vm1881, %v1747, %v1945
        %v2010 = vsel %vm1882, %v1750, %v1946
        %v2011 = vsel %vm1883, %v1755, %v1947
        %v2012 = vsel %vm1884, %v1758, %v1948
        %v2013 = vsel %vm1885, %v1763, %v1949
        %v2014 = vsel %vm1886, %v1766, %v1950
        %v2015 = vsel %vm1887, %v1771, %v1951
        %v2016 = vsel %vm1888, %v1774, %v1952
        %v2017 = vsel %vm1889, %v1779, %v1953
        %v2018 = vsel %vm1890, %v1782, %v1954
        %v2019 = vsel %vm1891, %v1787, %v1955
        %v2020 = vsel %vm1892, %v1790, %v1956
        %v2021 = vsel %vm1893, %v1795, %v1957
        %v2022 = vsel %vm1894, %v1798, %v1958
        %v2023 = vsel %vm1895, %v1803, %v1959
        %v2024 = vsel %vm1896, %v1806, %v1960
        %v2025 = vsel %vm1897, %v1811, %v1961
        %v2026 = vsel %vm1898, %v1814, %v1962
        %v2027 = vsel %vm1899, %v1819, %v1963
        %v2028 = vsel %vm1900, %v1822, %v1964
        %v2029 = vsel %vm1901, %v1827, %v1965
        %v2030 = vsel %vm1902, %v1830, %v1966
        %v2031 = vsel %vm1903, %v1835, %v1967
        %v2032 = vsel %vm1904, %v1838, %v1968
        %v2033 = vpack.c.bf16 %v1970, %v1969
        %v2034 = vpack.c.bf16 %v1972, %v1971
        %v2035 = vpack.c.bf16 %v1974, %v1973
        %v2036 = vpack.c.bf16 %v1976, %v1975
        %v2037 = vpack.c.bf16 %v1978, %v1977
        %v2038 = vpack.c.bf16 %v1980, %v1979
        %v2039 = vpack.c.bf16 %v1982, %v1981
        %v2040 = vpack.c.bf16 %v1984, %v1983
        %v2041 = vpack.c.bf16 %v1986, %v1985
        %v2042 = vpack.c.bf16 %v1988, %v1987
        %v2043 = vpack.c.bf16 %v1990, %v1989
        %v2044 = vpack.c.bf16 %v1992, %v1991
        %v2045 = vpack.c.bf16 %v1994, %v1993
        %v2046 = vpack.c.bf16 %v1996, %v1995
        %v2047 = vpack.c.bf16 %v1998, %v1997
        %v2048 = vpack.c.bf16 %v2000, %v1999
        %v2049 = vpack.c.bf16 %v2002, %v2001
        %v2050 = vpack.c.bf16 %v2004, %v2003
        %v2051 = vpack.c.bf16 %v2006, %v2005
        %v2052 = vpack.c.bf16 %v2008, %v2007
        %v2053 = vpack.c.bf16 %v2010, %v2009
        %v2054 = vpack.c.bf16 %v2012, %v2011
        %v2055 = vpack.c.bf16 %v2014, %v2013
        %v2056 = vpack.c.bf16 %v2016, %v2015
        %v2057 = vpack.c.bf16 %v2018, %v2017
        %v2058 = vpack.c.bf16 %v2020, %v2019
        %v2059 = vpack.c.bf16 %v2022, %v2021
        %v2060 = vpack.c.bf16 %v2024, %v2023
        %v2061 = vpack.c.bf16 %v2026, %v2025
        %v2062 = vpack.c.bf16 %v2028, %v2027
        %v2063 = vpack.c.bf16 %v2030, %v2029
        %v2064 = vpack.c.bf16 %v2032, %v2031
        %v2065 = vld [vmem:[#allocation8] sm:$0xff]
        %v2066 = vld [vmem:[#allocation8 + $0x8] sm:$0xff]
        %v2067 = vld [vmem:[#allocation8 + $0x10] sm:$0xff]
        %v2068 = vld [vmem:[#allocation8 + $0x18] sm:$0xff]
        %v2069 = vld [vmem:[#allocation8 + $0x20] sm:$0xff]
        %v2070 = vld [vmem:[#allocation8 + $0x28] sm:$0xff]
        %v2071 = vld [vmem:[#allocation8 + $0x30] sm:$0xff]
        %v2072 = vld [vmem:[#allocation8 + $0x38] sm:$0xff]
        %v2073 = vld [vmem:[#allocation8 + $0x40] sm:$0xff]
        %v2074 = vld [vmem:[#allocation8 + $0x48] sm:$0xff]
        %v2075 = vld [vmem:[#allocation8 + $0x50] sm:$0xff]
        %v2076 = vld [vmem:[#allocation8 + $0x58] sm:$0xff]
        %v2077 = vld [vmem:[#allocation8 + $0x60] sm:$0xff]
        %v2078 = vld [vmem:[#allocation8 + $0x68] sm:$0xff]
        %v2079 = vld [vmem:[#allocation8 + $0x70] sm:$0xff]
        %v2080 = vld [vmem:[#allocation8 + $0x78] sm:$0xff]
        %v2081 = vld [vmem:[%s6] sm:$0x3]
        %v2083 = vlaneseq
        %v2084 = vshrl.u32 %v2083, 7
        %v2085 = vsub.s32 0, %v2084
        %v2086 = vrot.slane %v2081, %v2085
        %v2087 = vlaneseq
        %v2088 = vshrl.u32 %v2087, 7
        %v2089 = vsub.s32 1, %v2088
        %v2090 = vrot.slane %v2081, %v2089
        %v2109 = vunpack.c.l.b16 %v2065
        %v2110 = vunpack.c.h.b16 %v2065
        %v2111 = vunpack.c.l.b16 %v2066
        %v2112 = vunpack.c.h.b16 %v2066
        %v2113 = vunpack.c.l.b16 %v2067
        %v2114 = vunpack.c.h.b16 %v2067
        %v2115 = vunpack.c.l.b16 %v2068
        %v2116 = vunpack.c.h.b16 %v2068
        %v2117 = vunpack.c.l.b16 %v2069
        %v2118 = vunpack.c.h.b16 %v2069
        %v2119 = vunpack.c.l.b16 %v2070
        %v2120 = vunpack.c.h.b16 %v2070
        %v2121 = vunpack.c.l.b16 %v2071
        %v2122 = vunpack.c.h.b16 %v2071
        %v2123 = vunpack.c.l.b16 %v2072
        %v2124 = vunpack.c.h.b16 %v2072
        %v2125 = vunpack.c.l.b16 %v2073
        %v2126 = vunpack.c.h.b16 %v2073
        %v2127 = vunpack.c.l.b16 %v2074
        %v2128 = vunpack.c.h.b16 %v2074
        %v2129 = vunpack.c.l.b16 %v2075
        %v2130 = vunpack.c.h.b16 %v2075
        %v2131 = vunpack.c.l.b16 %v2076
        %v2132 = vunpack.c.h.b16 %v2076
        %v2133 = vunpack.c.l.b16 %v2077
        %v2134 = vunpack.c.h.b16 %v2077
        %v2135 = vunpack.c.l.b16 %v2078
        %v2136 = vunpack.c.h.b16 %v2078
        %v2137 = vunpack.c.l.b16 %v2079
        %v2138 = vunpack.c.h.b16 %v2079
        %v2139 = vunpack.c.l.b16 %v2080
        %v2140 = vunpack.c.h.b16 %v2080
        %v2141 = vpack.c.b16 %v2111, %v2109
        %v2142 = vpack.c.b16 %v2112, %v2110
        %v2143 = vpack.c.b16 %v2115, %v2113
        %v2144 = vpack.c.b16 %v2116, %v2114
        %v2145 = vpack.c.b16 %v2119, %v2117
        %v2146 = vpack.c.b16 %v2120, %v2118
        %v2147 = vpack.c.b16 %v2123, %v2121
        %v2148 = vpack.c.b16 %v2124, %v2122
        %v2149 = vpack.c.b16 %v2127, %v2125
        %v2150 = vpack.c.b16 %v2128, %v2126
        %v2151 = vpack.c.b16 %v2131, %v2129
        %v2152 = vpack.c.b16 %v2132, %v2130
        %v2153 = vpack.c.b16 %v2135, %v2133
        %v2154 = vpack.c.b16 %v2136, %v2134
        %v2155 = vpack.c.b16 %v2139, %v2137
        %v2156 = vpack.c.b16 %v2140, %v2138
        %2173 = vmatprep.subr.bf16.mxu0 %v2156
        %2174 = vmatpush1.bf16.msra.mxu0 %v2155
        %2175 = vmatprep.subr.bf16.mxu0 %v2154
        %2176 = vmatpush1.bf16.msra.mxu0 %v2153
        %2177 = vmatprep.subr.bf16.mxu0 %v2152
        %2178 = vmatpush1.bf16.msra.mxu0 %v2151
        %2179 = vmatprep.subr.bf16.mxu0 %v2150
        %2180 = vmatpush1.bf16.msra.mxu0 %v2149
        %2181 = vmatprep.subr.bf16.mxu0 %v2148
        %2182 = vmatpush1.bf16.msra.mxu0 %v2147
        %2183 = vmatprep.subr.bf16.mxu0 %v2146
        %2184 = vmatpush1.bf16.msra.mxu0 %v2145
        %2185 = vmatprep.subr.bf16.mxu0 %v2144
        %2186 = vmatpush1.bf16.msra.mxu0 %v2143
        %2187 = vmatprep.subr.bf16.mxu0 %v2142
        %2188 = vmatpush1.bf16.msra.mxu0 %v2141
        %2189 = vmatprep.subr.bf16.mxu0 0
        %2190 = vmatpush2.bf16.msra.mxu0 0
        %2191 = vmatprep.subr.bf16.mxu0 0
        %2192 = vmatpush2.bf16.msra.mxu0 0
        %2193 = vmatprep.subr.bf16.mxu0 0
        %2194 = vmatpush2.bf16.msra.mxu0 0
        %2195 = vmatprep.subr.bf16.mxu0 0
        %2196 = vmatpush2.bf16.msra.mxu0 0
        %2197 = vmatprep.subr.bf16.mxu0 0
        %2198 = vmatpush2.bf16.msra.mxu0 0
        %2199 = vmatprep.subr.bf16.mxu0 0
        %2200 = vmatpush2.bf16.msra.mxu0 0
        %2201 = vmatprep.subr.bf16.mxu0 0
        %2202 = vmatpush2.bf16.msra.mxu0 0
        %2203 = vmatprep.subr.bf16.mxu0 0
        %2204 = vmatpush2.bf16.msra.mxu0 0
        %2205 = vmatprep.mubr.bf16.mxu0 0
        %2206 = vmatmul.mubr.bf16.gmra.mxu0 %v2033
        %v2207 = vpop.f32.mrf.mxu0
        %v2208 = vadd.f32 %v2086, %v2207
        %v2209 = vpop.f32.mrf.mxu0
        %v2210 = vadd.f32 %v2090, %v2209
        %v2211 = vpop.f32.mrf.mxu0
        %v2212 = vadd.f32 %v2086, %v2211
        %v2213 = vpop.f32.mrf.mxu0
        %v2214 = vadd.f32 %v2090, %v2213
        %2215 = vmatprep.mubr.bf16.mxu0 0
        %2216 = vmatmul.mubr.bf16.gmra.mxu0 %v2034
        %v2217 = vpop.f32.mrf.mxu0
        %v2218 = vadd.f32 %v2086, %v2217
        %v2219 = vpop.f32.mrf.mxu0
        %v2220 = vadd.f32 %v2090, %v2219
        %v2221 = vpop.f32.mrf.mxu0
        %v2222 = vadd.f32 %v2086, %v2221
        %v2223 = vpop.f32.mrf.mxu0
        %v2224 = vadd.f32 %v2090, %v2223
        %2225 = vmatprep.mubr.bf16.mxu0 0
        %2226 = vmatmul.mubr.bf16.gmra.mxu0 %v2035
        %v2227 = vpop.f32.mrf.mxu0
        %v2228 = vadd.f32 %v2086, %v2227
        %v2229 = vpop.f32.mrf.mxu0
        %v2230 = vadd.f32 %v2090, %v2229
        %v2231 = vpop.f32.mrf.mxu0
        %v2232 = vadd.f32 %v2086, %v2231
        %v2233 = vpop.f32.mrf.mxu0
        %v2234 = vadd.f32 %v2090, %v2233
        %2235 = vmatprep.mubr.bf16.mxu0 0
        %2236 = vmatmul.mubr.bf16.gmra.mxu0 %v2036
        %v2237 = vpop.f32.mrf.mxu0
        %v2238 = vadd.f32 %v2086, %v2237
        %v2239 = vpop.f32.mrf.mxu0
        %v2240 = vadd.f32 %v2090, %v2239
        %v2241 = vpop.f32.mrf.mxu0
        %v2242 = vadd.f32 %v2086, %v2241
        %v2243 = vpop.f32.mrf.mxu0
        %v2244 = vadd.f32 %v2090, %v2243
        %2245 = vmatprep.mubr.bf16.mxu0 0
        %2246 = vmatmul.mubr.bf16.gmra.mxu0 %v2037
        %v2247 = vpop.f32.mrf.mxu0
        %v2248 = vadd.f32 %v2086, %v2247
        %v2249 = vpop.f32.mrf.mxu0
        %v2250 = vadd.f32 %v2090, %v2249
        %v2251 = vpop.f32.mrf.mxu0
        %v2252 = vadd.f32 %v2086, %v2251
        %v2253 = vpop.f32.mrf.mxu0
        %v2254 = vadd.f32 %v2090, %v2253
        %2255 = vmatprep.mubr.bf16.mxu0 0
        %2256 = vmatmul.mubr.bf16.gmra.mxu0 %v2038
        %v2257 = vpop.f32.mrf.mxu0
        %v2258 = vadd.f32 %v2086, %v2257
        %v2259 = vpop.f32.mrf.mxu0
        %v2260 = vadd.f32 %v2090, %v2259
        %v2261 = vpop.f32.mrf.mxu0
        %v2262 = vadd.f32 %v2086, %v2261
        %v2263 = vpop.f32.mrf.mxu0
        %v2264 = vadd.f32 %v2090, %v2263
        %2265 = vmatprep.mubr.bf16.mxu0 0
        %2266 = vmatmul.mubr.bf16.gmra.mxu0 %v2039
        %v2267 = vpop.f32.mrf.mxu0
        %v2268 = vadd.f32 %v2086, %v2267
        %v2269 = vpop.f32.mrf.mxu0
        %v2270 = vadd.f32 %v2090, %v2269
        %v2271 = vpop.f32.mrf.mxu0
        %v2272 = vadd.f32 %v2086, %v2271
        %v2273 = vpop.f32.mrf.mxu0
        %v2274 = vadd.f32 %v2090, %v2273
        %2275 = vmatprep.mubr.bf16.mxu0 0
        %2276 = vmatmul.mubr.bf16.gmra.mxu0 %v2040
        %v2277 = vpop.f32.mrf.mxu0
        %v2278 = vadd.f32 %v2086, %v2277
        %v2279 = vpop.f32.mrf.mxu0
        %v2280 = vadd.f32 %v2090, %v2279
        %v2281 = vpop.f32.mrf.mxu0
        %v2282 = vadd.f32 %v2086, %v2281
        %v2283 = vpop.f32.mrf.mxu0
        %v2284 = vadd.f32 %v2090, %v2283
        %2285 = vmatprep.mubr.bf16.mxu0 0
        %2286 = vmatmul.mubr.bf16.gmra.mxu0 %v2041
        %v2287 = vpop.f32.mrf.mxu0
        %v2288 = vadd.f32 %v2086, %v2287
        %v2289 = vpop.f32.mrf.mxu0
        %v2290 = vadd.f32 %v2090, %v2289
        %v2291 = vpop.f32.mrf.mxu0
        %v2292 = vadd.f32 %v2086, %v2291
        %v2293 = vpop.f32.mrf.mxu0
        %v2294 = vadd.f32 %v2090, %v2293
        %2295 = vmatprep.mubr.bf16.mxu0 0
        %2296 = vmatmul.mubr.bf16.gmra.mxu0 %v2042
        %v2297 = vpop.f32.mrf.mxu0
        %v2298 = vadd.f32 %v2086, %v2297
        %v2299 = vpop.f32.mrf.mxu0
        %v2300 = vadd.f32 %v2090, %v2299
        %v2301 = vpop.f32.mrf.mxu0
        %v2302 = vadd.f32 %v2086, %v2301
        %v2303 = vpop.f32.mrf.mxu0
        %v2304 = vadd.f32 %v2090, %v2303
        %2305 = vmatprep.mubr.bf16.mxu0 0
        %2306 = vmatmul.mubr.bf16.gmra.mxu0 %v2043
        %v2307 = vpop.f32.mrf.mxu0
        %v2308 = vadd.f32 %v2086, %v2307
        %v2309 = vpop.f32.mrf.mxu0
        %v2310 = vadd.f32 %v2090, %v2309
        %v2311 = vpop.f32.mrf.mxu0
        %v2312 = vadd.f32 %v2086, %v2311
        %v2313 = vpop.f32.mrf.mxu0
        %v2314 = vadd.f32 %v2090, %v2313
        %2315 = vmatprep.mubr.bf16.mxu0 0
        %2316 = vmatmul.mubr.bf16.gmra.mxu0 %v2044
        %v2317 = vpop.f32.mrf.mxu0
        %v2318 = vadd.f32 %v2086, %v2317
        %v2319 = vpop.f32.mrf.mxu0
        %v2320 = vadd.f32 %v2090, %v2319
        %v2321 = vpop.f32.mrf.mxu0
        %v2322 = vadd.f32 %v2086, %v2321
        %v2323 = vpop.f32.mrf.mxu0
        %v2324 = vadd.f32 %v2090, %v2323
        %2325 = vmatprep.mubr.bf16.mxu0 0
        %2326 = vmatmul.mubr.bf16.gmra.mxu0 %v2045
        %v2327 = vpop.f32.mrf.mxu0
        %v2328 = vadd.f32 %v2086, %v2327
        %v2329 = vpop.f32.mrf.mxu0
        %v2330 = vadd.f32 %v2090, %v2329
        %v2331 = vpop.f32.mrf.mxu0
        %v2332 = vadd.f32 %v2086, %v2331
        %v2333 = vpop.f32.mrf.mxu0
        %v2334 = vadd.f32 %v2090, %v2333
        %2335 = vmatprep.mubr.bf16.mxu0 0
        %2336 = vmatmul.mubr.bf16.gmra.mxu0 %v2046
        %v2337 = vpop.f32.mrf.mxu0
        %v2338 = vadd.f32 %v2086, %v2337
        %v2339 = vpop.f32.mrf.mxu0
        %v2340 = vadd.f32 %v2090, %v2339
        %v2341 = vpop.f32.mrf.mxu0
        %v2342 = vadd.f32 %v2086, %v2341
        %v2343 = vpop.f32.mrf.mxu0
        %v2344 = vadd.f32 %v2090, %v2343
        %2345 = vmatprep.mubr.bf16.mxu0 0
        %2346 = vmatmul.mubr.bf16.gmra.mxu0 %v2047
        %v2347 = vpop.f32.mrf.mxu0
        %v2348 = vadd.f32 %v2086, %v2347
        %v2349 = vpop.f32.mrf.mxu0
        %v2350 = vadd.f32 %v2090, %v2349
        %v2351 = vpop.f32.mrf.mxu0
        %v2352 = vadd.f32 %v2086, %v2351
        %v2353 = vpop.f32.mrf.mxu0
        %v2354 = vadd.f32 %v2090, %v2353
        %2355 = vmatprep.mubr.bf16.mxu0 0
        %2356 = vmatmul.mubr.bf16.gmra.mxu0 %v2048
        %v2357 = vpop.f32.mrf.mxu0
        %v2358 = vadd.f32 %v2086, %v2357
        %v2359 = vpop.f32.mrf.mxu0
        %v2360 = vadd.f32 %v2090, %v2359
        %v2361 = vpop.f32.mrf.mxu0
        %v2362 = vadd.f32 %v2086, %v2361
        %v2363 = vpop.f32.mrf.mxu0
        %v2364 = vadd.f32 %v2090, %v2363
        %2365 = vmatprep.mubr.bf16.mxu0 0
        %2366 = vmatmul.mubr.bf16.gmra.mxu0 %v2049
        %v2367 = vpop.f32.mrf.mxu0
        %v2368 = vadd.f32 %v2086, %v2367
        %v2369 = vpop.f32.mrf.mxu0
        %v2370 = vadd.f32 %v2090, %v2369
        %v2371 = vpop.f32.mrf.mxu0
        %v2372 = vadd.f32 %v2086, %v2371
        %v2373 = vpop.f32.mrf.mxu0
        %v2374 = vadd.f32 %v2090, %v2373
        %2375 = vmatprep.mubr.bf16.mxu0 0
        %2376 = vmatmul.mubr.bf16.gmra.mxu0 %v2050
        %v2377 = vpop.f32.mrf.mxu0
        %v2378 = vadd.f32 %v2086, %v2377
        %v2379 = vpop.f32.mrf.mxu0
        %v2380 = vadd.f32 %v2090, %v2379
        %v2381 = vpop.f32.mrf.mxu0
        %v2382 = vadd.f32 %v2086, %v2381
        %v2383 = vpop.f32.mrf.mxu0
        %v2384 = vadd.f32 %v2090, %v2383
        %2385 = vmatprep.mubr.bf16.mxu0 0
        %2386 = vmatmul.mubr.bf16.gmra.mxu0 %v2051
        %v2387 = vpop.f32.mrf.mxu0
        %v2388 = vadd.f32 %v2086, %v2387
        %v2389 = vpop.f32.mrf.mxu0
        %v2390 = vadd.f32 %v2090, %v2389
        %v2391 = vpop.f32.mrf.mxu0
        %v2392 = vadd.f32 %v2086, %v2391
        %v2393 = vpop.f32.mrf.mxu0
        %v2394 = vadd.f32 %v2090, %v2393
        %2395 = vmatprep.mubr.bf16.mxu0 0
        %2396 = vmatmul.mubr.bf16.gmra.mxu0 %v2052
        %v2397 = vpop.f32.mrf.mxu0
        %v2398 = vadd.f32 %v2086, %v2397
        %v2399 = vpop.f32.mrf.mxu0
        %v2400 = vadd.f32 %v2090, %v2399
        %v2401 = vpop.f32.mrf.mxu0
        %v2402 = vadd.f32 %v2086, %v2401
        %v2403 = vpop.f32.mrf.mxu0
        %v2404 = vadd.f32 %v2090, %v2403
        %2405 = vmatprep.mubr.bf16.mxu0 0
        %2406 = vmatmul.mubr.bf16.gmra.mxu0 %v2053
        %v2407 = vpop.f32.mrf.mxu0
        %v2408 = vadd.f32 %v2086, %v2407
        %v2409 = vpop.f32.mrf.mxu0
        %v2410 = vadd.f32 %v2090, %v2409
        %v2411 = vpop.f32.mrf.mxu0
        %v2412 = vadd.f32 %v2086, %v2411
        %v2413 = vpop.f32.mrf.mxu0
        %v2414 = vadd.f32 %v2090, %v2413
        %2415 = vmatprep.mubr.bf16.mxu0 0
        %2416 = vmatmul.mubr.bf16.gmra.mxu0 %v2054
        %v2417 = vpop.f32.mrf.mxu0
        %v2418 = vadd.f32 %v2086, %v2417
        %v2419 = vpop.f32.mrf.mxu0
        %v2420 = vadd.f32 %v2090, %v2419
        %v2421 = vpop.f32.mrf.mxu0
        %v2422 = vadd.f32 %v2086, %v2421
        %v2423 = vpop.f32.mrf.mxu0
        %v2424 = vadd.f32 %v2090, %v2423
        %2425 = vmatprep.mubr.bf16.mxu0 0
        %2426 = vmatmul.mubr.bf16.gmra.mxu0 %v2055
        %v2427 = vpop.f32.mrf.mxu0
        %v2428 = vadd.f32 %v2086, %v2427
        %v2429 = vpop.f32.mrf.mxu0
        %v2430 = vadd.f32 %v2090, %v2429
        %v2431 = vpop.f32.mrf.mxu0
        %v2432 = vadd.f32 %v2086, %v2431
        %v2433 = vpop.f32.mrf.mxu0
        %v2434 = vadd.f32 %v2090, %v2433
        %2435 = vmatprep.mubr.bf16.mxu0 0
        %2436 = vmatmul.mubr.bf16.gmra.mxu0 %v2056
        %v2437 = vpop.f32.mrf.mxu0
        %v2438 = vadd.f32 %v2086, %v2437
        %v2439 = vpop.f32.mrf.mxu0
        %v2440 = vadd.f32 %v2090, %v2439
        %v2441 = vpop.f32.mrf.mxu0
        %v2442 = vadd.f32 %v2086, %v2441
        %v2443 = vpop.f32.mrf.mxu0
        %v2444 = vadd.f32 %v2090, %v2443
        %2445 = vmatprep.mubr.bf16.mxu0 0
        %2446 = vmatmul.mubr.bf16.gmra.mxu0 %v2057
        %v2447 = vpop.f32.mrf.mxu0
        %v2448 = vadd.f32 %v2086, %v2447
        %v2449 = vpop.f32.mrf.mxu0
        %v2450 = vadd.f32 %v2090, %v2449
        %v2451 = vpop.f32.mrf.mxu0
        %v2452 = vadd.f32 %v2086, %v2451
        %v2453 = vpop.f32.mrf.mxu0
        %v2454 = vadd.f32 %v2090, %v2453
        %2455 = vmatprep.mubr.bf16.mxu0 0
        %2456 = vmatmul.mubr.bf16.gmra.mxu0 %v2058
        %v2457 = vpop.f32.mrf.mxu0
        %v2458 = vadd.f32 %v2086, %v2457
        %v2459 = vpop.f32.mrf.mxu0
        %v2460 = vadd.f32 %v2090, %v2459
        %v2461 = vpop.f32.mrf.mxu0
        %v2462 = vadd.f32 %v2086, %v2461
        %v2463 = vpop.f32.mrf.mxu0
        %v2464 = vadd.f32 %v2090, %v2463
        %2465 = vmatprep.mubr.bf16.mxu0 0
        %2466 = vmatmul.mubr.bf16.gmra.mxu0 %v2059
        %v2467 = vpop.f32.mrf.mxu0
        %v2468 = vadd.f32 %v2086, %v2467
        %v2469 = vpop.f32.mrf.mxu0
        %v2470 = vadd.f32 %v2090, %v2469
        %v2471 = vpop.f32.mrf.mxu0
        %v2472 = vadd.f32 %v2086, %v2471
        %v2473 = vpop.f32.mrf.mxu0
        %v2474 = vadd.f32 %v2090, %v2473
        %2475 = vmatprep.mubr.bf16.mxu0 0
        %2476 = vmatmul.mubr.bf16.gmra.mxu0 %v2060
        %v2477 = vpop.f32.mrf.mxu0
        %v2478 = vadd.f32 %v2086, %v2477
        %v2479 = vpop.f32.mrf.mxu0
        %v2480 = vadd.f32 %v2090, %v2479
        %v2481 = vpop.f32.mrf.mxu0
        %v2482 = vadd.f32 %v2086, %v2481
        %v2483 = vpop.f32.mrf.mxu0
        %v2484 = vadd.f32 %v2090, %v2483
        %2485 = vmatprep.mubr.bf16.mxu0 0
        %2486 = vmatmul.mubr.bf16.gmra.mxu0 %v2061
        %v2487 = vpop.f32.mrf.mxu0
        %v2488 = vadd.f32 %v2086, %v2487
        %v2489 = vpop.f32.mrf.mxu0
        %v2490 = vadd.f32 %v2090, %v2489
        %v2491 = vpop.f32.mrf.mxu0
        %v2492 = vadd.f32 %v2086, %v2491
        %v2493 = vpop.f32.mrf.mxu0
        %v2494 = vadd.f32 %v2090, %v2493
        %2495 = vmatprep.mubr.bf16.mxu0 0
        %2496 = vmatmul.mubr.bf16.gmra.mxu0 %v2062
        %v2497 = vpop.f32.mrf.mxu0
        %v2498 = vadd.f32 %v2086, %v2497
        %v2499 = vpop.f32.mrf.mxu0
        %v2500 = vadd.f32 %v2090, %v2499
        %v2501 = vpop.f32.mrf.mxu0
        %v2502 = vadd.f32 %v2086, %v2501
        %v2503 = vpop.f32.mrf.mxu0
        %v2504 = vadd.f32 %v2090, %v2503
        %2505 = vmatprep.mubr.bf16.mxu0 0
        %2506 = vmatmul.mubr.bf16.gmra.mxu0 %v2063
        %v2507 = vpop.f32.mrf.mxu0
        %v2508 = vadd.f32 %v2086, %v2507
        %v2509 = vpop.f32.mrf.mxu0
        %v2510 = vadd.f32 %v2090, %v2509
        %v2511 = vpop.f32.mrf.mxu0
        %v2512 = vadd.f32 %v2086, %v2511
        %v2513 = vpop.f32.mrf.mxu0
        %v2514 = vadd.f32 %v2090, %v2513
        %2515 = vmatprep.mubr.bf16.mxu0 0
        %2516 = vmatmul.mubr.bf16.gmra.mxu0 %v2064
        %v2517 = vpop.f32.mrf.mxu0
        %v2518 = vadd.f32 %v2086, %v2517
        %v2519 = vpop.f32.mrf.mxu0
        %v2520 = vadd.f32 %v2090, %v2519
        %v2521 = vpop.f32.mrf.mxu0
        %v2522 = vadd.f32 %v2086, %v2521
        %v2523 = vpop.f32.mrf.mxu0
        %v2524 = vadd.f32 %v2090, %v2523
        %2525 = vdwg.mxu0
        %vm2526 = vcmp.gt.f32.partialorder %v2208, 0.0
        %vm2527 = vcmp.gt.f32.partialorder %v2210, 0.0
        %vm2528 = vcmp.gt.f32.partialorder %v2212, 0.0
        %vm2529 = vcmp.gt.f32.partialorder %v2214, 0.0
        %vm2530 = vcmp.gt.f32.partialorder %v2218, 0.0
        %vm2531 = vcmp.gt.f32.partialorder %v2220, 0.0
        %vm2532 = vcmp.gt.f32.partialorder %v2222, 0.0
        %vm2533 = vcmp.gt.f32.partialorder %v2224, 0.0
        %vm2534 = vcmp.gt.f32.partialorder %v2228, 0.0
        %vm2535 = vcmp.gt.f32.partialorder %v2230, 0.0
        %vm2536 = vcmp.gt.f32.partialorder %v2232, 0.0
        %vm2537 = vcmp.gt.f32.partialorder %v2234, 0.0
        %vm2538 = vcmp.gt.f32.partialorder %v2238, 0.0
        %vm2539 = vcmp.gt.f32.partialorder %v2240, 0.0
        %vm2540 = vcmp.gt.f32.partialorder %v2242, 0.0
        %vm2541 = vcmp.gt.f32.partialorder %v2244, 0.0
        %vm2542 = vcmp.gt.f32.partialorder %v2248, 0.0
        %vm2543 = vcmp.gt.f32.partialorder %v2250, 0.0
        %vm2544 = vcmp.gt.f32.partialorder %v2252, 0.0
        %vm2545 = vcmp.gt.f32.partialorder %v2254, 0.0
        %vm2546 = vcmp.gt.f32.partialorder %v2258, 0.0
        %vm2547 = vcmp.gt.f32.partialorder %v2260, 0.0
        %vm2548 = vcmp.gt.f32.partialorder %v2262, 0.0
        %vm2549 = vcmp.gt.f32.partialorder %v2264, 0.0
        %vm2550 = vcmp.gt.f32.partialorder %v2268, 0.0
        %vm2551 = vcmp.gt.f32.partialorder %v2270, 0.0
        %vm2552 = vcmp.gt.f32.partialorder %v2272, 0.0
        %vm2553 = vcmp.gt.f32.partialorder %v2274, 0.0
        %vm2554 = vcmp.gt.f32.partialorder %v2278, 0.0
        %vm2555 = vcmp.gt.f32.partialorder %v2280, 0.0
        %vm2556 = vcmp.gt.f32.partialorder %v2282, 0.0
        %vm2557 = vcmp.gt.f32.partialorder %v2284, 0.0
        %vm2558 = vcmp.gt.f32.partialorder %v2288, 0.0
        %vm2559 = vcmp.gt.f32.partialorder %v2290, 0.0
        %vm2560 = vcmp.gt.f32.partialorder %v2292, 0.0
        %vm2561 = vcmp.gt.f32.partialorder %v2294, 0.0
        %vm2562 = vcmp.gt.f32.partialorder %v2298, 0.0
        %vm2563 = vcmp.gt.f32.partialorder %v2300, 0.0
        %vm2564 = vcmp.gt.f32.partialorder %v2302, 0.0
        %vm2565 = vcmp.gt.f32.partialorder %v2304, 0.0
        %vm2566 = vcmp.gt.f32.partialorder %v2308, 0.0
        %vm2567 = vcmp.gt.f32.partialorder %v2310, 0.0
        %vm2568 = vcmp.gt.f32.partialorder %v2312, 0.0
        %vm2569 = vcmp.gt.f32.partialorder %v2314, 0.0
        %vm2570 = vcmp.gt.f32.partialorder %v2318, 0.0
        %vm2571 = vcmp.gt.f32.partialorder %v2320, 0.0
        %vm2572 = vcmp.gt.f32.partialorder %v2322, 0.0
        %vm2573 = vcmp.gt.f32.partialorder %v2324, 0.0
        %vm2574 = vcmp.gt.f32.partialorder %v2328, 0.0
        %vm2575 = vcmp.gt.f32.partialorder %v2330, 0.0
        %vm2576 = vcmp.gt.f32.partialorder %v2332, 0.0
        %vm2577 = vcmp.gt.f32.partialorder %v2334, 0.0
        %vm2578 = vcmp.gt.f32.partialorder %v2338, 0.0
        %vm2579 = vcmp.gt.f32.partialorder %v2340, 0.0
        %vm2580 = vcmp.gt.f32.partialorder %v2342, 0.0
        %vm2581 = vcmp.gt.f32.partialorder %v2344, 0.0
        %vm2582 = vcmp.gt.f32.partialorder %v2348, 0.0
        %vm2583 = vcmp.gt.f32.partialorder %v2350, 0.0
        %vm2584 = vcmp.gt.f32.partialorder %v2352, 0.0
        %vm2585 = vcmp.gt.f32.partialorder %v2354, 0.0
        %vm2586 = vcmp.gt.f32.partialorder %v2358, 0.0
        %vm2587 = vcmp.gt.f32.partialorder %v2360, 0.0
        %vm2588 = vcmp.gt.f32.partialorder %v2362, 0.0
        %vm2589 = vcmp.gt.f32.partialorder %v2364, 0.0
        %vm2590 = vcmp.gt.f32.partialorder %v2368, 0.0
        %vm2591 = vcmp.gt.f32.partialorder %v2370, 0.0
        %vm2592 = vcmp.gt.f32.partialorder %v2372, 0.0
        %vm2593 = vcmp.gt.f32.partialorder %v2374, 0.0
        %vm2594 = vcmp.gt.f32.partialorder %v2378, 0.0
        %vm2595 = vcmp.gt.f32.partialorder %v2380, 0.0
        %vm2596 = vcmp.gt.f32.partialorder %v2382, 0.0
        %vm2597 = vcmp.gt.f32.partialorder %v2384, 0.0
        %vm2598 = vcmp.gt.f32.partialorder %v2388, 0.0
        %vm2599 = vcmp.gt.f32.partialorder %v2390, 0.0
        %vm2600 = vcmp.gt.f32.partialorder %v2392, 0.0
        %vm2601 = vcmp.gt.f32.partialorder %v2394, 0.0
        %vm2602 = vcmp.gt.f32.partialorder %v2398, 0.0
        %vm2603 = vcmp.gt.f32.partialorder %v2400, 0.0
        %vm2604 = vcmp.gt.f32.partialorder %v2402, 0.0
        %vm2605 = vcmp.gt.f32.partialorder %v2404, 0.0
        %vm2606 = vcmp.gt.f32.partialorder %v2408, 0.0
        %vm2607 = vcmp.gt.f32.partialorder %v2410, 0.0
        %vm2608 = vcmp.gt.f32.partialorder %v2412, 0.0
        %vm2609 = vcmp.gt.f32.partialorder %v2414, 0.0
        %vm2610 = vcmp.gt.f32.partialorder %v2418, 0.0
        %vm2611 = vcmp.gt.f32.partialorder %v2420, 0.0
        %vm2612 = vcmp.gt.f32.partialorder %v2422, 0.0
        %vm2613 = vcmp.gt.f32.partialorder %v2424, 0.0
        %vm2614 = vcmp.gt.f32.partialorder %v2428, 0.0
        %vm2615 = vcmp.gt.f32.partialorder %v2430, 0.0
        %vm2616 = vcmp.gt.f32.partialorder %v2432, 0.0
        %vm2617 = vcmp.gt.f32.partialorder %v2434, 0.0
        %vm2618 = vcmp.gt.f32.partialorder %v2438, 0.0
        %vm2619 = vcmp.gt.f32.partialorder %v2440, 0.0
        %vm2620 = vcmp.gt.f32.partialorder %v2442, 0.0
        %vm2621 = vcmp.gt.f32.partialorder %v2444, 0.0
        %vm2622 = vcmp.gt.f32.partialorder %v2448, 0.0
        %vm2623 = vcmp.gt.f32.partialorder %v2450, 0.0
        %vm2624 = vcmp.gt.f32.partialorder %v2452, 0.0
        %vm2625 = vcmp.gt.f32.partialorder %v2454, 0.0
        %vm2626 = vcmp.gt.f32.partialorder %v2458, 0.0
        %vm2627 = vcmp.gt.f32.partialorder %v2460, 0.0
        %vm2628 = vcmp.gt.f32.partialorder %v2462, 0.0
        %vm2629 = vcmp.gt.f32.partialorder %v2464, 0.0
        %vm2630 = vcmp.gt.f32.partialorder %v2468, 0.0
        %vm2631 = vcmp.gt.f32.partialorder %v2470, 0.0
        %vm2632 = vcmp.gt.f32.partialorder %v2472, 0.0
        %vm2633 = vcmp.gt.f32.partialorder %v2474, 0.0
        %vm2634 = vcmp.gt.f32.partialorder %v2478, 0.0
        %vm2635 = vcmp.gt.f32.partialorder %v2480, 0.0
        %vm2636 = vcmp.gt.f32.partialorder %v2482, 0.0
        %vm2637 = vcmp.gt.f32.partialorder %v2484, 0.0
        %vm2638 = vcmp.gt.f32.partialorder %v2488, 0.0
        %vm2639 = vcmp.gt.f32.partialorder %v2490, 0.0
        %vm2640 = vcmp.gt.f32.partialorder %v2492, 0.0
        %vm2641 = vcmp.gt.f32.partialorder %v2494, 0.0
        %vm2642 = vcmp.gt.f32.partialorder %v2498, 0.0
        %vm2643 = vcmp.gt.f32.partialorder %v2500, 0.0
        %vm2644 = vcmp.gt.f32.partialorder %v2502, 0.0
        %vm2645 = vcmp.gt.f32.partialorder %v2504, 0.0
        %vm2646 = vcmp.gt.f32.partialorder %v2508, 0.0
        %vm2647 = vcmp.gt.f32.partialorder %v2510, 0.0
        %vm2648 = vcmp.gt.f32.partialorder %v2512, 0.0
        %vm2649 = vcmp.gt.f32.partialorder %v2514, 0.0
        %vm2650 = vcmp.gt.f32.partialorder %v2518, 0.0
        %vm2651 = vcmp.gt.f32.partialorder %v2520, 0.0
        %vm2652 = vcmp.gt.f32.partialorder %v2522, 0.0
        %vm2653 = vcmp.gt.f32.partialorder %v2524, 0.0
        %v2654 = vmul.f32 %v2208, 0.01
        %v2655 = vmul.f32 %v2210, 0.01
        %v2656 = vmul.f32 %v2212, 0.01
        %v2657 = vmul.f32 %v2214, 0.01
        %v2658 = vmul.f32 %v2218, 0.01
        %v2659 = vmul.f32 %v2220, 0.01
        %v2660 = vmul.f32 %v2222, 0.01
        %v2661 = vmul.f32 %v2224, 0.01
        %v2662 = vmul.f32 %v2228, 0.01
        %v2663 = vmul.f32 %v2230, 0.01
        %v2664 = vmul.f32 %v2232, 0.01
        %v2665 = vmul.f32 %v2234, 0.01
        %v2666 = vmul.f32 %v2238, 0.01
        %v2667 = vmul.f32 %v2240, 0.01
        %v2668 = vmul.f32 %v2242, 0.01
        %v2669 = vmul.f32 %v2244, 0.01
        %v2670 = vmul.f32 %v2248, 0.01
        %v2671 = vmul.f32 %v2250, 0.01
        %v2672 = vmul.f32 %v2252, 0.01
        %v2673 = vmul.f32 %v2254, 0.01
        %v2674 = vmul.f32 %v2258, 0.01
        %v2675 = vmul.f32 %v2260, 0.01
        %v2676 = vmul.f32 %v2262, 0.01
        %v2677 = vmul.f32 %v2264, 0.01
        %v2678 = vmul.f32 %v2268, 0.01
        %v2679 = vmul.f32 %v2270, 0.01
        %v2680 = vmul.f32 %v2272, 0.01
        %v2681 = vmul.f32 %v2274, 0.01
        %v2682 = vmul.f32 %v2278, 0.01
        %v2683 = vmul.f32 %v2280, 0.01
        %v2684 = vmul.f32 %v2282, 0.01
        %v2685 = vmul.f32 %v2284, 0.01
        %v2686 = vmul.f32 %v2288, 0.01
        %v2687 = vmul.f32 %v2290, 0.01
        %v2688 = vmul.f32 %v2292, 0.01
        %v2689 = vmul.f32 %v2294, 0.01
        %v2690 = vmul.f32 %v2298, 0.01
        %v2691 = vmul.f32 %v2300, 0.01
        %v2692 = vmul.f32 %v2302, 0.01
        %v2693 = vmul.f32 %v2304, 0.01
        %v2694 = vmul.f32 %v2308, 0.01
        %v2695 = vmul.f32 %v2310, 0.01
        %v2696 = vmul.f32 %v2312, 0.01
        %v2697 = vmul.f32 %v2314, 0.01
        %v2698 = vmul.f32 %v2318, 0.01
        %v2699 = vmul.f32 %v2320, 0.01
        %v2700 = vmul.f32 %v2322, 0.01
        %v2701 = vmul.f32 %v2324, 0.01
        %v2702 = vmul.f32 %v2328, 0.01
        %v2703 = vmul.f32 %v2330, 0.01
        %v2704 = vmul.f32 %v2332, 0.01
        %v2705 = vmul.f32 %v2334, 0.01
        %v2706 = vmul.f32 %v2338, 0.01
        %v2707 = vmul.f32 %v2340, 0.01
        %v2708 = vmul.f32 %v2342, 0.01
        %v2709 = vmul.f32 %v2344, 0.01
        %v2710 = vmul.f32 %v2348, 0.01
        %v2711 = vmul.f32 %v2350, 0.01
        %v2712 = vmul.f32 %v2352, 0.01
        %v2713 = vmul.f32 %v2354, 0.01
        %v2714 = vmul.f32 %v2358, 0.01
        %v2715 = vmul.f32 %v2360, 0.01
        %v2716 = vmul.f32 %v2362, 0.01
        %v2717 = vmul.f32 %v2364, 0.01
        %v2718 = vmul.f32 %v2368, 0.01
        %v2719 = vmul.f32 %v2370, 0.01
        %v2720 = vmul.f32 %v2372, 0.01
        %v2721 = vmul.f32 %v2374, 0.01
        %v2722 = vmul.f32 %v2378, 0.01
        %v2723 = vmul.f32 %v2380, 0.01
        %v2724 = vmul.f32 %v2382, 0.01
        %v2725 = vmul.f32 %v2384, 0.01
        %v2726 = vmul.f32 %v2388, 0.01
        %v2727 = vmul.f32 %v2390, 0.01
        %v2728 = vmul.f32 %v2392, 0.01
        %v2729 = vmul.f32 %v2394, 0.01
        %v2730 = vmul.f32 %v2398, 0.01
        %v2731 = vmul.f32 %v2400, 0.01
        %v2732 = vmul.f32 %v2402, 0.01
        %v2733 = vmul.f32 %v2404, 0.01
        %v2734 = vmul.f32 %v2408, 0.01
        %v2735 = vmul.f32 %v2410, 0.01
        %v2736 = vmul.f32 %v2412, 0.01
        %v2737 = vmul.f32 %v2414, 0.01
        %v2738 = vmul.f32 %v2418, 0.01
        %v2739 = vmul.f32 %v2420, 0.01
        %v2740 = vmul.f32 %v2422, 0.01
        %v2741 = vmul.f32 %v2424, 0.01
        %v2742 = vmul.f32 %v2428, 0.01
        %v2743 = vmul.f32 %v2430, 0.01
        %v2744 = vmul.f32 %v2432, 0.01
        %v2745 = vmul.f32 %v2434, 0.01
        %v2746 = vmul.f32 %v2438, 0.01
        %v2747 = vmul.f32 %v2440, 0.01
        %v2748 = vmul.f32 %v2442, 0.01
        %v2749 = vmul.f32 %v2444, 0.01
        %v2750 = vmul.f32 %v2448, 0.01
        %v2751 = vmul.f32 %v2450, 0.01
        %v2752 = vmul.f32 %v2452, 0.01
        %v2753 = vmul.f32 %v2454, 0.01
        %v2754 = vmul.f32 %v2458, 0.01
        %v2755 = vmul.f32 %v2460, 0.01
        %v2756 = vmul.f32 %v2462, 0.01
        %v2757 = vmul.f32 %v2464, 0.01
        %v2758 = vmul.f32 %v2468, 0.01
        %v2759 = vmul.f32 %v2470, 0.01
        %v2760 = vmul.f32 %v2472, 0.01
        %v2761 = vmul.f32 %v2474, 0.01
        %v2762 = vmul.f32 %v2478, 0.01
        %v2763 = vmul.f32 %v2480, 0.01
        %v2764 = vmul.f32 %v2482, 0.01
        %v2765 = vmul.f32 %v2484, 0.01
        %v2766 = vmul.f32 %v2488, 0.01
        %v2767 = vmul.f32 %v2490, 0.01
        %v2768 = vmul.f32 %v2492, 0.01
        %v2769 = vmul.f32 %v2494, 0.01
        %v2770 = vmul.f32 %v2498, 0.01
        %v2771 = vmul.f32 %v2500, 0.01
        %v2772 = vmul.f32 %v2502, 0.01
        %v2773 = vmul.f32 %v2504, 0.01
        %v2774 = vmul.f32 %v2508, 0.01
        %v2775 = vmul.f32 %v2510, 0.01
        %v2776 = vmul.f32 %v2512, 0.01
        %v2777 = vmul.f32 %v2514, 0.01
        %v2778 = vmul.f32 %v2518, 0.01
        %v2779 = vmul.f32 %v2520, 0.01
        %v2780 = vmul.f32 %v2522, 0.01
        %v2781 = vmul.f32 %v2524, 0.01
        %v2782 = vsel %vm2526, %v2208, %v2654
        %v2783 = vsel %vm2527, %v2210, %v2655
        %v2784 = vsel %vm2528, %v2212, %v2656
        %v2785 = vsel %vm2529, %v2214, %v2657
        %v2786 = vsel %vm2530, %v2218, %v2658
        %v2787 = vsel %vm2531, %v2220, %v2659
        %v2788 = vsel %vm2532, %v2222, %v2660
        %v2789 = vsel %vm2533, %v2224, %v2661
        %v2790 = vsel %vm2534, %v2228, %v2662
        %v2791 = vsel %vm2535, %v2230, %v2663
        %v2792 = vsel %vm2536, %v2232, %v2664
        %v2793 = vsel %vm2537, %v2234, %v2665
        %v2794 = vsel %vm2538, %v2238, %v2666
        %v2795 = vsel %vm2539, %v2240, %v2667
        %v2796 = vsel %vm2540, %v2242, %v2668
        %v2797 = vsel %vm2541, %v2244, %v2669
        %v2798 = vsel %vm2542, %v2248, %v2670
        %v2799 = vsel %vm2543, %v2250, %v2671
        %v2800 = vsel %vm2544, %v2252, %v2672
        %v2801 = vsel %vm2545, %v2254, %v2673
        %v2802 = vsel %vm2546, %v2258, %v2674
        %v2803 = vsel %vm2547, %v2260, %v2675
        %v2804 = vsel %vm2548, %v2262, %v2676
        %v2805 = vsel %vm2549, %v2264, %v2677
        %v2806 = vsel %vm2550, %v2268, %v2678
        %v2807 = vsel %vm2551, %v2270, %v2679
        %v2808 = vsel %vm2552, %v2272, %v2680
        %v2809 = vsel %vm2553, %v2274, %v2681
        %v2810 = vsel %vm2554, %v2278, %v2682
        %v2811 = vsel %vm2555, %v2280, %v2683
        %v2812 = vsel %vm2556, %v2282, %v2684
        %v2813 = vsel %vm2557, %v2284, %v2685
        %v2814 = vsel %vm2558, %v2288, %v2686
        %v2815 = vsel %vm2559, %v2290, %v2687
        %v2816 = vsel %vm2560, %v2292, %v2688
        %v2817 = vsel %vm2561, %v2294, %v2689
        %v2818 = vsel %vm2562, %v2298, %v2690
        %v2819 = vsel %vm2563, %v2300, %v2691
        %v2820 = vsel %vm2564, %v2302, %v2692
        %v2821 = vsel %vm2565, %v2304, %v2693
        %v2822 = vsel %vm2566, %v2308, %v2694
        %v2823 = vsel %vm2567, %v2310, %v2695
        %v2824 = vsel %vm2568, %v2312, %v2696
        %v2825 = vsel %vm2569, %v2314, %v2697
        %v2826 = vsel %vm2570, %v2318, %v2698
        %v2827 = vsel %vm2571, %v2320, %v2699
        %v2828 = vsel %vm2572, %v2322, %v2700
        %v2829 = vsel %vm2573, %v2324, %v2701
        %v2830 = vsel %vm2574, %v2328, %v2702
        %v2831 = vsel %vm2575, %v2330, %v2703
        %v2832 = vsel %vm2576, %v2332, %v2704
        %v2833 = vsel %vm2577, %v2334, %v2705
        %v2834 = vsel %vm2578, %v2338, %v2706
        %v2835 = vsel %vm2579, %v2340, %v2707
        %v2836 = vsel %vm2580, %v2342, %v2708
        %v2837 = vsel %vm2581, %v2344, %v2709
        %v2838 = vsel %vm2582, %v2348, %v2710
        %v2839 = vsel %vm2583, %v2350, %v2711
        %v2840 = vsel %vm2584, %v2352, %v2712
        %v2841 = vsel %vm2585, %v2354, %v2713
        %v2842 = vsel %vm2586, %v2358, %v2714
        %v2843 = vsel %vm2587, %v2360, %v2715
        %v2844 = vsel %vm2588, %v2362, %v2716
        %v2845 = vsel %vm2589, %v2364, %v2717
        %v2846 = vsel %vm2590, %v2368, %v2718
        %v2847 = vsel %vm2591, %v2370, %v2719
        %v2848 = vsel %vm2592, %v2372, %v2720
        %v2849 = vsel %vm2593, %v2374, %v2721
        %v2850 = vsel %vm2594, %v2378, %v2722
        %v2851 = vsel %vm2595, %v2380, %v2723
        %v2852 = vsel %vm2596, %v2382, %v2724
        %v2853 = vsel %vm2597, %v2384, %v2725
        %v2854 = vsel %vm2598, %v2388, %v2726
        %v2855 = vsel %vm2599, %v2390, %v2727
        %v2856 = vsel %vm2600, %v2392, %v2728
        %v2857 = vsel %vm2601, %v2394, %v2729
        %v2858 = vsel %vm2602, %v2398, %v2730
        %v2859 = vsel %vm2603, %v2400, %v2731
        %v2860 = vsel %vm2604, %v2402, %v2732
        %v2861 = vsel %vm2605, %v2404, %v2733
        %v2862 = vsel %vm2606, %v2408, %v2734
        %v2863 = vsel %vm2607, %v2410, %v2735
        %v2864 = vsel %vm2608, %v2412, %v2736
        %v2865 = vsel %vm2609, %v2414, %v2737
        %v2866 = vsel %vm2610, %v2418, %v2738
        %v2867 = vsel %vm2611, %v2420, %v2739
        %v2868 = vsel %vm2612, %v2422, %v2740
        %v2869 = vsel %vm2613, %v2424, %v2741
        %v2870 = vsel %vm2614, %v2428, %v2742
        %v2871 = vsel %vm2615, %v2430, %v2743
        %v2872 = vsel %vm2616, %v2432, %v2744
        %v2873 = vsel %vm2617, %v2434, %v2745
        %v2874 = vsel %vm2618, %v2438, %v2746
        %v2875 = vsel %vm2619, %v2440, %v2747
        %v2876 = vsel %vm2620, %v2442, %v2748
        %v2877 = vsel %vm2621, %v2444, %v2749
        %v2878 = vsel %vm2622, %v2448, %v2750
        %v2879 = vsel %vm2623, %v2450, %v2751
        %v2880 = vsel %vm2624, %v2452, %v2752
        %v2881 = vsel %vm2625, %v2454, %v2753
        %v2882 = vsel %vm2626, %v2458, %v2754
        %v2883 = vsel %vm2627, %v2460, %v2755
        %v2884 = vsel %vm2628, %v2462, %v2756
        %v2885 = vsel %vm2629, %v2464, %v2757
        %v2886 = vsel %vm2630, %v2468, %v2758
        %v2887 = vsel %vm2631, %v2470, %v2759
        %v2888 = vsel %vm2632, %v2472, %v2760
        %v2889 = vsel %vm2633, %v2474, %v2761
        %v2890 = vsel %vm2634, %v2478, %v2762
        %v2891 = vsel %vm2635, %v2480, %v2763
        %v2892 = vsel %vm2636, %v2482, %v2764
        %v2893 = vsel %vm2637, %v2484, %v2765
        %v2894 = vsel %vm2638, %v2488, %v2766
        %v2895 = vsel %vm2639, %v2490, %v2767
        %v2896 = vsel %vm2640, %v2492, %v2768
        %v2897 = vsel %vm2641, %v2494, %v2769
        %v2898 = vsel %vm2642, %v2498, %v2770
        %v2899 = vsel %vm2643, %v2500, %v2771
        %v2900 = vsel %vm2644, %v2502, %v2772
        %v2901 = vsel %vm2645, %v2504, %v2773
        %v2902 = vsel %vm2646, %v2508, %v2774
        %v2903 = vsel %vm2647, %v2510, %v2775
        %v2904 = vsel %vm2648, %v2512, %v2776
        %v2905 = vsel %vm2649, %v2514, %v2777
        %v2906 = vsel %vm2650, %v2518, %v2778
        %v2907 = vsel %vm2651, %v2520, %v2779
        %v2908 = vsel %vm2652, %v2522, %v2780
        %v2909 = vsel %vm2653, %v2524, %v2781
        %v2910 = vpack.c.bf16 %v2784, %v2782
        %v2911 = vpack.c.bf16 %v2785, %v2783
        %v2912 = vpack.c.bf16 %v2788, %v2786
        %v2913 = vpack.c.bf16 %v2789, %v2787
        %v2914 = vpack.c.bf16 %v2792, %v2790
        %v2915 = vpack.c.bf16 %v2793, %v2791
        %v2916 = vpack.c.bf16 %v2796, %v2794
        %v2917 = vpack.c.bf16 %v2797, %v2795
        %v2918 = vpack.c.bf16 %v2800, %v2798
        %v2919 = vpack.c.bf16 %v2801, %v2799
        %v2920 = vpack.c.bf16 %v2804, %v2802
        %v2921 = vpack.c.bf16 %v2805, %v2803
        %v2922 = vpack.c.bf16 %v2808, %v2806
        %v2923 = vpack.c.bf16 %v2809, %v2807
        %v2924 = vpack.c.bf16 %v2812, %v2810
        %v2925 = vpack.c.bf16 %v2813, %v2811
        %v2926 = vpack.c.bf16 %v2816, %v2814
        %v2927 = vpack.c.bf16 %v2817, %v2815
        %v2928 = vpack.c.bf16 %v2820, %v2818
        %v2929 = vpack.c.bf16 %v2821, %v2819
        %v2930 = vpack.c.bf16 %v2824, %v2822
        %v2931 = vpack.c.bf16 %v2825, %v2823
        %v2932 = vpack.c.bf16 %v2828, %v2826
        %v2933 = vpack.c.bf16 %v2829, %v2827
        %v2934 = vpack.c.bf16 %v2832, %v2830
        %v2935 = vpack.c.bf16 %v2833, %v2831
        %v2936 = vpack.c.bf16 %v2836, %v2834
        %v2937 = vpack.c.bf16 %v2837, %v2835
        %v2938 = vpack.c.bf16 %v2840, %v2838
        %v2939 = vpack.c.bf16 %v2841, %v2839
        %v2940 = vpack.c.bf16 %v2844, %v2842
        %v2941 = vpack.c.bf16 %v2845, %v2843
        %v2942 = vpack.c.bf16 %v2848, %v2846
        %v2943 = vpack.c.bf16 %v2849, %v2847
        %v2944 = vpack.c.bf16 %v2852, %v2850
        %v2945 = vpack.c.bf16 %v2853, %v2851
        %v2946 = vpack.c.bf16 %v2856, %v2854
        %v2947 = vpack.c.bf16 %v2857, %v2855
        %v2948 = vpack.c.bf16 %v2860, %v2858
        %v2949 = vpack.c.bf16 %v2861, %v2859
        %v2950 = vpack.c.bf16 %v2864, %v2862
        %v2951 = vpack.c.bf16 %v2865, %v2863
        %v2952 = vpack.c.bf16 %v2868, %v2866
        %v2953 = vpack.c.bf16 %v2869, %v2867
        %v2954 = vpack.c.bf16 %v2872, %v2870
        %v2955 = vpack.c.bf16 %v2873, %v2871
        %v2956 = vpack.c.bf16 %v2876, %v2874
        %v2957 = vpack.c.bf16 %v2877, %v2875
        %v2958 = vpack.c.bf16 %v2880, %v2878
        %v2959 = vpack.c.bf16 %v2881, %v2879
        %v2960 = vpack.c.bf16 %v2884, %v2882
        %v2961 = vpack.c.bf16 %v2885, %v2883
        %v2962 = vpack.c.bf16 %v2888, %v2886
        %v2963 = vpack.c.bf16 %v2889, %v2887
        %v2964 = vpack.c.bf16 %v2892, %v2890
        %v2965 = vpack.c.bf16 %v2893, %v2891
        %v2966 = vpack.c.bf16 %v2896, %v2894
        %v2967 = vpack.c.bf16 %v2897, %v2895
        %v2968 = vpack.c.bf16 %v2900, %v2898
        %v2969 = vpack.c.bf16 %v2901, %v2899
        %v2970 = vpack.c.bf16 %v2904, %v2902
        %v2971 = vpack.c.bf16 %v2905, %v2903
        %v2972 = vpack.c.bf16 %v2908, %v2906
        %v2973 = vpack.c.bf16 %v2909, %v2907
        %v2974 = vld [vmem:[#allocation10] sm:$0xf]
        %v2975 = vld [vmem:[#allocation10 + $0x4] sm:$0xf]
        %v2976 = vld [vmem:[#allocation10 + $0x8] sm:$0xf]
        %v2977 = vld [vmem:[#allocation10 + $0xc] sm:$0xf]
        %v2978 = vld [vmem:[#allocation10 + $0x10] sm:$0xf]
        %v2979 = vld [vmem:[#allocation10 + $0x14] sm:$0xf]
        %v2980 = vld [vmem:[#allocation10 + $0x18] sm:$0xf]
        %v2981 = vld [vmem:[#allocation10 + $0x1c] sm:$0xf]
        %v2982 = vld [vmem:[#allocation10 + $0x20] sm:$0xf]
        %v2983 = vld [vmem:[#allocation10 + $0x24] sm:$0xf]
        %v2984 = vld [vmem:[#allocation10 + $0x28] sm:$0xf]
        %v2985 = vld [vmem:[#allocation10 + $0x2c] sm:$0xf]
        %v2986 = vld [vmem:[#allocation10 + $0x30] sm:$0xf]
        %v2987 = vld [vmem:[#allocation10 + $0x34] sm:$0xf]
        %v2988 = vld [vmem:[#allocation10 + $0x38] sm:$0xf]
        %v2989 = vld [vmem:[#allocation10 + $0x3c] sm:$0xf]
        %v2990 = vld [vmem:[#allocation10 + $0x40] sm:$0xf]
        %v2991 = vld [vmem:[#allocation10 + $0x44] sm:$0xf]
        %v2992 = vld [vmem:[#allocation10 + $0x48] sm:$0xf]
        %v2993 = vld [vmem:[#allocation10 + $0x4c] sm:$0xf]
        %v2994 = vld [vmem:[#allocation10 + $0x50] sm:$0xf]
        %v2995 = vld [vmem:[#allocation10 + $0x54] sm:$0xf]
        %v2996 = vld [vmem:[#allocation10 + $0x58] sm:$0xf]
        %v2997 = vld [vmem:[#allocation10 + $0x5c] sm:$0xf]
        %v2998 = vld [vmem:[#allocation10 + $0x60] sm:$0xf]
        %v2999 = vld [vmem:[#allocation10 + $0x64] sm:$0xf]
        %v3000 = vld [vmem:[#allocation10 + $0x68] sm:$0xf]
        %v3001 = vld [vmem:[#allocation10 + $0x6c] sm:$0xf]
        %v3002 = vld [vmem:[#allocation10 + $0x70] sm:$0xf]
        %v3003 = vld [vmem:[#allocation10 + $0x74] sm:$0xf]
        %v3004 = vld [vmem:[#allocation10 + $0x78] sm:$0xf]
        %v3005 = vld [vmem:[#allocation10 + $0x7c] sm:$0xf]
        %v3006 = vld [vmem:[%s8] sm:$0x1]
        %v3008 = vlaneseq
        %v3009 = vshrl.u32 %v3008, 7
        %v3010 = vsub.s32 0, %v3009
        %v3011 = vrot.slane %v3006, %v3010
        %v3045 = vunpack.c.l.b16 %v2974
        %v3046 = vunpack.c.l.b16 %v2975
        %v3047 = vunpack.c.l.b16 %v2976
        %v3048 = vunpack.c.l.b16 %v2977
        %v3049 = vunpack.c.l.b16 %v2978
        %v3050 = vunpack.c.l.b16 %v2979
        %v3051 = vunpack.c.l.b16 %v2980
        %v3052 = vunpack.c.l.b16 %v2981
        %v3053 = vunpack.c.l.b16 %v2982
        %v3054 = vunpack.c.l.b16 %v2983
        %v3055 = vunpack.c.l.b16 %v2984
        %v3056 = vunpack.c.l.b16 %v2985
        %v3057 = vunpack.c.l.b16 %v2986
        %v3058 = vunpack.c.l.b16 %v2987
        %v3059 = vunpack.c.l.b16 %v2988
        %v3060 = vunpack.c.l.b16 %v2989
        %v3061 = vunpack.c.l.b16 %v2990
        %v3062 = vunpack.c.l.b16 %v2991
        %v3063 = vunpack.c.l.b16 %v2992
        %v3064 = vunpack.c.l.b16 %v2993
        %v3065 = vunpack.c.l.b16 %v2994
        %v3066 = vunpack.c.l.b16 %v2995
        %v3067 = vunpack.c.l.b16 %v2996
        %v3068 = vunpack.c.l.b16 %v2997
        %v3069 = vunpack.c.l.b16 %v2998
        %v3070 = vunpack.c.l.b16 %v2999
        %v3071 = vunpack.c.l.b16 %v3000
        %v3072 = vunpack.c.l.b16 %v3001
        %v3073 = vunpack.c.l.b16 %v3002
        %v3074 = vunpack.c.l.b16 %v3003
        %v3075 = vunpack.c.l.b16 %v3004
        %v3076 = vunpack.c.l.b16 %v3005
        %v3077 = vpack.c.b16 %v3046, %v3045
        %v3078 = vpack.c.b16 %v3048, %v3047
        %v3079 = vpack.c.b16 %v3050, %v3049
        %v3080 = vpack.c.b16 %v3052, %v3051
        %v3081 = vpack.c.b16 %v3054, %v3053
        %v3082 = vpack.c.b16 %v3056, %v3055
        %v3083 = vpack.c.b16 %v3058, %v3057
        %v3084 = vpack.c.b16 %v3060, %v3059
        %v3085 = vpack.c.b16 %v3062, %v3061
        %v3086 = vpack.c.b16 %v3064, %v3063
        %v3087 = vpack.c.b16 %v3066, %v3065
        %v3088 = vpack.c.b16 %v3068, %v3067
        %v3089 = vpack.c.b16 %v3070, %v3069
        %v3090 = vpack.c.b16 %v3072, %v3071
        %v3091 = vpack.c.b16 %v3074, %v3073
        %v3092 = vpack.c.b16 %v3076, %v3075
        %3109 = vmatprep.subr.bf16.mxu0 0
        %3110 = vmatpush1.bf16.msra.mxu0 %v3084
        %3111 = vmatprep.subr.bf16.mxu0 0
        %3112 = vmatpush1.bf16.msra.mxu0 %v3083
        %3113 = vmatprep.subr.bf16.mxu0 0
        %3114 = vmatpush1.bf16.msra.mxu0 %v3082
        %3115 = vmatprep.subr.bf16.mxu0 0
        %3116 = vmatpush1.bf16.msra.mxu0 %v3081
        %3117 = vmatprep.subr.bf16.mxu0 0
        %3118 = vmatpush1.bf16.msra.mxu0 %v3080
        %3119 = vmatprep.subr.bf16.mxu0 0
        %3120 = vmatpush1.bf16.msra.mxu0 %v3079
        %3121 = vmatprep.subr.bf16.mxu0 0
        %3122 = vmatpush1.bf16.msra.mxu0 %v3078
        %3123 = vmatprep.subr.bf16.mxu0 0
        %3124 = vmatpush1.bf16.msra.mxu0 %v3077
        %3125 = vmatprep.subr.bf16.mxu0 0
        %3126 = vmatpush2.bf16.msra.mxu0 %v3092
        %3127 = vmatprep.subr.bf16.mxu0 0
        %3128 = vmatpush2.bf16.msra.mxu0 %v3091
        %3129 = vmatprep.subr.bf16.mxu0 0
        %3130 = vmatpush2.bf16.msra.mxu0 %v3090
        %3131 = vmatprep.subr.bf16.mxu0 0
        %3132 = vmatpush2.bf16.msra.mxu0 %v3089
        %3133 = vmatprep.subr.bf16.mxu0 0
        %3134 = vmatpush2.bf16.msra.mxu0 %v3088
        %3135 = vmatprep.subr.bf16.mxu0 0
        %3136 = vmatpush2.bf16.msra.mxu0 %v3087
        %3137 = vmatprep.subr.bf16.mxu0 0
        %3138 = vmatpush2.bf16.msra.mxu0 %v3086
        %3139 = vmatprep.subr.bf16.mxu0 0
        %3140 = vmatpush2.bf16.msra.mxu0 %v3085
        %3141 = vmatprep.mubr.bf16.mxu0 %v2911
        %3142 = vmatmul.mubr.bf16.gmra.mxu0 %v2910
        %v3143 = vpop.f32.mrf.mxu0
        %v3144 = vadd.f32 %v3011, %v3143
        %v3145 = vpop.f32.mrf.mxu0
        %v3146 = vpop.f32.mrf.mxu0
        %v3147 = vadd.f32 %v3011, %v3146
        %v3148 = vpop.f32.mrf.mxu0
        %3149 = vmatprep.mubr.bf16.mxu0 %v2913
        %3150 = vmatmul.mubr.bf16.gmra.mxu0 %v2912
        %v3151 = vpop.f32.mrf.mxu0
        %v3152 = vadd.f32 %v3011, %v3151
        %v3153 = vpop.f32.mrf.mxu0
        %v3154 = vpop.f32.mrf.mxu0
        %v3155 = vadd.f32 %v3011, %v3154
        %v3156 = vpop.f32.mrf.mxu0
        %3157 = vmatprep.mubr.bf16.mxu0 %v2915
        %3158 = vmatmul.mubr.bf16.gmra.mxu0 %v2914
        %v3159 = vpop.f32.mrf.mxu0
        %v3160 = vadd.f32 %v3011, %v3159
        %v3161 = vpop.f32.mrf.mxu0
        %v3162 = vpop.f32.mrf.mxu0
        %v3163 = vadd.f32 %v3011, %v3162
        %v3164 = vpop.f32.mrf.mxu0
        %3165 = vmatprep.mubr.bf16.mxu0 %v2917
        %3166 = vmatmul.mubr.bf16.gmra.mxu0 %v2916
        %v3167 = vpop.f32.mrf.mxu0
        %v3168 = vadd.f32 %v3011, %v3167
        %v3169 = vpop.f32.mrf.mxu0
        %v3170 = vpop.f32.mrf.mxu0
        %v3171 = vadd.f32 %v3011, %v3170
        %v3172 = vpop.f32.mrf.mxu0
        %3173 = vmatprep.mubr.bf16.mxu0 %v2919
        %3174 = vmatmul.mubr.bf16.gmra.mxu0 %v2918
        %v3175 = vpop.f32.mrf.mxu0
        %v3176 = vadd.f32 %v3011, %v3175
        %v3177 = vpop.f32.mrf.mxu0
        %v3178 = vpop.f32.mrf.mxu0
        %v3179 = vadd.f32 %v3011, %v3178
        %v3180 = vpop.f32.mrf.mxu0
        %3181 = vmatprep.mubr.bf16.mxu0 %v2921
        %3182 = vmatmul.mubr.bf16.gmra.mxu0 %v2920
        %v3183 = vpop.f32.mrf.mxu0
        %v3184 = vadd.f32 %v3011, %v3183
        %v3185 = vpop.f32.mrf.mxu0
        %v3186 = vpop.f32.mrf.mxu0
        %v3187 = vadd.f32 %v3011, %v3186
        %v3188 = vpop.f32.mrf.mxu0
        %3189 = vmatprep.mubr.bf16.mxu0 %v2923
        %3190 = vmatmul.mubr.bf16.gmra.mxu0 %v2922
        %v3191 = vpop.f32.mrf.mxu0
        %v3192 = vadd.f32 %v3011, %v3191
        %v3193 = vpop.f32.mrf.mxu0
        %v3194 = vpop.f32.mrf.mxu0
        %v3195 = vadd.f32 %v3011, %v3194
        %v3196 = vpop.f32.mrf.mxu0
        %3197 = vmatprep.mubr.bf16.mxu0 %v2925
        %3198 = vmatmul.mubr.bf16.gmra.mxu0 %v2924
        %v3199 = vpop.f32.mrf.mxu0
        %v3200 = vadd.f32 %v3011, %v3199
        %v3201 = vpop.f32.mrf.mxu0
        %v3202 = vpop.f32.mrf.mxu0
        %v3203 = vadd.f32 %v3011, %v3202
        %v3204 = vpop.f32.mrf.mxu0
        %3205 = vmatprep.mubr.bf16.mxu0 %v2927
        %3206 = vmatmul.mubr.bf16.gmra.mxu0 %v2926
        %v3207 = vpop.f32.mrf.mxu0
        %v3208 = vadd.f32 %v3011, %v3207
        %v3209 = vpop.f32.mrf.mxu0
        %v3210 = vpop.f32.mrf.mxu0
        %v3211 = vadd.f32 %v3011, %v3210
        %v3212 = vpop.f32.mrf.mxu0
        %3213 = vmatprep.mubr.bf16.mxu0 %v2929
        %3214 = vmatmul.mubr.bf16.gmra.mxu0 %v2928
        %v3215 = vpop.f32.mrf.mxu0
        %v3216 = vadd.f32 %v3011, %v3215
        %v3217 = vpop.f32.mrf.mxu0
        %v3218 = vpop.f32.mrf.mxu0
        %v3219 = vadd.f32 %v3011, %v3218
        %v3220 = vpop.f32.mrf.mxu0
        %3221 = vmatprep.mubr.bf16.mxu0 %v2931
        %3222 = vmatmul.mubr.bf16.gmra.mxu0 %v2930
        %v3223 = vpop.f32.mrf.mxu0
        %v3224 = vadd.f32 %v3011, %v3223
        %v3225 = vpop.f32.mrf.mxu0
        %v3226 = vpop.f32.mrf.mxu0
        %v3227 = vadd.f32 %v3011, %v3226
        %v3228 = vpop.f32.mrf.mxu0
        %3229 = vmatprep.mubr.bf16.mxu0 %v2933
        %3230 = vmatmul.mubr.bf16.gmra.mxu0 %v2932
        %v3231 = vpop.f32.mrf.mxu0
        %v3232 = vadd.f32 %v3011, %v3231
        %v3233 = vpop.f32.mrf.mxu0
        %v3234 = vpop.f32.mrf.mxu0
        %v3235 = vadd.f32 %v3011, %v3234
        %v3236 = vpop.f32.mrf.mxu0
        %3237 = vmatprep.mubr.bf16.mxu0 %v2935
        %3238 = vmatmul.mubr.bf16.gmra.mxu0 %v2934
        %v3239 = vpop.f32.mrf.mxu0
        %v3240 = vadd.f32 %v3011, %v3239
        %v3241 = vpop.f32.mrf.mxu0
        %v3242 = vpop.f32.mrf.mxu0
        %v3243 = vadd.f32 %v3011, %v3242
        %v3244 = vpop.f32.mrf.mxu0
        %3245 = vmatprep.mubr.bf16.mxu0 %v2937
        %3246 = vmatmul.mubr.bf16.gmra.mxu0 %v2936
        %v3247 = vpop.f32.mrf.mxu0
        %v3248 = vadd.f32 %v3011, %v3247
        %v3249 = vpop.f32.mrf.mxu0
        %v3250 = vpop.f32.mrf.mxu0
        %v3251 = vadd.f32 %v3011, %v3250
        %v3252 = vpop.f32.mrf.mxu0
        %3253 = vmatprep.mubr.bf16.mxu0 %v2939
        %3254 = vmatmul.mubr.bf16.gmra.mxu0 %v2938
        %v3255 = vpop.f32.mrf.mxu0
        %v3256 = vadd.f32 %v3011, %v3255
        %v3257 = vpop.f32.mrf.mxu0
        %v3258 = vpop.f32.mrf.mxu0
        %v3259 = vadd.f32 %v3011, %v3258
        %v3260 = vpop.f32.mrf.mxu0
        %3261 = vmatprep.mubr.bf16.mxu0 %v2941
        %3262 = vmatmul.mubr.bf16.gmra.mxu0 %v2940
        %v3263 = vpop.f32.mrf.mxu0
        %v3264 = vadd.f32 %v3011, %v3263
        %v3265 = vpop.f32.mrf.mxu0
        %v3266 = vpop.f32.mrf.mxu0
        %v3267 = vadd.f32 %v3011, %v3266
        %v3268 = vpop.f32.mrf.mxu0
        %3269 = vmatprep.mubr.bf16.mxu0 %v2943
        %3270 = vmatmul.mubr.bf16.gmra.mxu0 %v2942
        %v3271 = vpop.f32.mrf.mxu0
        %v3272 = vadd.f32 %v3011, %v3271
        %v3273 = vpop.f32.mrf.mxu0
        %v3274 = vpop.f32.mrf.mxu0
        %v3275 = vadd.f32 %v3011, %v3274
        %v3276 = vpop.f32.mrf.mxu0
        %3277 = vmatprep.mubr.bf16.mxu0 %v2945
        %3278 = vmatmul.mubr.bf16.gmra.mxu0 %v2944
        %v3279 = vpop.f32.mrf.mxu0
        %v3280 = vadd.f32 %v3011, %v3279
        %v3281 = vpop.f32.mrf.mxu0
        %v3282 = vpop.f32.mrf.mxu0
        %v3283 = vadd.f32 %v3011, %v3282
        %v3284 = vpop.f32.mrf.mxu0
        %3285 = vmatprep.mubr.bf16.mxu0 %v2947
        %3286 = vmatmul.mubr.bf16.gmra.mxu0 %v2946
        %v3287 = vpop.f32.mrf.mxu0
        %v3288 = vadd.f32 %v3011, %v3287
        %v3289 = vpop.f32.mrf.mxu0
        %v3290 = vpop.f32.mrf.mxu0
        %v3291 = vadd.f32 %v3011, %v3290
        %v3292 = vpop.f32.mrf.mxu0
        %3293 = vmatprep.mubr.bf16.mxu0 %v2949
        %3294 = vmatmul.mubr.bf16.gmra.mxu0 %v2948
        %v3295 = vpop.f32.mrf.mxu0
        %v3296 = vadd.f32 %v3011, %v3295
        %v3297 = vpop.f32.mrf.mxu0
        %v3298 = vpop.f32.mrf.mxu0
        %v3299 = vadd.f32 %v3011, %v3298
        %v3300 = vpop.f32.mrf.mxu0
        %3301 = vmatprep.mubr.bf16.mxu0 %v2951
        %3302 = vmatmul.mubr.bf16.gmra.mxu0 %v2950
        %v3303 = vpop.f32.mrf.mxu0
        %v3304 = vadd.f32 %v3011, %v3303
        %v3305 = vpop.f32.mrf.mxu0
        %v3306 = vpop.f32.mrf.mxu0
        %v3307 = vadd.f32 %v3011, %v3306
        %v3308 = vpop.f32.mrf.mxu0
        %3309 = vmatprep.mubr.bf16.mxu0 %v2953
        %3310 = vmatmul.mubr.bf16.gmra.mxu0 %v2952
        %v3311 = vpop.f32.mrf.mxu0
        %v3312 = vadd.f32 %v3011, %v3311
        %v3313 = vpop.f32.mrf.mxu0
        %v3314 = vpop.f32.mrf.mxu0
        %v3315 = vadd.f32 %v3011, %v3314
        %v3316 = vpop.f32.mrf.mxu0
        %3317 = vmatprep.mubr.bf16.mxu0 %v2955
        %3318 = vmatmul.mubr.bf16.gmra.mxu0 %v2954
        %v3319 = vpop.f32.mrf.mxu0
        %v3320 = vadd.f32 %v3011, %v3319
        %v3321 = vpop.f32.mrf.mxu0
        %v3322 = vpop.f32.mrf.mxu0
        %v3323 = vadd.f32 %v3011, %v3322
        %v3324 = vpop.f32.mrf.mxu0
        %3325 = vmatprep.mubr.bf16.mxu0 %v2957
        %3326 = vmatmul.mubr.bf16.gmra.mxu0 %v2956
        %v3327 = vpop.f32.mrf.mxu0
        %v3328 = vadd.f32 %v3011, %v3327
        %v3329 = vpop.f32.mrf.mxu0
        %v3330 = vpop.f32.mrf.mxu0
        %v3331 = vadd.f32 %v3011, %v3330
        %v3332 = vpop.f32.mrf.mxu0
        %3333 = vmatprep.mubr.bf16.mxu0 %v2959
        %3334 = vmatmul.mubr.bf16.gmra.mxu0 %v2958
        %v3335 = vpop.f32.mrf.mxu0
        %v3336 = vadd.f32 %v3011, %v3335
        %v3337 = vpop.f32.mrf.mxu0
        %v3338 = vpop.f32.mrf.mxu0
        %v3339 = vadd.f32 %v3011, %v3338
        %v3340 = vpop.f32.mrf.mxu0
        %3341 = vmatprep.mubr.bf16.mxu0 %v2961
        %3342 = vmatmul.mubr.bf16.gmra.mxu0 %v2960
        %v3343 = vpop.f32.mrf.mxu0
        %v3344 = vadd.f32 %v3011, %v3343
        %v3345 = vpop.f32.mrf.mxu0
        %v3346 = vpop.f32.mrf.mxu0
        %v3347 = vadd.f32 %v3011, %v3346
        %v3348 = vpop.f32.mrf.mxu0
        %3349 = vmatprep.mubr.bf16.mxu0 %v2963
        %3350 = vmatmul.mubr.bf16.gmra.mxu0 %v2962
        %v3351 = vpop.f32.mrf.mxu0
        %v3352 = vadd.f32 %v3011, %v3351
        %v3353 = vpop.f32.mrf.mxu0
        %v3354 = vpop.f32.mrf.mxu0
        %v3355 = vadd.f32 %v3011, %v3354
        %v3356 = vpop.f32.mrf.mxu0
        %3357 = vmatprep.mubr.bf16.mxu0 %v2965
        %3358 = vmatmul.mubr.bf16.gmra.mxu0 %v2964
        %v3359 = vpop.f32.mrf.mxu0
        %v3360 = vadd.f32 %v3011, %v3359
        %v3361 = vpop.f32.mrf.mxu0
        %v3362 = vpop.f32.mrf.mxu0
        %v3363 = vadd.f32 %v3011, %v3362
        %v3364 = vpop.f32.mrf.mxu0
        %3365 = vmatprep.mubr.bf16.mxu0 %v2967
        %3366 = vmatmul.mubr.bf16.gmra.mxu0 %v2966
        %v3367 = vpop.f32.mrf.mxu0
        %v3368 = vadd.f32 %v3011, %v3367
        %v3369 = vpop.f32.mrf.mxu0
        %v3370 = vpop.f32.mrf.mxu0
        %v3371 = vadd.f32 %v3011, %v3370
        %v3372 = vpop.f32.mrf.mxu0
        %3373 = vmatprep.mubr.bf16.mxu0 %v2969
        %3374 = vmatmul.mubr.bf16.gmra.mxu0 %v2968
        %v3375 = vpop.f32.mrf.mxu0
        %v3376 = vadd.f32 %v3011, %v3375
        %v3377 = vpop.f32.mrf.mxu0
        %v3378 = vpop.f32.mrf.mxu0
        %v3379 = vadd.f32 %v3011, %v3378
        %v3380 = vpop.f32.mrf.mxu0
        %3381 = vmatprep.mubr.bf16.mxu0 %v2971
        %3382 = vmatmul.mubr.bf16.gmra.mxu0 %v2970
        %v3383 = vpop.f32.mrf.mxu0
        %v3384 = vadd.f32 %v3011, %v3383
        %v3385 = vpop.f32.mrf.mxu0
        %v3386 = vpop.f32.mrf.mxu0
        %v3387 = vadd.f32 %v3011, %v3386
        %v3388 = vpop.f32.mrf.mxu0
        %3389 = vmatprep.mubr.bf16.mxu0 %v2973
        %3390 = vmatmul.mubr.bf16.gmra.mxu0 %v2972
        %v3391 = vpop.f32.mrf.mxu0
        %v3392 = vadd.f32 %v3011, %v3391
        %v3393 = vpop.f32.mrf.mxu0
        %v3394 = vpop.f32.mrf.mxu0
        %v3395 = vadd.f32 %v3011, %v3394
        %v3396 = vpop.f32.mrf.mxu0
        %3397 = vdwg.mxu0
        %3398 = vst [vmem:[%s408] sm:$0xff] %v3144
        %3399 = vst [vmem:[%s408 + $0x8] sm:$0xff] %v3147
        %3400 = vst [vmem:[%s408 + $0x10] sm:$0xff] %v3152
        %3401 = vst [vmem:[%s408 + $0x18] sm:$0xff] %v3155
        %3402 = vst [vmem:[%s408 + $0x20] sm:$0xff] %v3160
        %3403 = vst [vmem:[%s408 + $0x28] sm:$0xff] %v3163
        %3404 = vst [vmem:[%s408 + $0x30] sm:$0xff] %v3168
        %3405 = vst [vmem:[%s408 + $0x38] sm:$0xff] %v3171
        %3406 = vst [vmem:[%s408 + $0x40] sm:$0xff] %v3176
        %3407 = vst [vmem:[%s408 + $0x48] sm:$0xff] %v3179
        %3408 = vst [vmem:[%s408 + $0x50] sm:$0xff] %v3184
        %3409 = vst [vmem:[%s408 + $0x58] sm:$0xff] %v3187
        %3410 = vst [vmem:[%s408 + $0x60] sm:$0xff] %v3192
        %3411 = vst [vmem:[%s408 + $0x68] sm:$0xff] %v3195
        %3412 = vst [vmem:[%s408 + $0x70] sm:$0xff] %v3200
        %3413 = vst [vmem:[%s408 + $0x78] sm:$0xff] %v3203
        %3414 = vst [vmem:[%s408 + $0x80] sm:$0xff] %v3208
        %3415 = vst [vmem:[%s408 + $0x88] sm:$0xff] %v3211
        %3416 = vst [vmem:[%s408 + $0x90] sm:$0xff] %v3216
        %3417 = vst [vmem:[%s408 + $0x98] sm:$0xff] %v3219
        %3418 = vst [vmem:[%s408 + $0xa0] sm:$0xff] %v3224
        %3419 = vst [vmem:[%s408 + $0xa8] sm:$0xff] %v3227
        %3420 = vst [vmem:[%s408 + $0xb0] sm:$0xff] %v3232
        %3421 = vst [vmem:[%s408 + $0xb8] sm:$0xff] %v3235
        %3422 = vst [vmem:[%s408 + $0xc0] sm:$0xff] %v3240
        %3423 = vst [vmem:[%s408 + $0xc8] sm:$0xff] %v3243
        %3424 = vst [vmem:[%s408 + $0xd0] sm:$0xff] %v3248
        %3425 = vst [vmem:[%s408 + $0xd8] sm:$0xff] %v3251
        %3426 = vst [vmem:[%s408 + $0xe0] sm:$0xff] %v3256
        %3427 = vst [vmem:[%s408 + $0xe8] sm:$0xff] %v3259
        %3428 = vst [vmem:[%s408 + $0xf0] sm:$0xff] %v3264
        %3429 = vst [vmem:[%s408 + $0xf8] sm:$0xff] %v3267
        %3430 = vst [vmem:[%s408 + $0x100] sm:$0xff] %v3272
        %3431 = vst [vmem:[%s408 + $0x108] sm:$0xff] %v3275
        %3432 = vst [vmem:[%s408 + $0x110] sm:$0xff] %v3280
        %3433 = vst [vmem:[%s408 + $0x118] sm:$0xff] %v3283
        %3434 = vst [vmem:[%s408 + $0x120] sm:$0xff] %v3288
        %3435 = vst [vmem:[%s408 + $0x128] sm:$0xff] %v3291
        %3436 = vst [vmem:[%s408 + $0x130] sm:$0xff] %v3296
        %3437 = vst [vmem:[%s408 + $0x138] sm:$0xff] %v3299
        %3438 = vst [vmem:[%s408 + $0x140] sm:$0xff] %v3304
        %3439 = vst [vmem:[%s408 + $0x148] sm:$0xff] %v3307
        %3440 = vst [vmem:[%s408 + $0x150] sm:$0xff] %v3312
        %3441 = vst [vmem:[%s408 + $0x158] sm:$0xff] %v3315
        %3442 = vst [vmem:[%s408 + $0x160] sm:$0xff] %v3320
        %3443 = vst [vmem:[%s408 + $0x168] sm:$0xff] %v3323
        %3444 = vst [vmem:[%s408 + $0x170] sm:$0xff] %v3328
        %3445 = vst [vmem:[%s408 + $0x178] sm:$0xff] %v3331
        %3446 = vst [vmem:[%s408 + $0x180] sm:$0xff] %v3336
        %3447 = vst [vmem:[%s408 + $0x188] sm:$0xff] %v3339
        %3448 = vst [vmem:[%s408 + $0x190] sm:$0xff] %v3344
        %3449 = vst [vmem:[%s408 + $0x198] sm:$0xff] %v3347
        %3450 = vst [vmem:[%s408 + $0x1a0] sm:$0xff] %v3352
        %3451 = vst [vmem:[%s408 + $0x1a8] sm:$0xff] %v3355
        %3452 = vst [vmem:[%s408 + $0x1b0] sm:$0xff] %v3360
        %3453 = vst [vmem:[%s408 + $0x1b8] sm:$0xff] %v3363
        %3454 = vst [vmem:[%s408 + $0x1c0] sm:$0xff] %v3368
        %3455 = vst [vmem:[%s408 + $0x1c8] sm:$0xff] %v3371
        %3456 = vst [vmem:[%s408 + $0x1d0] sm:$0xff] %v3376
        %3457 = vst [vmem:[%s408 + $0x1d8] sm:$0xff] %v3379
        %3458 = vst [vmem:[%s408 + $0x1e0] sm:$0xff] %v3384
        %3459 = vst [vmem:[%s408 + $0x1e8] sm:$0xff] %v3387
        %3460 = vst [vmem:[%s408 + $0x1f0] sm:$0xff] %v3392
        %3461 = vst [vmem:[%s408 + $0x1f8] sm:$0xff] %v3395
        %s3462 = sand.u32 %s230, 1
        %s3463 = scalar_lea.sflag [#allocation4], %s3462
        %s3464 = sand.u32 %s230, 1
        %s3465 = smul.addr %s3464, 512
        %s3466 = scalar_lea.vmem [#allocation11], %s3465
        // Predicated region
        $region77: #{tpu_custom_call.1} parent=55 // pred_check
          %p3467 = pneg %p240
        $region78: #{tpu_custom_call.1} parent=55 // pred_check_branch
          %3469 = sbr.rel (%p3467) target = $region80
        $region79: #{tpu_custom_call.1} parent=55 // pred_region
          %s3470 = smul.u32 64, %s28
          %s3472 = ssub.s32 8192, 8192
          %3473 = vsyncadd %s3463, %s3472
          %s3474 = smul.addr %s3470, 128
          %s3475 = scalar_lea.hbm %s9, %s3474
          %s3476 = sshll.u32 %s3466, 4
          %s3477 = int_to_ptr.vmem [resolvable:$true] %s3476
          %3482 = dma.vmem_to_hbm [thread:$0]  %s3477, 8192, %s3475, %s3463, 128, 128, 8
        $region80: #{tpu_custom_call.1} parent=55 // pred_fallthru
          _
      $region56: #{tpu_custom_call.1} parent=5 // pred_fallthru
        _
      %p3483 = scmp.le.s32.totalorder 2, %s23
      // Predicated region
      $region81: #{tpu_custom_call.1} parent=5 // pred_check
        %p3484 = pneg %p3483
      $region82: #{tpu_custom_call.1} parent=5 // pred_check_branch
        %3486 = sbr.rel (%p3484) target = $region84
      $region83: #{tpu_custom_call.1} parent=5 // pred_region
        %s3487 = ssub.s32 %s23, 2
        // Predicated region
        $region85: #{tpu_custom_call.1} parent=83 // pred_check
          %p3488 = pneg %p246
        $region86: #{tpu_custom_call.1} parent=83 // pred_check_branch
          %3490 = sbr.rel (%p3488) target = $region88
        $region87: #{tpu_custom_call.1} parent=83 // pred_region
          %s3491 = sand.u32 %s231, 1
          %s3492 = scalar_lea.sflag [#allocation4], %s3491
          %s3493 = sand.u32 %s231, 1
          %s3494 = smul.addr %s3493, 512
          %s3495 = scalar_lea.vmem [#allocation11], %s3494
          %3496 = dma.done %s3492, 8192
        $region88: #{tpu_custom_call.1} parent=83 // pred_fallthru
          _
      $region84: #{tpu_custom_call.1} parent=5 // pred_fallthru
        _
    $region6: #{tpu_custom_call.1} parent=1 // loop_footer
      %s27 = sadd.s32 1, %s23
    $region7: #{tpu_custom_call.1} parent=1 // loop_footer_branch
      %22 = sbr.rel target = $region3
    $region8: #{tpu_custom_call.1} parent=1 // loop_exit
      _
    %3497 = vsyncpa [#allocation3], 1
    %s3498 = scalar_lea.sflag [#allocation3], 1
    %3499 = vsyncpa %s3498, 1
    %3500 = vsyncpa [#allocation6], 1
    %3501 = vsyncpa [#allocation9], 1
    %3502 = vsyncpa [#allocation4], 1
    %s3503 = scalar_lea.sflag [#allocation4], 1
    %3504 = vsyncpa %s3503, 1

</llo_original>
